<compile_context>
chip_gen: v6e
topology: v6e:2x2x1
jax: 0.10.0
libtpu: 0.0.40
codegen_flags: <defaults>
</compile_context>

<pallas_src>
import functools

import jax
import jax.numpy as jnp
import numpy as np
from jax import lax
from jax.experimental import pallas as pl
from jax.experimental.pallas import tpu as pltpu


# Tap enumeration shared by both kernels: (dy, dx) row-major, ti = (dy+1)*3+(dx+1).
_TAPS = tuple((dy, dx) for dy in (-1, 0, 1) for dx in (-1, 0, 1))


# ----------------------------- Pallas kernels ------------------------------ #

def _fused_qkv_dw_attn_kernel(x_ref, wqkv_ref, wdw_ref, cmask_ref, wproj_ref,
                              temp_ref, qkvdw_ref, attn_ref, acc_ref,
                              *, h, w, c, nh):
    """Per-batch: qkv 1x1 conv -> depthwise 3x3 -> channel attention -> project_out.

    Channel-major layout (channels on sublanes, flattened spatial on lanes):
    every matmul / store is lane-dense over hw and no transposes are needed.
    """
    hw = h * w
    dd = c // nh

    # qkv = Conv(1x1): (3c, c) @ (c, hw), bf16 MXU operands, f32 accumulation.
    qkv = jnp.dot(wqkv_ref[...], x_ref[0],
                  preferred_element_type=jnp.float32)              # (3c, hw)

    # Depthwise 3x3 (live kd=1 slice), zero padding 1, via 9 statically shifted
    # slices along the flattened spatial axis.  Slice clamping handles dy being
    # out of range; the column mask handles dx crossing a row boundary.
    acc_ref[...] = jnp.zeros_like(acc_ref)
    for ti, (dy, dx) in enumerate(_TAPS):
        s = dy * w + dx
        lo = max(0, -s)
        hi = min(hw, hw - s)
        contrib = wdw_ref[:, ti:ti + 1] * qkv[:, lo + s:hi + s]    # (3c, L)
        acc_ref[:, lo:hi] += cmask_ref[dx + 1, :, lo:hi] * contrib
    qkv_dw = acc_ref[...]                                          # (3c, hw) f32

    # bf16 copy for the conv branch (kernel 2 reads it through a free reshape
    # that reproduces the module's channel/spatial-mixing reinterpretation).
    qkvdw_ref[0] = qkv_dw.astype(qkvdw_ref.dtype)

    # Transposed (channel) attention — all heads in this grid step, project_out
    # folded into the head loop so the attention output never materialises.
    proj = jnp.zeros((c, hw), jnp.float32)
    for hd in range(nh):
        qh = qkv_dw[hd * dd:(hd + 1) * dd, :]
        kh = qkv_dw[c + hd * dd:c + (hd + 1) * dd, :]
        vh = qkv_dw[2 * c + hd * dd:2 * c + (hd + 1) * dd, :]
        # F.normalize(dim=-1); eps form differs from the reference only for
        # near-zero vectors (both give ~0).
        qn = qh * lax.rsqrt(jnp.sum(qh * qh, axis=-1, keepdims=True) + 1e-24)
        kn = kh * lax.rsqrt(jnp.sum(kh * kh, axis=-1, keepdims=True) + 1e-24)
        attn = lax.dot_general(qn.astype(jnp.bfloat16), kn.astype(jnp.bfloat16),
                               (((1,), (1,)), ((), ())),
                               preferred_element_type=jnp.float32)  # (dd, dd)
        attn = attn * temp_ref[hd:hd + 1, :]
        attn = attn - jnp.max(attn, axis=-1, keepdims=True)
        e = jnp.exp(attn)
        p = e / jnp.sum(e, axis=-1, keepdims=True)                  # exact recip
        oh = jnp.dot(p.astype(jnp.bfloat16), vh.astype(jnp.bfloat16),
                     preferred_element_type=jnp.float32)            # (dd, hw)
        proj = proj + jnp.dot(wproj_ref[:, hd * dd:(hd + 1) * dd],
                              oh.astype(jnp.bfloat16),
                              preferred_element_type=jnp.float32)   # (c, hw)
    attn_ref[0] = proj.astype(attn_ref.dtype)


def _conv_branch_kernel(a_ref, wcol_ref, cmask_ref, bias_ref, res_ref, o_ref,
                        *, h, w):
    """Per-batch conv branch: fc (1x1, 3nh->9) folded into dep_conv (grouped
    3x3) as 9 MXU matmuls over the flat-reinterpreted qkv, fused with the
    precomputed fc/dep_conv bias border map and the attention residual."""
    hw = h * w
    a = a_ref[0]                                                   # (hw, 3c) bf16
    o_ref[0] = bias_ref[...] + res_ref[0].astype(jnp.float32)      # (c, hw)
    for ti, (dy, dx) in enumerate(_TAPS):
        s = dy * w + dx
        lo = max(0, -s)
        hi = min(hw, hw - s)
        # (c, 3c) x (L, 3c) contracting 3c  ->  (c, L), lane-dense over spatial.
        m = lax.dot_general(wcol_ref[ti], a[lo + s:hi + s, :],
                            (((1,), (1,)), ((), ())),
                            preferred_element_type=jnp.float32)
        o_ref[0, :, lo:hi] += cmask_ref[dx + 1, :, lo:hi] * m


# --------------------------- parameters & forward --------------------------- #

def init_params(key, dim, num_heads):
    ks = jax.random.split(key, 7)
    s = 0.1
    w_qkv = jax.random.normal(ks[0], (3 * dim, dim), jnp.float32) * s
    w_dw3d = jax.random.normal(ks[1], (3 * dim, 1, 3, 3, 3), jnp.float32) * s
    w_proj = jax.random.normal(ks[2], (dim, dim), jnp.float32) * s
    w_fc = jax.random.normal(ks[3], (9, 3 * num_heads), jnp.float32) * s
    b_fc = jax.random.normal(ks[4], (9,), jnp.float32) * s
    w_dep3d = jax.random.normal(ks[5], (dim, 9, 3, 3, 3), jnp.float32) * s
    b_dep = jax.random.normal(ks[6], (dim,), jnp.float32) * s
    return dict(
        temperature=jnp.ones((num_heads, 1, 1), jnp.float32),
        w_qkv=w_qkv,
        # depth dim is 1 with pad 1 -> only kd=1 of each 3x3x3 kernel matters
        w_dw=w_dw3d[:, 0, 1],       # (3*dim, 3, 3)
        w_proj=w_proj,
        w_fc=w_fc, b_fc=b_fc,
        w_dep=w_dep3d[:, :, 1],     # (dim, 9, 3, 3)
        b_dep=b_dep,
        # module instantiated with bias=False for qkv / qkv_dwconv / project_out
    )


@functools.partial(jax.jit, static_argnames=("num_heads",))
def dual_branch_forward(x, params, *, num_heads):
    b, c, h, w = x.shape
    hw = h * w
    nh = num_heads
    dd = c // nh
    c3 = 3 * c
    assert c % nh == 0
    f32, bf16 = jnp.float32, jnp.bfloat16

    # ---- free reshapes + one-time casts (no HBM transposes anywhere) -------
    x_cm = x.reshape(b, c, hw).astype(bf16)                        # (b, c, hw)
    w_qkv = params['w_qkv'].astype(bf16)                           # (3c, c)
    w_dw = params['w_dw'].reshape(c3, 9).astype(f32)               # (3c, 9)
    w_proj = params['w_proj'].astype(bf16)                         # (c, c)
    temp = params['temperature'].reshape(nh, 1).astype(f32)        # (nh, 1)

    # column-validity masks for dx in {-1, 0, +1} (dy handled by slice clamping)
    xcol = jnp.arange(hw, dtype=jnp.int32) % w
    yrow = jnp.arange(hw, dtype=jnp.int32) // w
    cmask = jnp.stack([(xcol >= 1),
                       jnp.ones((hw,), jnp.bool_),
                       (xcol <= w - 2)]).astype(f32).reshape(3, 1, hw)

    # fused fc -> dep_conv weights, zero-expanded over the dd groups:
    # Wfused[tap, ic=m*dd+g, oc] = (g == oc//nh) * sum_t w_dep[oc,t,tap]*w_fc[t,m]
    w_dep = params['w_dep']                                        # (c, 9, 3, 3)
    wf = jnp.einsum('otyx,tm->yxmo', w_dep, params['w_fc']).reshape(9, 3 * nh, c)
    egrp = (jnp.arange(c)[None, :] // nh
            == jnp.arange(dd)[:, None]).astype(f32)                # (dd, c)
    w_col = (wf[:, :, None, :] * egrp[None, None]).reshape(9, c3, c)
    w_col_t = jnp.transpose(w_col, (0, 2, 1)).astype(bf16)         # (9, c, 3c)

    # exact fc-bias (under dep_conv's zero padding) + dep_conv bias, (c, hw)
    kb = jnp.einsum('otyx,t->oyx', w_dep, params['b_fc']).reshape(c, 9)
    vmask = jnp.stack([((yrow + dy >= 0) & (yrow + dy < h)
                        & (xcol + dx >= 0) & (xcol + dx < w)).astype(f32)
                       for dy, dx in _TAPS])                       # (9, hw)
    bias_cn = params['b_dep'][:, None] + kb @ vmask                # (c, hw)

    cparams = pltpu.CompilerParams(dimension_semantics=("parallel",),
                                   vmem_limit_bytes=32 * 1024 * 1024)

    # ---- kernel 1: qkv + dwconv + attention + project_out (per batch) ------
    k1 = functools.partial(_fused_qkv_dw_attn_kernel, h=h, w=w, c=c, nh=nh)
    qkv_dw, attn_res = pl.pallas_call(
        k1,
        out_shape=(jax.ShapeDtypeStruct((b, c3, hw), bf16),
                   jax.ShapeDtypeStruct((b, c, hw), bf16)),
        grid=(b,),
        in_specs=[pl.BlockSpec((1, c, hw), lambda i: (i, 0, 0)),
                  pl.BlockSpec((c3, c), lambda i: (0, 0)),
                  pl.BlockSpec((c3, 9), lambda i: (0, 0)),
                  pl.BlockSpec((3, 1, hw), lambda i: (0, 0, 0)),
                  pl.BlockSpec((c, c), lambda i: (0, 0)),
                  pl.BlockSpec((nh, 1), lambda i: (0, 0))],
        out_specs=(pl.BlockSpec((1, c3, hw), lambda i: (i, 0, 0)),
                   pl.BlockSpec((1, c, hw), lambda i: (i, 0, 0))),
        scratch_shapes=[pltpu.VMEM((c3, hw), f32)],
        compiler_params=cparams,
    )(x_cm, w_qkv, w_dw, cmask, w_proj, temp)

    # Free reshape: (b, 3c, hw) -> (b, hw, 3c) reproduces the module's
    # channel/spatial-mixing `qkv.reshape(b, h*w, 3*nh, dd)` reinterpretation.
    a_flat = qkv_dw.reshape(b, hw, c3)

    # ---- kernel 2: fused fc + dep_conv + bias map + residual (per batch) ---
    k2 = functools.partial(_conv_branch_kernel, h=h, w=w)
    out = pl.pallas_call(
        k2,
        out_shape=jax.ShapeDtypeStruct((b, c, hw), f32),
        grid=(b,),
        in_specs=[pl.BlockSpec((1, hw, c3), lambda i: (i, 0, 0)),
                  pl.BlockSpec((9, c, c3), lambda i: (0, 0, 0)),
                  pl.BlockSpec((3, 1, hw), lambda i: (0, 0, 0)),
                  pl.BlockSpec((c, hw), lambda i: (0, 0)),
                  pl.BlockSpec((1, c, hw), lambda i: (i, 0, 0))],
        out_specs=pl.BlockSpec((1, c, hw), lambda i: (i, 0, 0)),
        compiler_params=cparams,
    )(a_flat, w_col_t, cmask, bias_cn, attn_res)

    return out.reshape(b, c, h, w)


# --------------------- pure-JAX reference (self-check) ---------------------- #

def _conv2d(x, w, bias, padding, groups=1):
    out = jax.lax.conv_general_dilated(
        x, w, window_strides=(1, 1), padding=padding,
        dimension_numbers=('NCHW', 'OIHW', 'NCHW'),
        feature_group_count=groups, precision=jax.lax.Precision.HIGHEST)
    if bias is not None:
        out = out + bias[None, :, None, None]
    return out


def reference_forward(x, params, *, num_heads):
    b, c, h, w = x.shape
    nh = num_heads
    dd = c // nh
    qkv = _conv2d(x, params['w_qkv'][:, :, None, None], None, ((0, 0), (0, 0)))
    qkv = _conv2d(qkv, params['w_dw'][:, None], None, ((1, 1), (1, 1)), groups=3 * c)
    f_all = jnp.transpose(qkv.reshape(b, h * w, 3 * nh, dd), (0, 2, 1, 3))
    f_all = _conv2d(f_all, params['w_fc'][:, :, None, None], params['b_fc'],
                    ((0, 0), (0, 0)))
    f_conv = jnp.transpose(f_all, (0, 3, 1, 2)).reshape(b, 9 * dd, h, w)
    out_conv = _conv2d(f_conv, params['w_dep'], params['b_dep'],
                       ((1, 1), (1, 1)), groups=dd)
    q = qkv[:, :c].reshape(b, nh, dd, h * w)
    k = qkv[:, c:2 * c].reshape(b, nh, dd, h * w)
    v = qkv[:, 2 * c:].reshape(b, nh, dd, h * w)
    q = q / jnp.maximum(jnp.linalg.norm(q, axis=-1, keepdims=True), 1e-12)
    k = k / jnp.maximum(jnp.linalg.norm(k, axis=-1, keepdims=True), 1e-12)
    attn = jnp.einsum('bhdn,bhen->bhde', q, k,
                      precision=jax.lax.Precision.HIGHEST) * params['temperature'][None]
    attn = jax.nn.softmax(attn, axis=-1)
    out = jnp.einsum('bhde,bhen->bhdn', attn, v,
                     precision=jax.lax.Precision.HIGHEST).reshape(b, c, h, w)
    out = _conv2d(out, params['w_proj'][:, :, None, None], None, ((0, 0), (0, 0)))
    return out + out_conv


# ----------------------------------- main ----------------------------------- #

if __name__ == "__main__":
    dim, num_heads = 8, 2            # bias=False for qkv / qkv_dwconv / project_out
    b, h, w = 2, 16, 16

    key = jax.random.PRNGKey(0)
    kx, kp = jax.random.split(key)
    x = jax.random.normal(kx, (b, dim, h, w), dtype=jnp.float32)
    params = init_params(kp, dim, num_heads)

    out = dual_branch_forward(x, params, num_heads=num_heads)
    out = jax.block_until_ready(out)
    assert out.shape == (b, dim, h, w)

    ref = reference_forward(x, params, num_heads=num_heads)
    # bf16 MXU operands / bf16 intermediates -> compare with bf16-level tolerance
    np.testing.assert_allclose(np.asarray(out), np.asarray(ref),
                               rtol=2e-2, atol=2e-2)
    print("KERNEL_OK")
</pallas_src>

<mosaic_0001>
module attributes {stable_mosaic.version = 11 : i64} {
  func.func @_fused_qkv_dw_attn_kernel(%arg0: i32, %arg1: memref<1x8x256xbf16, #tpu.memory_space<vmem>>, %arg2: memref<24x8xbf16, #tpu.memory_space<vmem>>, %arg3: memref<24x9xf32, #tpu.memory_space<vmem>>, %arg4: memref<3x1x256xf32, #tpu.memory_space<vmem>>, %arg5: memref<8x8xbf16, #tpu.memory_space<vmem>>, %arg6: memref<2x1xf32, #tpu.memory_space<vmem>>, %arg7: memref<1x24x256xbf16, #tpu.memory_space<vmem>>, %arg8: memref<1x8x256xbf16, #tpu.memory_space<vmem>>, %arg9: memref<24x256xf32, #tpu.memory_space<vmem>>) attributes {dimension_semantics = [#tpu.dimension_semantics<parallel>], iteration_bounds = array<i64: 2>, scalar_prefetch = 0 : i64, scratch_operands = 1 : i64, tpu.core_type = #tpu.core_type<tc>, window_params = [{transform_indices = @transform_0, window_bounds = array<i64: 1, 8, 256>}, {pipeline_mode = #tpu.pipeline_mode<synchronous>, transform_indices = @transform_1, window_bounds = array<i64: 24, 8>}, {pipeline_mode = #tpu.pipeline_mode<synchronous>, transform_indices = @transform_2, window_bounds = array<i64: 24, 9>}, {pipeline_mode = #tpu.pipeline_mode<synchronous>, transform_indices = @transform_3, window_bounds = array<i64: 3, 1, 256>}, {pipeline_mode = #tpu.pipeline_mode<synchronous>, transform_indices = @transform_4, window_bounds = array<i64: 8, 8>}, {pipeline_mode = #tpu.pipeline_mode<synchronous>, transform_indices = @transform_5, window_bounds = array<i64: 2, 1>}, {transform_indices = @transform_6, window_bounds = array<i64: 1, 24, 256>}, {transform_indices = @transform_7, window_bounds = array<i64: 1, 8, 256>}]} {
    %c0 = arith.constant 0 : index
    %c0_0 = arith.constant 0 : index
    %0 = vector.load %arg2[%c0, %c0_0] : memref<24x8xbf16, #tpu.memory_space<vmem>>, vector<24x8xbf16>
    %c0_1 = arith.constant 0 : index
    %c0_2 = arith.constant 0 : index
    %c0_3 = arith.constant 0 : index
    %1 = vector.load %arg1[%c0_1, %c0_2, %c0_3] : memref<1x8x256xbf16, #tpu.memory_space<vmem>>, vector<1x8x256xbf16>
    %2 = vector.shape_cast %1 : vector<1x8x256xbf16> to vector<8x256xbf16>
    %cst = arith.constant dense<0.000000e+00> : vector<24x256xf32>
    %3 = tpu.matmul %0, %2, %cst {dimension_numbers = #tpu.dot_dimension_numbers<[1], [0], [0], [1], [0, 0, 1, 1], [], []>} : vector<24x8xbf16>, vector<8x256xbf16>, vector<24x256xf32> -> vector<24x256xf32>
    %cst_4 = arith.constant 0.000000e+00 : f32
    %4 = vector.broadcast %cst_4 : f32 to vector<24x256xf32>
    %c0_5 = arith.constant 0 : index
    %c0_6 = arith.constant 0 : index
    %5 = vector.load %arg9[%c0_5, %c0_6] : memref<24x256xf32, #tpu.memory_space<vmem>>, vector<24x256xf32>
    tpu.vector_store %arg9[%c0_5, %c0_6], %4 {strides = array<i32>} : memref<24x256xf32, #tpu.memory_space<vmem>>, vector<24x256xf32>,
    %c0_7 = arith.constant 0 : index
    %c0_8 = arith.constant 0 : index
    %6 = vector.load %arg3[%c0_7, %c0_8] : memref<24x9xf32, #tpu.memory_space<vmem>>, vector<24x1xf32>
    %7 = vector.extract_strided_slice %3 {offsets = [0, 0], sizes = [24, 239], strides = [1, 1]} : vector<24x256xf32> to vector<24x239xf32>
    %8 = vector.broadcast %6 : vector<24x1xf32> to vector<24x239xf32>
    %9 = arith.mulf %8, %7 : vector<24x239xf32>
    %c0_9 = arith.constant 0 : index
    %c17 = arith.constant 17 : index
    %10 = vector.load %arg9[%c0_9, %c17] : memref<24x256xf32, #tpu.memory_space<vmem>>, vector<24x239xf32>
    %c0_10 = arith.constant 0 : index
    %c0_11 = arith.constant 0 : index
    %c17_12 = arith.constant 17 : index
    %11 = vector.load %arg4[%c0_10, %c0_11, %c17_12] : memref<3x1x256xf32, #tpu.memory_space<vmem>>, vector<1x1x239xf32>
    %12 = vector.shape_cast %11 : vector<1x1x239xf32> to vector<1x239xf32>
    %13 = vector.broadcast %12 : vector<1x239xf32> to vector<24x239xf32>
    %14 = arith.mulf %13, %9 : vector<24x239xf32>
    %15 = arith.addf %10, %14 : vector<24x239xf32>
    %c0_13 = arith.constant 0 : index
    %c17_14 = arith.constant 17 : index
    %16 = vector.load %arg9[%c0_13, %c17_14] : memref<24x256xf32, #tpu.memory_space<vmem>>, vector<24x239xf32>
    tpu.vector_store %arg9[%c0_13, %c17_14], %15 {strides = array<i32>} : memref<24x256xf32, #tpu.memory_space<vmem>>, vector<24x239xf32>,
    %c0_15 = arith.constant 0 : index
    %c1 = arith.constant 1 : index
    %17 = vector.load %arg3[%c0_15, %c1] : memref<24x9xf32, #tpu.memory_space<vmem>>, vector<24x1xf32>
    %18 = vector.extract_strided_slice %3 {offsets = [0, 0], sizes = [24, 240], strides = [1, 1]} : vector<24x256xf32> to vector<24x240xf32>
    %19 = vector.broadcast %17 : vector<24x1xf32> to vector<24x240xf32>
    %20 = arith.mulf %19, %18 : vector<24x240xf32>
    %c0_16 = arith.constant 0 : index
    %c16 = arith.constant 16 : index
    %21 = vector.load %arg9[%c0_16, %c16] : memref<24x256xf32, #tpu.memory_space<vmem>>, vector<24x240xf32>
    %c1_17 = arith.constant 1 : index
    %c0_18 = arith.constant 0 : index
    %c16_19 = arith.constant 16 : index
    %22 = vector.load %arg4[%c1_17, %c0_18, %c16_19] : memref<3x1x256xf32, #tpu.memory_space<vmem>>, vector<1x1x240xf32>
    %23 = vector.shape_cast %22 : vector<1x1x240xf32> to vector<1x240xf32>
    %24 = vector.broadcast %23 : vector<1x240xf32> to vector<24x240xf32>
    %25 = arith.mulf %24, %20 : vector<24x240xf32>
    %26 = arith.addf %21, %25 : vector<24x240xf32>
    %c0_20 = arith.constant 0 : index
    %c16_21 = arith.constant 16 : index
    %27 = vector.load %arg9[%c0_20, %c16_21] : memref<24x256xf32, #tpu.memory_space<vmem>>, vector<24x240xf32>
    tpu.vector_store %arg9[%c0_20, %c16_21], %26 {strides = array<i32>} : memref<24x256xf32, #tpu.memory_space<vmem>>, vector<24x240xf32>,
    %c0_22 = arith.constant 0 : index
    %c2 = arith.constant 2 : index
    %28 = vector.load %arg3[%c0_22, %c2] : memref<24x9xf32, #tpu.memory_space<vmem>>, vector<24x1xf32>
    %29 = vector.extract_strided_slice %3 {offsets = [0, 0], sizes = [24, 241], strides = [1, 1]} : vector<24x256xf32> to vector<24x241xf32>
    %30 = vector.broadcast %28 : vector<24x1xf32> to vector<24x241xf32>
    %31 = arith.mulf %30, %29 : vector<24x241xf32>
    %c0_23 = arith.constant 0 : index
    %c15 = arith.constant 15 : index
    %32 = vector.load %arg9[%c0_23, %c15] : memref<24x256xf32, #tpu.memory_space<vmem>>, vector<24x241xf32>
    %c2_24 = arith.constant 2 : index
    %c0_25 = arith.constant 0 : index
    %c15_26 = arith.constant 15 : index
    %33 = vector.load %arg4[%c2_24, %c0_25, %c15_26] : memref<3x1x256xf32, #tpu.memory_space<vmem>>, vector<1x1x241xf32>
    %34 = vector.shape_cast %33 : vector<1x1x241xf32> to vector<1x241xf32>
    %35 = vector.broadcast %34 : vector<1x241xf32> to vector<24x241xf32>
    %36 = arith.mulf %35, %31 : vector<24x241xf32>
    %37 = arith.addf %32, %36 : vector<24x241xf32>
    %c0_27 = arith.constant 0 : index
    %c15_28 = arith.constant 15 : index
    %38 = vector.load %arg9[%c0_27, %c15_28] : memref<24x256xf32, #tpu.memory_space<vmem>>, vector<24x241xf32>
    tpu.vector_store %arg9[%c0_27, %c15_28], %37 {strides = array<i32>} : memref<24x256xf32, #tpu.memory_space<vmem>>, vector<24x241xf32>,
    %c0_29 = arith.constant 0 : index
    %c3 = arith.constant 3 : index
    %39 = vector.load %arg3[%c0_29, %c3] : memref<24x9xf32, #tpu.memory_space<vmem>>, vector<24x1xf32>
    %40 = vector.extract_strided_slice %3 {offsets = [0, 0], sizes = [24, 255], strides = [1, 1]} : vector<24x256xf32> to vector<24x255xf32>
    %41 = vector.broadcast %39 : vector<24x1xf32> to vector<24x255xf32>
    %42 = arith.mulf %41, %40 : vector<24x255xf32>
    %c0_30 = arith.constant 0 : index
    %c1_31 = arith.constant 1 : index
    %43 = vector.load %arg9[%c0_30, %c1_31] : memref<24x256xf32, #tpu.memory_space<vmem>>, vector<24x255xf32>
    %c0_32 = arith.constant 0 : index
    %c0_33 = arith.constant 0 : index
    %c1_34 = arith.constant 1 : index
    %44 = vector.load %arg4[%c0_32, %c0_33, %c1_34] : memref<3x1x256xf32, #tpu.memory_space<vmem>>, vector<1x1x255xf32>
    %45 = vector.shape_cast %44 : vector<1x1x255xf32> to vector<1x255xf32>
    %46 = vector.broadcast %45 : vector<1x255xf32> to vector<24x255xf32>
    %47 = arith.mulf %46, %42 : vector<24x255xf32>
    %48 = arith.addf %43, %47 : vector<24x255xf32>
    %c0_35 = arith.constant 0 : index
    %c1_36 = arith.constant 1 : index
    %49 = vector.load %arg9[%c0_35, %c1_36] : memref<24x256xf32, #tpu.memory_space<vmem>>, vector<24x255xf32>
    tpu.vector_store %arg9[%c0_35, %c1_36], %48 {strides = array<i32>} : memref<24x256xf32, #tpu.memory_space<vmem>>, vector<24x255xf32>,
    %c0_37 = arith.constant 0 : index
    %c4 = arith.constant 4 : index
    %50 = vector.load %arg3[%c0_37, %c4] : memref<24x9xf32, #tpu.memory_space<vmem>>, vector<24x1xf32>
    %51 = vector.broadcast %50 : vector<24x1xf32> to vector<24x256xf32>
    %52 = arith.mulf %51, %3 : vector<24x256xf32>
    %c0_38 = arith.constant 0 : index
    %c0_39 = arith.constant 0 : index
    %53 = vector.load %arg9[%c0_38, %c0_39] : memref<24x256xf32, #tpu.memory_space<vmem>>, vector<24x256xf32>
    %c1_40 = arith.constant 1 : index
    %c0_41 = arith.constant 0 : index
    %c0_42 = arith.constant 0 : index
    %54 = vector.load %arg4[%c1_40, %c0_41, %c0_42] : memref<3x1x256xf32, #tpu.memory_space<vmem>>, vector<1x1x256xf32>
    %55 = vector.shape_cast %54 : vector<1x1x256xf32> to vector<1x256xf32>
    %56 = vector.broadcast %55 : vector<1x256xf32> to vector<24x256xf32>
    %57 = arith.mulf %56, %52 : vector<24x256xf32>
    %58 = arith.addf %53, %57 : vector<24x256xf32>
    %c0_43 = arith.constant 0 : index
    %c0_44 = arith.constant 0 : index
    %59 = vector.load %arg9[%c0_43, %c0_44] : memref<24x256xf32, #tpu.memory_space<vmem>>, vector<24x256xf32>
    tpu.vector_store %arg9[%c0_43, %c0_44], %58 {strides = array<i32>} : memref<24x256xf32, #tpu.memory_space<vmem>>, vector<24x256xf32>,
    %c0_45 = arith.constant 0 : index
    %c5 = arith.constant 5 : index
    %60 = vector.load %arg3[%c0_45, %c5] : memref<24x9xf32, #tpu.memory_space<vmem>>, vector<24x1xf32>
    %61 = vector.extract_strided_slice %3 {offsets = [0, 1], sizes = [24, 255], strides = [1, 1]} : vector<24x256xf32> to vector<24x255xf32>
    %62 = vector.broadcast %60 : vector<24x1xf32> to vector<24x255xf32>
    %63 = arith.mulf %62, %61 : vector<24x255xf32>
    %c0_46 = arith.constant 0 : index
    %c0_47 = arith.constant 0 : index
    %64 = vector.load %arg9[%c0_46, %c0_47] : memref<24x256xf32, #tpu.memory_space<vmem>>, vector<24x255xf32>
    %c2_48 = arith.constant 2 : index
    %c0_49 = arith.constant 0 : index
    %c0_50 = arith.constant 0 : index
    %65 = vector.load %arg4[%c2_48, %c0_49, %c0_50] : memref<3x1x256xf32, #tpu.memory_space<vmem>>, vector<1x1x255xf32>
    %66 = vector.shape_cast %65 : vector<1x1x255xf32> to vector<1x255xf32>
    %67 = vector.broadcast %66 : vector<1x255xf32> to vector<24x255xf32>
    %68 = arith.mulf %67, %63 : vector<24x255xf32>
    %69 = arith.addf %64, %68 : vector<24x255xf32>
    %c0_51 = arith.constant 0 : index
    %c0_52 = arith.constant 0 : index
    %70 = vector.load %arg9[%c0_51, %c0_52] : memref<24x256xf32, #tpu.memory_space<vmem>>, vector<24x255xf32>
    tpu.vector_store %arg9[%c0_51, %c0_52], %69 {strides = array<i32>} : memref<24x256xf32, #tpu.memory_space<vmem>>, vector<24x255xf32>,
    %c0_53 = arith.constant 0 : index
    %c6 = arith.constant 6 : index
    %71 = vector.load %arg3[%c0_53, %c6] : memref<24x9xf32, #tpu.memory_space<vmem>>, vector<24x1xf32>
    %72 = vector.extract_strided_slice %3 {offsets = [0, 15], sizes = [24, 241], strides = [1, 1]} : vector<24x256xf32> to vector<24x241xf32>
    %73 = vector.broadcast %71 : vector<24x1xf32> to vector<24x241xf32>
    %74 = arith.mulf %73, %72 : vector<24x241xf32>
    %c0_54 = arith.constant 0 : index
    %c0_55 = arith.constant 0 : index
    %75 = vector.load %arg9[%c0_54, %c0_55] : memref<24x256xf32, #tpu.memory_space<vmem>>, vector<24x241xf32>
    %c0_56 = arith.constant 0 : index
    %c0_57 = arith.constant 0 : index
    %c0_58 = arith.constant 0 : index
    %76 = vector.load %arg4[%c0_56, %c0_57, %c0_58] : memref<3x1x256xf32, #tpu.memory_space<vmem>>, vector<1x1x241xf32>
    %77 = vector.shape_cast %76 : vector<1x1x241xf32> to vector<1x241xf32>
    %78 = vector.broadcast %77 : vector<1x241xf32> to vector<24x241xf32>
    %79 = arith.mulf %78, %74 : vector<24x241xf32>
    %80 = arith.addf %75, %79 : vector<24x241xf32>
    %c0_59 = arith.constant 0 : index
    %c0_60 = arith.constant 0 : index
    %81 = vector.load %arg9[%c0_59, %c0_60] : memref<24x256xf32, #tpu.memory_space<vmem>>, vector<24x241xf32>
    tpu.vector_store %arg9[%c0_59, %c0_60], %80 {strides = array<i32>} : memref<24x256xf32, #tpu.memory_space<vmem>>, vector<24x241xf32>,
    %c0_61 = arith.constant 0 : index
    %c7 = arith.constant 7 : index
    %82 = vector.load %arg3[%c0_61, %c7] : memref<24x9xf32, #tpu.memory_space<vmem>>, vector<24x1xf32>
    %83 = vector.extract_strided_slice %3 {offsets = [0, 16], sizes = [24, 240], strides = [1, 1]} : vector<24x256xf32> to vector<24x240xf32>
    %84 = vector.broadcast %82 : vector<24x1xf32> to vector<24x240xf32>
    %85 = arith.mulf %84, %83 : vector<24x240xf32>
    %c0_62 = arith.constant 0 : index
    %c0_63 = arith.constant 0 : index
    %86 = vector.load %arg9[%c0_62, %c0_63] : memref<24x256xf32, #tpu.memory_space<vmem>>, vector<24x240xf32>
    %c1_64 = arith.constant 1 : index
    %c0_65 = arith.constant 0 : index
    %c0_66 = arith.constant 0 : index
    %87 = vector.load %arg4[%c1_64, %c0_65, %c0_66] : memref<3x1x256xf32, #tpu.memory_space<vmem>>, vector<1x1x240xf32>
    %88 = vector.shape_cast %87 : vector<1x1x240xf32> to vector<1x240xf32>
    %89 = vector.broadcast %88 : vector<1x240xf32> to vector<24x240xf32>
    %90 = arith.mulf %89, %85 : vector<24x240xf32>
    %91 = arith.addf %86, %90 : vector<24x240xf32>
    %c0_67 = arith.constant 0 : index
    %c0_68 = arith.constant 0 : index
    %92 = vector.load %arg9[%c0_67, %c0_68] : memref<24x256xf32, #tpu.memory_space<vmem>>, vector<24x240xf32>
    tpu.vector_store %arg9[%c0_67, %c0_68], %91 {strides = array<i32>} : memref<24x256xf32, #tpu.memory_space<vmem>>, vector<24x240xf32>,
    %c0_69 = arith.constant 0 : index
    %c8 = arith.constant 8 : index
    %93 = vector.load %arg3[%c0_69, %c8] : memref<24x9xf32, #tpu.memory_space<vmem>>, vector<24x1xf32>
    %94 = vector.extract_strided_slice %3 {offsets = [0, 17], sizes = [24, 239], strides = [1, 1]} : vector<24x256xf32> to vector<24x239xf32>
    %95 = vector.broadcast %93 : vector<24x1xf32> to vector<24x239xf32>
    %96 = arith.mulf %95, %94 : vector<24x239xf32>
    %c0_70 = arith.constant 0 : index
    %c0_71 = arith.constant 0 : index
    %97 = vector.load %arg9[%c0_70, %c0_71] : memref<24x256xf32, #tpu.memory_space<vmem>>, vector<24x239xf32>
    %c2_72 = arith.constant 2 : index
    %c0_73 = arith.constant 0 : index
    %c0_74 = arith.constant 0 : index
    %98 = vector.load %arg4[%c2_72, %c0_73, %c0_74] : memref<3x1x256xf32, #tpu.memory_space<vmem>>, vector<1x1x239xf32>
    %99 = vector.shape_cast %98 : vector<1x1x239xf32> to vector<1x239xf32>
    %100 = vector.broadcast %99 : vector<1x239xf32> to vector<24x239xf32>
    %101 = arith.mulf %100, %96 : vector<24x239xf32>
    %102 = arith.addf %97, %101 : vector<24x239xf32>
    %c0_75 = arith.constant 0 : index
    %c0_76 = arith.constant 0 : index
    %103 = vector.load %arg9[%c0_75, %c0_76] : memref<24x256xf32, #tpu.memory_space<vmem>>, vector<24x239xf32>
    tpu.vector_store %arg9[%c0_75, %c0_76], %102 {strides = array<i32>} : memref<24x256xf32, #tpu.memory_space<vmem>>, vector<24x239xf32>,
    %c0_77 = arith.constant 0 : index
    %c0_78 = arith.constant 0 : index
    %104 = vector.load %arg9[%c0_77, %c0_78] : memref<24x256xf32, #tpu.memory_space<vmem>>, vector<24x256xf32>
    %105 = arith.truncf %104 : vector<24x256xf32> to vector<24x256xbf16>
    %c0_79 = arith.constant 0 : index
    %c0_80 = arith.constant 0 : index
    %c0_81 = arith.constant 0 : index
    %106 = vector.load %arg7[%c0_79, %c0_80, %c0_81] : memref<1x24x256xbf16, #tpu.memory_space<vmem>>, vector<1x24x256xbf16>
    %107 = vector.shape_cast %106 : vector<1x24x256xbf16> to vector<24x256xbf16>
    %108 = vector.shape_cast %105 : vector<24x256xbf16> to vector<1x24x256xbf16>
    tpu.vector_store %arg7[%c0_79, %c0_80, %c0_81], %108 {strides = array<i32>} : memref<1x24x256xbf16, #tpu.memory_space<vmem>>, vector<1x24x256xbf16>,
    %cst_82 = arith.constant 0.000000e+00 : f32
    %109 = vector.broadcast %cst_82 : f32 to vector<8x256xf32>
    %110 = vector.extract_strided_slice %104 {offsets = [0, 0], sizes = [4, 256], strides = [1, 1]} : vector<24x256xf32> to vector<4x256xf32>
    %111 = vector.extract_strided_slice %104 {offsets = [8, 0], sizes = [4, 256], strides = [1, 1]} : vector<24x256xf32> to vector<4x256xf32>
    %112 = vector.extract_strided_slice %104 {offsets = [16, 0], sizes = [4, 256], strides = [1, 1]} : vector<24x256xf32> to vector<4x256xf32>
    %113 = arith.mulf %110, %110 : vector<4x256xf32>
    %cst_83 = arith.constant dense<0.000000e+00> : vector<4xf32>
    %114 = vector.multi_reduction <add>, %113, %cst_83 [1] : vector<4x256xf32> to vector<4xf32>
    %115 = vector.shape_cast %114 : vector<4xf32> to vector<4x1xf32>
    %cst_84 = arith.constant 1.000000e-24 : f32
    %116 = vector.broadcast %cst_84 : f32 to vector<4x1xf32>
    %117 = arith.addf %115, %116 : vector<4x1xf32>
    %118 = math.rsqrt %117 : vector<4x1xf32>
    %119 = vector.broadcast %118 : vector<4x1xf32> to vector<4x256xf32>
    %120 = arith.mulf %110, %119 : vector<4x256xf32>
    %121 = arith.mulf %111, %111 : vector<4x256xf32>
    %cst_85 = arith.constant dense<0.000000e+00> : vector<4xf32>
    %122 = vector.multi_reduction <add>, %121, %cst_85 [1] : vector<4x256xf32> to vector<4xf32>
    %123 = vector.shape_cast %122 : vector<4xf32> to vector<4x1xf32>
    %cst_86 = arith.constant 1.000000e-24 : f32
    %124 = vector.broadcast %cst_86 : f32 to vector<4x1xf32>
    %125 = arith.addf %123, %124 : vector<4x1xf32>
    %126 = math.rsqrt %125 : vector<4x1xf32>
    %127 = vector.broadcast %126 : vector<4x1xf32> to vector<4x256xf32>
    %128 = arith.mulf %111, %127 : vector<4x256xf32>
    %129 = arith.truncf %120 : vector<4x256xf32> to vector<4x256xbf16>
    %130 = arith.truncf %128 : vector<4x256xf32> to vector<4x256xbf16>
    %cst_87 = arith.constant dense<0.000000e+00> : vector<4x4xf32>
    %131 = tpu.matmul %129, %130, %cst_87 {dimension_numbers = #tpu.dot_dimension_numbers<[1], [1], [0], [0], [0, 0, 1, 0], [], []>} : vector<4x256xbf16>, vector<4x256xbf16>, vector<4x4xf32> -> vector<4x4xf32>
    %c0_88 = arith.constant 0 : index
    %c0_89 = arith.constant 0 : index
    %132 = vector.load %arg6[%c0_88, %c0_89] : memref<2x1xf32, #tpu.memory_space<vmem>>, vector<1x1xf32>
    %133 = vector.broadcast %132 : vector<1x1xf32> to vector<4x4xf32>
    %134 = arith.mulf %131, %133 : vector<4x4xf32>
    %cst_90 = arith.constant dense<0xFF800000> : vector<4xf32>
    %135 = vector.multi_reduction <maximumf>, %134, %cst_90 [1] : vector<4x4xf32> to vector<4xf32>
    %136 = vector.shape_cast %135 : vector<4xf32> to vector<4x1xf32>
    %137 = vector.broadcast %136 : vector<4x1xf32> to vector<4x4xf32>
    %138 = arith.subf %134, %137 : vector<4x4xf32>
    %139 = math.exp %138 : vector<4x4xf32>
    %cst_91 = arith.constant dense<0.000000e+00> : vector<4xf32>
    %140 = vector.multi_reduction <add>, %139, %cst_91 [1] : vector<4x4xf32> to vector<4xf32>
    %141 = vector.shape_cast %140 : vector<4xf32> to vector<4x1xf32>
    %142 = vector.broadcast %141 : vector<4x1xf32> to vector<4x4xf32>
    %143 = arith.divf %139, %142 : vector<4x4xf32>
    %144 = arith.truncf %143 : vector<4x4xf32> to vector<4x4xbf16>
    %145 = arith.truncf %112 : vector<4x256xf32> to vector<4x256xbf16>
    %cst_92 = arith.constant dense<0.000000e+00> : vector<4x256xf32>
    %146 = tpu.matmul %144, %145, %cst_92 {dimension_numbers = #tpu.dot_dimension_numbers<[1], [0], [0], [1], [0, 0, 1, 1], [], []>} : vector<4x4xbf16>, vector<4x256xbf16>, vector<4x256xf32> -> vector<4x256xf32>
    %c0_93 = arith.constant 0 : index
    %c0_94 = arith.constant 0 : index
    %147 = vector.load %arg5[%c0_93, %c0_94] : memref<8x8xbf16, #tpu.memory_space<vmem>>, vector<8x4xbf16>
    %148 = arith.truncf %146 : vector<4x256xf32> to vector<4x256xbf16>
    %cst_95 = arith.constant dense<0.000000e+00> : vector<8x256xf32>
    %149 = tpu.matmul %147, %148, %cst_95 {dimension_numbers = #tpu.dot_dimension_numbers<[1], [0], [0], [1], [0, 0, 1, 1], [], []>} : vector<8x4xbf16>, vector<4x256xbf16>, vector<8x256xf32> -> vector<8x256xf32>
    %150 = arith.addf %109, %149 : vector<8x256xf32>
    %151 = vector.extract_strided_slice %104 {offsets = [4, 0], sizes = [4, 256], strides = [1, 1]} : vector<24x256xf32> to vector<4x256xf32>
    %152 = vector.extract_strided_slice %104 {offsets = [12, 0], sizes = [4, 256], strides = [1, 1]} : vector<24x256xf32> to vector<4x256xf32>
    %153 = vector.extract_strided_slice %104 {offsets = [20, 0], sizes = [4, 256], strides = [1, 1]} : vector<24x256xf32> to vector<4x256xf32>
    %154 = arith.mulf %151, %151 : vector<4x256xf32>
    %cst_96 = arith.constant dense<0.000000e+00> : vector<4xf32>
    %155 = vector.multi_reduction <add>, %154, %cst_96 [1] : vector<4x256xf32> to vector<4xf32>
    %156 = vector.shape_cast %155 : vector<4xf32> to vector<4x1xf32>
    %cst_97 = arith.constant 1.000000e-24 : f32
    %157 = vector.broadcast %cst_97 : f32 to vector<4x1xf32>
    %158 = arith.addf %156, %157 : vector<4x1xf32>
    %159 = math.rsqrt %158 : vector<4x1xf32>
    %160 = vector.broadcast %159 : vector<4x1xf32> to vector<4x256xf32>
    %161 = arith.mulf %151, %160 : vector<4x256xf32>
    %162 = arith.mulf %152, %152 : vector<4x256xf32>
    %cst_98 = arith.constant dense<0.000000e+00> : vector<4xf32>
    %163 = vector.multi_reduction <add>, %162, %cst_98 [1] : vector<4x256xf32> to vector<4xf32>
    %164 = vector.shape_cast %163 : vector<4xf32> to vector<4x1xf32>
    %cst_99 = arith.constant 1.000000e-24 : f32
    %165 = vector.broadcast %cst_99 : f32 to vector<4x1xf32>
    %166 = arith.addf %164, %165 : vector<4x1xf32>
    %167 = math.rsqrt %166 : vector<4x1xf32>
    %168 = vector.broadcast %167 : vector<4x1xf32> to vector<4x256xf32>
    %169 = arith.mulf %152, %168 : vector<4x256xf32>
    %170 = arith.truncf %161 : vector<4x256xf32> to vector<4x256xbf16>
    %171 = arith.truncf %169 : vector<4x256xf32> to vector<4x256xbf16>
    %cst_100 = arith.constant dense<0.000000e+00> : vector<4x4xf32>
    %172 = tpu.matmul %170, %171, %cst_100 {dimension_numbers = #tpu.dot_dimension_numbers<[1], [1], [0], [0], [0, 0, 1, 0], [], []>} : vector<4x256xbf16>, vector<4x256xbf16>, vector<4x4xf32> -> vector<4x4xf32>
    %c1_101 = arith.constant 1 : index
    %c0_102 = arith.constant 0 : index
    %173 = vector.load %arg6[%c1_101, %c0_102] : memref<2x1xf32, #tpu.memory_space<vmem>>, vector<1x1xf32>
    %174 = vector.broadcast %173 : vector<1x1xf32> to vector<4x4xf32>
    %175 = arith.mulf %172, %174 : vector<4x4xf32>
    %cst_103 = arith.constant dense<0xFF800000> : vector<4xf32>
    %176 = vector.multi_reduction <maximumf>, %175, %cst_103 [1] : vector<4x4xf32> to vector<4xf32>
    %177 = vector.shape_cast %176 : vector<4xf32> to vector<4x1xf32>
    %178 = vector.broadcast %177 : vector<4x1xf32> to vector<4x4xf32>
    %179 = arith.subf %175, %178 : vector<4x4xf32>
    %180 = math.exp %179 : vector<4x4xf32>
    %cst_104 = arith.constant dense<0.000000e+00> : vector<4xf32>
    %181 = vector.multi_reduction <add>, %180, %cst_104 [1] : vector<4x4xf32> to vector<4xf32>
    %182 = vector.shape_cast %181 : vector<4xf32> to vector<4x1xf32>
    %183 = vector.broadcast %182 : vector<4x1xf32> to vector<4x4xf32>
    %184 = arith.divf %180, %183 : vector<4x4xf32>
    %185 = arith.truncf %184 : vector<4x4xf32> to vector<4x4xbf16>
    %186 = arith.truncf %153 : vector<4x256xf32> to vector<4x256xbf16>
    %cst_105 = arith.constant dense<0.000000e+00> : vector<4x256xf32>
    %187 = tpu.matmul %185, %186, %cst_105 {dimension_numbers = #tpu.dot_dimension_numbers<[1], [0], [0], [1], [0, 0, 1, 1], [], []>} : vector<4x4xbf16>, vector<4x256xbf16>, vector<4x256xf32> -> vector<4x256xf32>
    %c0_106 = arith.constant 0 : index
    %c4_107 = arith.constant 4 : index
    %188 = vector.load %arg5[%c0_106, %c4_107] : memref<8x8xbf16, #tpu.memory_space<vmem>>, vector<8x4xbf16>
    %189 = arith.truncf %187 : vector<4x256xf32> to vector<4x256xbf16>
    %cst_108 = arith.constant dense<0.000000e+00> : vector<8x256xf32>
    %190 = tpu.matmul %188, %189, %cst_108 {dimension_numbers = #tpu.dot_dimension_numbers<[1], [0], [0], [1], [0, 0, 1, 1], [], []>} : vector<8x4xbf16>, vector<4x256xbf16>, vector<8x256xf32> -> vector<8x256xf32>
    %191 = arith.addf %150, %190 : vector<8x256xf32>
    %192 = arith.truncf %191 : vector<8x256xf32> to vector<8x256xbf16>
    %c0_109 = arith.constant 0 : index
    %c0_110 = arith.constant 0 : index
    %c0_111 = arith.constant 0 : index
    %193 = vector.load %arg8[%c0_109, %c0_110, %c0_111] : memref<1x8x256xbf16, #tpu.memory_space<vmem>>, vector<1x8x256xbf16>
    %194 = vector.shape_cast %193 : vector<1x8x256xbf16> to vector<8x256xbf16>
    %195 = vector.shape_cast %192 : vector<8x256xbf16> to vector<1x8x256xbf16>
    tpu.vector_store %arg8[%c0_109, %c0_110, %c0_111], %195 {strides = array<i32>} : memref<1x8x256xbf16, #tpu.memory_space<vmem>>, vector<1x8x256xbf16>,
    return
  }
  func.func @transform_0(%arg0: i32) -> (i32, i32, i32) {
    %c0_i32 = arith.constant 0 : i32
    %c0_i32_0 = arith.constant 0 : i32
    %c0_i32_1 = arith.constant 0 : i32
    return %arg0, %c0_i32, %c0_i32_0 : i32, i32, i32
  }
  func.func @transform_1(%arg0: i32) -> (i32, i32) {
    %c0_i32 = arith.constant 0 : i32
    %c0_i32_0 = arith.constant 0 : i32
    %c0_i32_1 = arith.constant 0 : i32
    return %c0_i32, %c0_i32_0 : i32, i32
  }
  func.func @transform_2(%arg0: i32) -> (i32, i32) {
    %c0_i32 = arith.constant 0 : i32
    %c0_i32_0 = arith.constant 0 : i32
    %c0_i32_1 = arith.constant 0 : i32
    return %c0_i32, %c0_i32_0 : i32, i32
  }
  func.func @transform_3(%arg0: i32) -> (i32, i32, i32) {
    %c0_i32 = arith.constant 0 : i32
    %c0_i32_0 = arith.constant 0 : i32
    %c0_i32_1 = arith.constant 0 : i32
    %c0_i32_2 = arith.constant 0 : i32
    return %c0_i32, %c0_i32_0, %c0_i32_1 : i32, i32, i32
  }
  func.func @transform_4(%arg0: i32) -> (i32, i32) {
    %c0_i32 = arith.constant 0 : i32
    %c0_i32_0 = arith.constant 0 : i32
    %c0_i32_1 = arith.constant 0 : i32
    return %c0_i32, %c0_i32_0 : i32, i32
  }
  func.func @transform_5(%arg0: i32) -> (i32, i32) {
    %c0_i32 = arith.constant 0 : i32
    %c0_i32_0 = arith.constant 0 : i32
    %c0_i32_1 = arith.constant 0 : i32
    return %c0_i32, %c0_i32_0 : i32, i32
  }
  func.func @transform_6(%arg0: i32) -> (i32, i32, i32) {
    %c0_i32 = arith.constant 0 : i32
    %c0_i32_0 = arith.constant 0 : i32
    %c0_i32_1 = arith.constant 0 : i32
    return %arg0, %c0_i32, %c0_i32_0 : i32, i32, i32
  }
  func.func @transform_7(%arg0: i32) -> (i32, i32, i32) {
    %c0_i32 = arith.constant 0 : i32
    %c0_i32_0 = arith.constant 0 : i32
    %c0_i32_1 = arith.constant 0 : i32
    return %arg0, %c0_i32, %c0_i32_0 : i32, i32, i32
  }
}

module attributes {stable_mosaic.version = 11 : i64} {
  func.func @_conv_branch_kernel(%arg0: i32, %arg1: memref<1x256x24xbf16, #tpu.memory_space<vmem>>, %arg2: memref<9x8x24xbf16, #tpu.memory_space<vmem>>, %arg3: memref<3x1x256xf32, #tpu.memory_space<vmem>>, %arg4: memref<8x256xf32, #tpu.memory_space<vmem>>, %arg5: memref<1x8x256xbf16, #tpu.memory_space<vmem>>, %arg6: memref<1x8x256xf32, #tpu.memory_space<vmem>>) attributes {dimension_semantics = [#tpu.dimension_semantics<parallel>], iteration_bounds = array<i64: 2>, scalar_prefetch = 0 : i64, scratch_operands = 0 : i64, tpu.core_type = #tpu.core_type<tc>, window_params = [{transform_indices = @transform_0, window_bounds = array<i64: 1, 256, 24>}, {pipeline_mode = #tpu.pipeline_mode<synchronous>, transform_indices = @transform_1, window_bounds = array<i64: 9, 8, 24>}, {pipeline_mode = #tpu.pipeline_mode<synchronous>, transform_indices = @transform_2, window_bounds = array<i64: 3, 1, 256>}, {pipeline_mode = #tpu.pipeline_mode<synchronous>, transform_indices = @transform_3, window_bounds = array<i64: 8, 256>}, {transform_indices = @transform_4, window_bounds = array<i64: 1, 8, 256>}, {transform_indices = @transform_5, window_bounds = array<i64: 1, 8, 256>}]} {
    %c0 = arith.constant 0 : index
    %c0_0 = arith.constant 0 : index
    %c0_1 = arith.constant 0 : index
    %0 = vector.load %arg1[%c0, %c0_0, %c0_1] : memref<1x256x24xbf16, #tpu.memory_space<vmem>>, vector<1x256x24xbf16>
    %1 = vector.shape_cast %0 : vector<1x256x24xbf16> to vector<256x24xbf16>
    %c0_2 = arith.constant 0 : index
    %c0_3 = arith.constant 0 : index
    %2 = vector.load %arg4[%c0_2, %c0_3] : memref<8x256xf32, #tpu.memory_space<vmem>>, vector<8x256xf32>
    %c0_4 = arith.constant 0 : index
    %c0_5 = arith.constant 0 : index
    %c0_6 = arith.constant 0 : index
    %3 = vector.load %arg5[%c0_4, %c0_5, %c0_6] : memref<1x8x256xbf16, #tpu.memory_space<vmem>>, vector<1x8x256xbf16>
    %4 = vector.shape_cast %3 : vector<1x8x256xbf16> to vector<8x256xbf16>
    %5 = arith.extf %4 : vector<8x256xbf16> to vector<8x256xf32>
    %6 = arith.addf %2, %5 : vector<8x256xf32>
    %c0_7 = arith.constant 0 : index
    %c0_8 = arith.constant 0 : index
    %c0_9 = arith.constant 0 : index
    %7 = vector.load %arg6[%c0_7, %c0_8, %c0_9] : memref<1x8x256xf32, #tpu.memory_space<vmem>>, vector<1x8x256xf32>
    %8 = vector.shape_cast %7 : vector<1x8x256xf32> to vector<8x256xf32>
    %9 = vector.shape_cast %6 : vector<8x256xf32> to vector<1x8x256xf32>
    tpu.vector_store %arg6[%c0_7, %c0_8, %c0_9], %9 {strides = array<i32>} : memref<1x8x256xf32, #tpu.memory_space<vmem>>, vector<1x8x256xf32>,
    %c0_10 = arith.constant 0 : index
    %c0_11 = arith.constant 0 : index
    %c0_12 = arith.constant 0 : index
    %10 = vector.load %arg2[%c0_10, %c0_11, %c0_12] : memref<9x8x24xbf16, #tpu.memory_space<vmem>>, vector<1x8x24xbf16>
    %11 = vector.shape_cast %10 : vector<1x8x24xbf16> to vector<8x24xbf16>
    %12 = vector.extract_strided_slice %1 {offsets = [0, 0], sizes = [239, 24], strides = [1, 1]} : vector<256x24xbf16> to vector<239x24xbf16>
    %cst = arith.constant dense<0.000000e+00> : vector<8x239xf32>
    %13 = tpu.matmul %11, %12, %cst {dimension_numbers = #tpu.dot_dimension_numbers<[1], [1], [0], [0], [0, 0, 1, 0], [], []>} : vector<8x24xbf16>, vector<239x24xbf16>, vector<8x239xf32> -> vector<8x239xf32>
    %c0_13 = arith.constant 0 : index
    %c0_14 = arith.constant 0 : index
    %c17 = arith.constant 17 : index
    %14 = vector.load %arg6[%c0_13, %c0_14, %c17] : memref<1x8x256xf32, #tpu.memory_space<vmem>>, vector<1x8x239xf32>
    %15 = vector.shape_cast %14 : vector<1x8x239xf32> to vector<8x239xf32>
    %c0_15 = arith.constant 0 : index
    %c0_16 = arith.constant 0 : index
    %c17_17 = arith.constant 17 : index
    %16 = vector.load %arg3[%c0_15, %c0_16, %c17_17] : memref<3x1x256xf32, #tpu.memory_space<vmem>>, vector<1x1x239xf32>
    %17 = vector.shape_cast %16 : vector<1x1x239xf32> to vector<1x239xf32>
    %18 = vector.broadcast %17 : vector<1x239xf32> to vector<8x239xf32>
    %19 = arith.mulf %18, %13 : vector<8x239xf32>
    %20 = arith.addf %15, %19 : vector<8x239xf32>
    %c0_18 = arith.constant 0 : index
    %c0_19 = arith.constant 0 : index
    %c17_20 = arith.constant 17 : index
    %21 = vector.load %arg6[%c0_18, %c0_19, %c17_20] : memref<1x8x256xf32, #tpu.memory_space<vmem>>, vector<1x8x239xf32>
    %22 = vector.shape_cast %21 : vector<1x8x239xf32> to vector<8x239xf32>
    %23 = vector.shape_cast %20 : vector<8x239xf32> to vector<1x8x239xf32>
    tpu.vector_store %arg6[%c0_18, %c0_19, %c17_20], %23 {strides = array<i32>} : memref<1x8x256xf32, #tpu.memory_space<vmem>>, vector<1x8x239xf32>,
    %c1 = arith.constant 1 : index
    %c0_21 = arith.constant 0 : index
    %c0_22 = arith.constant 0 : index
    %24 = vector.load %arg2[%c1, %c0_21, %c0_22] : memref<9x8x24xbf16, #tpu.memory_space<vmem>>, vector<1x8x24xbf16>
    %25 = vector.shape_cast %24 : vector<1x8x24xbf16> to vector<8x24xbf16>
    %26 = vector.extract_strided_slice %1 {offsets = [0, 0], sizes = [240, 24], strides = [1, 1]} : vector<256x24xbf16> to vector<240x24xbf16>
    %cst_23 = arith.constant dense<0.000000e+00> : vector<8x240xf32>
    %27 = tpu.matmul %25, %26, %cst_23 {dimension_numbers = #tpu.dot_dimension_numbers<[1], [1], [0], [0], [0, 0, 1, 0], [], []>} : vector<8x24xbf16>, vector<240x24xbf16>, vector<8x240xf32> -> vector<8x240xf32>
    %c0_24 = arith.constant 0 : index
    %c0_25 = arith.constant 0 : index
    %c16 = arith.constant 16 : index
    %28 = vector.load %arg6[%c0_24, %c0_25, %c16] : memref<1x8x256xf32, #tpu.memory_space<vmem>>, vector<1x8x240xf32>
    %29 = vector.shape_cast %28 : vector<1x8x240xf32> to vector<8x240xf32>
    %c1_26 = arith.constant 1 : index
    %c0_27 = arith.constant 0 : index
    %c16_28 = arith.constant 16 : index
    %30 = vector.load %arg3[%c1_26, %c0_27, %c16_28] : memref<3x1x256xf32, #tpu.memory_space<vmem>>, vector<1x1x240xf32>
    %31 = vector.shape_cast %30 : vector<1x1x240xf32> to vector<1x240xf32>
    %32 = vector.broadcast %31 : vector<1x240xf32> to vector<8x240xf32>
    %33 = arith.mulf %32, %27 : vector<8x240xf32>
    %34 = arith.addf %29, %33 : vector<8x240xf32>
    %c0_29 = arith.constant 0 : index
    %c0_30 = arith.constant 0 : index
    %c16_31 = arith.constant 16 : index
    %35 = vector.load %arg6[%c0_29, %c0_30, %c16_31] : memref<1x8x256xf32, #tpu.memory_space<vmem>>, vector<1x8x240xf32>
    %36 = vector.shape_cast %35 : vector<1x8x240xf32> to vector<8x240xf32>
    %37 = vector.shape_cast %34 : vector<8x240xf32> to vector<1x8x240xf32>
    tpu.vector_store %arg6[%c0_29, %c0_30, %c16_31], %37 {strides = array<i32>} : memref<1x8x256xf32, #tpu.memory_space<vmem>>, vector<1x8x240xf32>,
    %c2 = arith.constant 2 : index
    %c0_32 = arith.constant 0 : index
    %c0_33 = arith.constant 0 : index
    %38 = vector.load %arg2[%c2, %c0_32, %c0_33] : memref<9x8x24xbf16, #tpu.memory_space<vmem>>, vector<1x8x24xbf16>
    %39 = vector.shape_cast %38 : vector<1x8x24xbf16> to vector<8x24xbf16>
    %40 = vector.extract_strided_slice %1 {offsets = [0, 0], sizes = [241, 24], strides = [1, 1]} : vector<256x24xbf16> to vector<241x24xbf16>
    %cst_34 = arith.constant dense<0.000000e+00> : vector<8x241xf32>
    %41 = tpu.matmul %39, %40, %cst_34 {dimension_numbers = #tpu.dot_dimension_numbers<[1], [1], [0], [0], [0, 0, 1, 0], [], []>} : vector<8x24xbf16>, vector<241x24xbf16>, vector<8x241xf32> -> vector<8x241xf32>
    %c0_35 = arith.constant 0 : index
    %c0_36 = arith.constant 0 : index
    %c15 = arith.constant 15 : index
    %42 = vector.load %arg6[%c0_35, %c0_36, %c15] : memref<1x8x256xf32, #tpu.memory_space<vmem>>, vector<1x8x241xf32>
    %43 = vector.shape_cast %42 : vector<1x8x241xf32> to vector<8x241xf32>
    %c2_37 = arith.constant 2 : index
    %c0_38 = arith.constant 0 : index
    %c15_39 = arith.constant 15 : index
    %44 = vector.load %arg3[%c2_37, %c0_38, %c15_39] : memref<3x1x256xf32, #tpu.memory_space<vmem>>, vector<1x1x241xf32>
    %45 = vector.shape_cast %44 : vector<1x1x241xf32> to vector<1x241xf32>
    %46 = vector.broadcast %45 : vector<1x241xf32> to vector<8x241xf32>
    %47 = arith.mulf %46, %41 : vector<8x241xf32>
    %48 = arith.addf %43, %47 : vector<8x241xf32>
    %c0_40 = arith.constant 0 : index
    %c0_41 = arith.constant 0 : index
    %c15_42 = arith.constant 15 : index
    %49 = vector.load %arg6[%c0_40, %c0_41, %c15_42] : memref<1x8x256xf32, #tpu.memory_space<vmem>>, vector<1x8x241xf32>
    %50 = vector.shape_cast %49 : vector<1x8x241xf32> to vector<8x241xf32>
    %51 = vector.shape_cast %48 : vector<8x241xf32> to vector<1x8x241xf32>
    tpu.vector_store %arg6[%c0_40, %c0_41, %c15_42], %51 {strides = array<i32>} : memref<1x8x256xf32, #tpu.memory_space<vmem>>, vector<1x8x241xf32>,
    %c3 = arith.constant 3 : index
    %c0_43 = arith.constant 0 : index
    %c0_44 = arith.constant 0 : index
    %52 = vector.load %arg2[%c3, %c0_43, %c0_44] : memref<9x8x24xbf16, #tpu.memory_space<vmem>>, vector<1x8x24xbf16>
    %53 = vector.shape_cast %52 : vector<1x8x24xbf16> to vector<8x24xbf16>
    %54 = vector.extract_strided_slice %1 {offsets = [0, 0], sizes = [255, 24], strides = [1, 1]} : vector<256x24xbf16> to vector<255x24xbf16>
    %cst_45 = arith.constant dense<0.000000e+00> : vector<8x255xf32>
    %55 = tpu.matmul %53, %54, %cst_45 {dimension_numbers = #tpu.dot_dimension_numbers<[1], [1], [0], [0], [0, 0, 1, 0], [], []>} : vector<8x24xbf16>, vector<255x24xbf16>, vector<8x255xf32> -> vector<8x255xf32>
    %c0_46 = arith.constant 0 : index
    %c0_47 = arith.constant 0 : index
    %c1_48 = arith.constant 1 : index
    %56 = vector.load %arg6[%c0_46, %c0_47, %c1_48] : memref<1x8x256xf32, #tpu.memory_space<vmem>>, vector<1x8x255xf32>
    %57 = vector.shape_cast %56 : vector<1x8x255xf32> to vector<8x255xf32>
    %c0_49 = arith.constant 0 : index
    %c0_50 = arith.constant 0 : index
    %c1_51 = arith.constant 1 : index
    %58 = vector.load %arg3[%c0_49, %c0_50, %c1_51] : memref<3x1x256xf32, #tpu.memory_space<vmem>>, vector<1x1x255xf32>
    %59 = vector.shape_cast %58 : vector<1x1x255xf32> to vector<1x255xf32>
    %60 = vector.broadcast %59 : vector<1x255xf32> to vector<8x255xf32>
    %61 = arith.mulf %60, %55 : vector<8x255xf32>
    %62 = arith.addf %57, %61 : vector<8x255xf32>
    %c0_52 = arith.constant 0 : index
    %c0_53 = arith.constant 0 : index
    %c1_54 = arith.constant 1 : index
    %63 = vector.load %arg6[%c0_52, %c0_53, %c1_54] : memref<1x8x256xf32, #tpu.memory_space<vmem>>, vector<1x8x255xf32>
    %64 = vector.shape_cast %63 : vector<1x8x255xf32> to vector<8x255xf32>
    %65 = vector.shape_cast %62 : vector<8x255xf32> to vector<1x8x255xf32>
    tpu.vector_store %arg6[%c0_52, %c0_53, %c1_54], %65 {strides = array<i32>} : memref<1x8x256xf32, #tpu.memory_space<vmem>>, vector<1x8x255xf32>,
    %c4 = arith.constant 4 : index
    %c0_55 = arith.constant 0 : index
    %c0_56 = arith.constant 0 : index
    %66 = vector.load %arg2[%c4, %c0_55, %c0_56] : memref<9x8x24xbf16, #tpu.memory_space<vmem>>, vector<1x8x24xbf16>
    %67 = vector.shape_cast %66 : vector<1x8x24xbf16> to vector<8x24xbf16>
    %cst_57 = arith.constant dense<0.000000e+00> : vector<8x256xf32>
    %68 = tpu.matmul %67, %1, %cst_57 {dimension_numbers = #tpu.dot_dimension_numbers<[1], [1], [0], [0], [0, 0, 1, 0], [], []>} : vector<8x24xbf16>, vector<256x24xbf16>, vector<8x256xf32> -> vector<8x256xf32>
    %c0_58 = arith.constant 0 : index
    %c0_59 = arith.constant 0 : index
    %c0_60 = arith.constant 0 : index
    %69 = vector.load %arg6[%c0_58, %c0_59, %c0_60] : memref<1x8x256xf32, #tpu.memory_space<vmem>>, vector<1x8x256xf32>
    %70 = vector.shape_cast %69 : vector<1x8x256xf32> to vector<8x256xf32>
    %c1_61 = arith.constant 1 : index
    %c0_62 = arith.constant 0 : index
    %c0_63 = arith.constant 0 : index
    %71 = vector.load %arg3[%c1_61, %c0_62, %c0_63] : memref<3x1x256xf32, #tpu.memory_space<vmem>>, vector<1x1x256xf32>
    %72 = vector.shape_cast %71 : vector<1x1x256xf32> to vector<1x256xf32>
    %73 = vector.broadcast %72 : vector<1x256xf32> to vector<8x256xf32>
    %74 = arith.mulf %73, %68 : vector<8x256xf32>
    %75 = arith.addf %70, %74 : vector<8x256xf32>
    %c0_64 = arith.constant 0 : index
    %c0_65 = arith.constant 0 : index
    %c0_66 = arith.constant 0 : index
    %76 = vector.load %arg6[%c0_64, %c0_65, %c0_66] : memref<1x8x256xf32, #tpu.memory_space<vmem>>, vector<1x8x256xf32>
    %77 = vector.shape_cast %76 : vector<1x8x256xf32> to vector<8x256xf32>
    %78 = vector.shape_cast %75 : vector<8x256xf32> to vector<1x8x256xf32>
    tpu.vector_store %arg6[%c0_64, %c0_65, %c0_66], %78 {strides = array<i32>} : memref<1x8x256xf32, #tpu.memory_space<vmem>>, vector<1x8x256xf32>,
    %c5 = arith.constant 5 : index
    %c0_67 = arith.constant 0 : index
    %c0_68 = arith.constant 0 : index
    %79 = vector.load %arg2[%c5, %c0_67, %c0_68] : memref<9x8x24xbf16, #tpu.memory_space<vmem>>, vector<1x8x24xbf16>
    %80 = vector.shape_cast %79 : vector<1x8x24xbf16> to vector<8x24xbf16>
    %81 = vector.extract_strided_slice %1 {offsets = [1, 0], sizes = [255, 24], strides = [1, 1]} : vector<256x24xbf16> to vector<255x24xbf16>
    %cst_69 = arith.constant dense<0.000000e+00> : vector<8x255xf32>
    %82 = tpu.matmul %80, %81, %cst_69 {dimension_numbers = #tpu.dot_dimension_numbers<[1], [1], [0], [0], [0, 0, 1, 0], [], []>} : vector<8x24xbf16>, vector<255x24xbf16>, vector<8x255xf32> -> vector<8x255xf32>
    %c0_70 = arith.constant 0 : index
    %c0_71 = arith.constant 0 : index
    %c0_72 = arith.constant 0 : index
    %83 = vector.load %arg6[%c0_70, %c0_71, %c0_72] : memref<1x8x256xf32, #tpu.memory_space<vmem>>, vector<1x8x255xf32>
    %84 = vector.shape_cast %83 : vector<1x8x255xf32> to vector<8x255xf32>
    %c2_73 = arith.constant 2 : index
    %c0_74 = arith.constant 0 : index
    %c0_75 = arith.constant 0 : index
    %85 = vector.load %arg3[%c2_73, %c0_74, %c0_75] : memref<3x1x256xf32, #tpu.memory_space<vmem>>, vector<1x1x255xf32>
    %86 = vector.shape_cast %85 : vector<1x1x255xf32> to vector<1x255xf32>
    %87 = vector.broadcast %86 : vector<1x255xf32> to vector<8x255xf32>
    %88 = arith.mulf %87, %82 : vector<8x255xf32>
    %89 = arith.addf %84, %88 : vector<8x255xf32>
    %c0_76 = arith.constant 0 : index
    %c0_77 = arith.constant 0 : index
    %c0_78 = arith.constant 0 : index
    %90 = vector.load %arg6[%c0_76, %c0_77, %c0_78] : memref<1x8x256xf32, #tpu.memory_space<vmem>>, vector<1x8x255xf32>
    %91 = vector.shape_cast %90 : vector<1x8x255xf32> to vector<8x255xf32>
    %92 = vector.shape_cast %89 : vector<8x255xf32> to vector<1x8x255xf32>
    tpu.vector_store %arg6[%c0_76, %c0_77, %c0_78], %92 {strides = array<i32>} : memref<1x8x256xf32, #tpu.memory_space<vmem>>, vector<1x8x255xf32>,
    %c6 = arith.constant 6 : index
    %c0_79 = arith.constant 0 : index
    %c0_80 = arith.constant 0 : index
    %93 = vector.load %arg2[%c6, %c0_79, %c0_80] : memref<9x8x24xbf16, #tpu.memory_space<vmem>>, vector<1x8x24xbf16>
    %94 = vector.shape_cast %93 : vector<1x8x24xbf16> to vector<8x24xbf16>
    %95 = vector.extract_strided_slice %1 {offsets = [15, 0], sizes = [241, 24], strides = [1, 1]} : vector<256x24xbf16> to vector<241x24xbf16>
    %cst_81 = arith.constant dense<0.000000e+00> : vector<8x241xf32>
    %96 = tpu.matmul %94, %95, %cst_81 {dimension_numbers = #tpu.dot_dimension_numbers<[1], [1], [0], [0], [0, 0, 1, 0], [], []>} : vector<8x24xbf16>, vector<241x24xbf16>, vector<8x241xf32> -> vector<8x241xf32>
    %c0_82 = arith.constant 0 : index
    %c0_83 = arith.constant 0 : index
    %c0_84 = arith.constant 0 : index
    %97 = vector.load %arg6[%c0_82, %c0_83, %c0_84] : memref<1x8x256xf32, #tpu.memory_space<vmem>>, vector<1x8x241xf32>
    %98 = vector.shape_cast %97 : vector<1x8x241xf32> to vector<8x241xf32>
    %c0_85 = arith.constant 0 : index
    %c0_86 = arith.constant 0 : index
    %c0_87 = arith.constant 0 : index
    %99 = vector.load %arg3[%c0_85, %c0_86, %c0_87] : memref<3x1x256xf32, #tpu.memory_space<vmem>>, vector<1x1x241xf32>
    %100 = vector.shape_cast %99 : vector<1x1x241xf32> to vector<1x241xf32>
    %101 = vector.broadcast %100 : vector<1x241xf32> to vector<8x241xf32>
    %102 = arith.mulf %101, %96 : vector<8x241xf32>
    %103 = arith.addf %98, %102 : vector<8x241xf32>
    %c0_88 = arith.constant 0 : index
    %c0_89 = arith.constant 0 : index
    %c0_90 = arith.constant 0 : index
    %104 = vector.load %arg6[%c0_88, %c0_89, %c0_90] : memref<1x8x256xf32, #tpu.memory_space<vmem>>, vector<1x8x241xf32>
    %105 = vector.shape_cast %104 : vector<1x8x241xf32> to vector<8x241xf32>
    %106 = vector.shape_cast %103 : vector<8x241xf32> to vector<1x8x241xf32>
    tpu.vector_store %arg6[%c0_88, %c0_89, %c0_90], %106 {strides = array<i32>} : memref<1x8x256xf32, #tpu.memory_space<vmem>>, vector<1x8x241xf32>,
    %c7 = arith.constant 7 : index
    %c0_91 = arith.constant 0 : index
    %c0_92 = arith.constant 0 : index
    %107 = vector.load %arg2[%c7, %c0_91, %c0_92] : memref<9x8x24xbf16, #tpu.memory_space<vmem>>, vector<1x8x24xbf16>
    %108 = vector.shape_cast %107 : vector<1x8x24xbf16> to vector<8x24xbf16>
    %109 = vector.extract_strided_slice %1 {offsets = [16, 0], sizes = [240, 24], strides = [1, 1]} : vector<256x24xbf16> to vector<240x24xbf16>
    %cst_93 = arith.constant dense<0.000000e+00> : vector<8x240xf32>
    %110 = tpu.matmul %108, %109, %cst_93 {dimension_numbers = #tpu.dot_dimension_numbers<[1], [1], [0], [0], [0, 0, 1, 0], [], []>} : vector<8x24xbf16>, vector<240x24xbf16>, vector<8x240xf32> -> vector<8x240xf32>
    %c0_94 = arith.constant 0 : index
    %c0_95 = arith.constant 0 : index
    %c0_96 = arith.constant 0 : index
    %111 = vector.load %arg6[%c0_94, %c0_95, %c0_96] : memref<1x8x256xf32, #tpu.memory_space<vmem>>, vector<1x8x240xf32>
    %112 = vector.shape_cast %111 : vector<1x8x240xf32> to vector<8x240xf32>
    %c1_97 = arith.constant 1 : index
    %c0_98 = arith.constant 0 : index
    %c0_99 = arith.constant 0 : index
    %113 = vector.load %arg3[%c1_97, %c0_98, %c0_99] : memref<3x1x256xf32, #tpu.memory_space<vmem>>, vector<1x1x240xf32>
    %114 = vector.shape_cast %113 : vector<1x1x240xf32> to vector<1x240xf32>
    %115 = vector.broadcast %114 : vector<1x240xf32> to vector<8x240xf32>
    %116 = arith.mulf %115, %110 : vector<8x240xf32>
    %117 = arith.addf %112, %116 : vector<8x240xf32>
    %c0_100 = arith.constant 0 : index
    %c0_101 = arith.constant 0 : index
    %c0_102 = arith.constant 0 : index
    %118 = vector.load %arg6[%c0_100, %c0_101, %c0_102] : memref<1x8x256xf32, #tpu.memory_space<vmem>>, vector<1x8x240xf32>
    %119 = vector.shape_cast %118 : vector<1x8x240xf32> to vector<8x240xf32>
    %120 = vector.shape_cast %117 : vector<8x240xf32> to vector<1x8x240xf32>
    tpu.vector_store %arg6[%c0_100, %c0_101, %c0_102], %120 {strides = array<i32>} : memref<1x8x256xf32, #tpu.memory_space<vmem>>, vector<1x8x240xf32>,
    %c8 = arith.constant 8 : index
    %c0_103 = arith.constant 0 : index
    %c0_104 = arith.constant 0 : index
    %121 = vector.load %arg2[%c8, %c0_103, %c0_104] : memref<9x8x24xbf16, #tpu.memory_space<vmem>>, vector<1x8x24xbf16>
    %122 = vector.shape_cast %121 : vector<1x8x24xbf16> to vector<8x24xbf16>
    %123 = vector.extract_strided_slice %1 {offsets = [17, 0], sizes = [239, 24], strides = [1, 1]} : vector<256x24xbf16> to vector<239x24xbf16>
    %cst_105 = arith.constant dense<0.000000e+00> : vector<8x239xf32>
    %124 = tpu.matmul %122, %123, %cst_105 {dimension_numbers = #tpu.dot_dimension_numbers<[1], [1], [0], [0], [0, 0, 1, 0], [], []>} : vector<8x24xbf16>, vector<239x24xbf16>, vector<8x239xf32> -> vector<8x239xf32>
    %c0_106 = arith.constant 0 : index
    %c0_107 = arith.constant 0 : index
    %c0_108 = arith.constant 0 : index
    %125 = vector.load %arg6[%c0_106, %c0_107, %c0_108] : memref<1x8x256xf32, #tpu.memory_space<vmem>>, vector<1x8x239xf32>
    %126 = vector.shape_cast %125 : vector<1x8x239xf32> to vector<8x239xf32>
    %c2_109 = arith.constant 2 : index
    %c0_110 = arith.constant 0 : index
    %c0_111 = arith.constant 0 : index
    %127 = vector.load %arg3[%c2_109, %c0_110, %c0_111] : memref<3x1x256xf32, #tpu.memory_space<vmem>>, vector<1x1x239xf32>
    %128 = vector.shape_cast %127 : vector<1x1x239xf32> to vector<1x239xf32>
    %129 = vector.broadcast %128 : vector<1x239xf32> to vector<8x239xf32>
    %130 = arith.mulf %129, %124 : vector<8x239xf32>
    %131 = arith.addf %126, %130 : vector<8x239xf32>
    %c0_112 = arith.constant 0 : index
    %c0_113 = arith.constant 0 : index
    %c0_114 = arith.constant 0 : index
    %132 = vector.load %arg6[%c0_112, %c0_113, %c0_114] : memref<1x8x256xf32, #tpu.memory_space<vmem>>, vector<1x8x239xf32>
    %133 = vector.shape_cast %132 : vector<1x8x239xf32> to vector<8x239xf32>
    %134 = vector.shape_cast %131 : vector<8x239xf32> to vector<1x8x239xf32>
    tpu.vector_store %arg6[%c0_112, %c0_113, %c0_114], %134 {strides = array<i32>} : memref<1x8x256xf32, #tpu.memory_space<vmem>>, vector<1x8x239xf32>,
    return
  }
  func.func @transform_0(%arg0: i32) -> (i32, i32, i32) {
    %c0_i32 = arith.constant 0 : i32
    %c0_i32_0 = arith.constant 0 : i32
    %c0_i32_1 = arith.constant 0 : i32
    return %arg0, %c0_i32, %c0_i32_0 : i32, i32, i32
  }
  func.func @transform_1(%arg0: i32) -> (i32, i32, i32) {
    %c0_i32 = arith.constant 0 : i32
    %c0_i32_0 = arith.constant 0 : i32
    %c0_i32_1 = arith.constant 0 : i32
    %c0_i32_2 = arith.constant 0 : i32
    return %c0_i32, %c0_i32_0, %c0_i32_1 : i32, i32, i32
  }
  func.func @transform_2(%arg0: i32) -> (i32, i32, i32) {
    %c0_i32 = arith.constant 0 : i32
    %c0_i32_0 = arith.constant 0 : i32
    %c0_i32_1 = arith.constant 0 : i32
    %c0_i32_2 = arith.constant 0 : i32
    return %c0_i32, %c0_i32_0, %c0_i32_1 : i32, i32, i32
  }
  func.func @transform_3(%arg0: i32) -> (i32, i32) {
    %c0_i32 = arith.constant 0 : i32
    %c0_i32_0 = arith.constant 0 : i32
    %c0_i32_1 = arith.constant 0 : i32
    return %c0_i32, %c0_i32_0 : i32, i32
  }
  func.func @transform_4(%arg0: i32) -> (i32, i32, i32) {
    %c0_i32 = arith.constant 0 : i32
    %c0_i32_0 = arith.constant 0 : i32
    %c0_i32_1 = arith.constant 0 : i32
    return %arg0, %c0_i32, %c0_i32_0 : i32, i32, i32
  }
  func.func @transform_5(%arg0: i32) -> (i32, i32, i32) {
    %c0_i32 = arith.constant 0 : i32
    %c0_i32_0 = arith.constant 0 : i32
    %c0_i32_1 = arith.constant 0 : i32
    return %arg0, %c0_i32, %c0_i32_0 : i32, i32, i32
  }
}

</mosaic_0001>

<llo_original>
// kernel: dual_branch_forward.3
$region0: #{dual_branch_forward.3}
  #allocation0 [shape = 'u32[]', space=smem, size = 0x4, offset = 0x4, fixed_abs, tag = 'smem constant byte address 0x4 - core index']
  #allocation1 [shape = 'u32[144,128]{1,0:T(1,128)}', space=vmem, size = 0x12000, scoped, tag = 'internal scratch']
  %s0 = inlined_call_operand.vmem [shape: bf16[2,256,24], index: 0, kind: input, shape index: {}]
  %s1 = inlined_call_operand.vmem [shape: bf16[9,8,24], index: 1, kind: input, shape index: {}]
  %s2 = inlined_call_operand.vmem [shape: f32[3,1,256], index: 2, kind: input, shape index: {}]
  %s3 = inlined_call_operand.vmem [shape: f32[8,256], index: 3, kind: input, shape index: {}]
  %s4 = inlined_call_operand.vmem [shape: bf16[2,8,256], index: 4, kind: input, shape index: {}]
  %s5 = inlined_call_operand.vmem [shape: f32[2,8,256], index: 5, kind: output, shape index: {}]
  %s6 = sld [smem:[#allocation0]]
  $region53: #{dual_branch_forward.3} parent=0
    _
  %s8 = ssub.s32 1, %s6
  %s9 = scalar_select 0, %s8, %s6
  loop: start=0, step=1, limit=4
  $region2: #{dual_branch_forward.3} parent=0 // loop_pre_header
    _
  $region3: #{dual_branch_forward.3} parent=0 // loop_header
    %s11 = sphi 0, %s15
    %p12 = scmp.ge.s32.totalorder %s11, 4
    %s21 = sphi 0, %s23
    %s24 = sphi 0, %s21
    %s25 = sphi 0, %s24
    %s41 = sphi 0, %s25
    %s45 = sphi 0, %s45
    %s47 = sphi 0, %s45
    %s48 = sphi 0, %s47
    %s62 = sphi 0, %s48
    %s66 = sphi 0, %s66
    %s68 = sphi 0, %s66
    %s69 = sphi 0, %s68
    %s83 = sphi 0, %s69
    %s87 = sphi 0, %s87
    %s89 = sphi 0, %s87
    %s90 = sphi 0, %s89
    %s104 = sphi 0, %s90
    %s110 = sphi 0, %s112
    %s113 = sphi 0, %s110
    %s114 = sphi 0, %s113
    %s130 = sphi 0, %s114
    %s136 = sphi 0, %s138
    %s139 = sphi 0, %s136
    %s140 = sphi 0, %s139
    %s156 = sphi 0, %s140
  $region4: #{dual_branch_forward.3} parent=0 // loop_header_branch
    %14 = sbr.rel (%p12) target = $region8
  $region5: #{dual_branch_forward.3} parent=0 // loop_body
    %s16 = ssub.s32 %s11, 1
    %s17 = ssub.s32 %s11, 2
    %s18 = sadd.s32 %s11, 1
    %s19 = ssub.s32 %s11, %s18
    %p20 = scmp.eq.s32.totalorder %s19, 0
    %s22 = sadd.s32 %s21, 1
    %s23 = scalar_select %p20, %s21, %s22
    %p26 = pneg %p20
    %p27 = scmp.eq.s32.totalorder %s11, 1
    %p28 = por %p26, %p27
    %p29 = scmp.ne.s32.totalorder %s21, %s24
    %p30 = scmp.eq.s32.totalorder %s11, 0
    %p31 = por %p29, %p30
    %p32 = scmp.ne.s32.totalorder %s21, %s24
    %p33 = scmp.eq.s32.totalorder %s16, 1
    %p34 = por %p32, %p33
    %p35 = scmp.ne.s32.totalorder %s24, %s25
    %p36 = scmp.eq.s32.totalorder %s16, 0
    %p37 = por %p35, %p36
    %p38 = scmp.ne.s32.totalorder %s24, %s25
    %p39 = scmp.eq.s32.totalorder %s17, 1
    %p40 = por %p38, %p39
    %p42 = scmp.ne.s32.totalorder %s25, %s41
    %p43 = scmp.eq.s32.totalorder %s17, 0
    %p44 = por %p42, %p43
    %s46 = sadd.s32 %s45, 1
    %p49 = scmp.eq.s32.totalorder %s11, 1
    %p50 = scmp.ne.s32.totalorder %s45, %s47
    %p51 = scmp.eq.s32.totalorder %s11, 0
    %p52 = por %p50, %p51
    %p53 = scmp.ne.s32.totalorder %s45, %s47
    %p54 = scmp.eq.s32.totalorder %s16, 1
    %p55 = por %p53, %p54
    %p56 = scmp.ne.s32.totalorder %s47, %s48
    %p57 = scmp.eq.s32.totalorder %s16, 0
    %p58 = por %p56, %p57
    %p59 = scmp.ne.s32.totalorder %s47, %s48
    %p60 = scmp.eq.s32.totalorder %s17, 1
    %p61 = por %p59, %p60
    %p63 = scmp.ne.s32.totalorder %s48, %s62
    %p64 = scmp.eq.s32.totalorder %s17, 0
    %p65 = por %p63, %p64
    %s67 = sadd.s32 %s66, 1
    %p70 = scmp.eq.s32.totalorder %s11, 1
    %p71 = scmp.ne.s32.totalorder %s66, %s68
    %p72 = scmp.eq.s32.totalorder %s11, 0
    %p73 = por %p71, %p72
    %p74 = scmp.ne.s32.totalorder %s66, %s68
    %p75 = scmp.eq.s32.totalorder %s16, 1
    %p76 = por %p74, %p75
    %p77 = scmp.ne.s32.totalorder %s68, %s69
    %p78 = scmp.eq.s32.totalorder %s16, 0
    %p79 = por %p77, %p78
    %p80 = scmp.ne.s32.totalorder %s68, %s69
    %p81 = scmp.eq.s32.totalorder %s17, 1
    %p82 = por %p80, %p81
    %p84 = scmp.ne.s32.totalorder %s69, %s83
    %p85 = scmp.eq.s32.totalorder %s17, 0
    %p86 = por %p84, %p85
    %s88 = sadd.s32 %s87, 1
    %p91 = scmp.eq.s32.totalorder %s11, 1
    %p92 = scmp.ne.s32.totalorder %s87, %s89
    %p93 = scmp.eq.s32.totalorder %s11, 0
    %p94 = por %p92, %p93
    %p95 = scmp.ne.s32.totalorder %s87, %s89
    %p96 = scmp.eq.s32.totalorder %s16, 1
    %p97 = por %p95, %p96
    %p98 = scmp.ne.s32.totalorder %s89, %s90
    %p99 = scmp.eq.s32.totalorder %s16, 0
    %p100 = por %p98, %p99
    %p101 = scmp.ne.s32.totalorder %s89, %s90
    %p102 = scmp.eq.s32.totalorder %s17, 1
    %p103 = por %p101, %p102
    %p105 = scmp.ne.s32.totalorder %s90, %s104
    %p106 = scmp.eq.s32.totalorder %s17, 0
    %p107 = por %p105, %p106
    %s108 = ssub.s32 %s11, %s18
    %p109 = scmp.eq.s32.totalorder %s108, 0
    %s111 = sadd.s32 %s110, 1
    %s112 = scalar_select %p109, %s110, %s111
    %p115 = pneg %p109
    %p116 = scmp.eq.s32.totalorder %s11, 1
    %p117 = por %p115, %p116
    %p118 = scmp.ne.s32.totalorder %s110, %s113
    %p119 = scmp.eq.s32.totalorder %s11, 0
    %p120 = por %p118, %p119
    %p121 = scmp.ne.s32.totalorder %s110, %s113
    %p122 = scmp.eq.s32.totalorder %s16, 1
    %p123 = por %p121, %p122
    %p124 = scmp.ne.s32.totalorder %s113, %s114
    %p125 = scmp.eq.s32.totalorder %s16, 0
    %p126 = por %p124, %p125
    %p127 = scmp.ne.s32.totalorder %s113, %s114
    %p128 = scmp.eq.s32.totalorder %s17, 1
    %p129 = por %p127, %p128
    %p131 = scmp.ne.s32.totalorder %s114, %s130
    %p132 = scmp.eq.s32.totalorder %s17, 0
    %p133 = por %p131, %p132
    %s134 = ssub.s32 %s11, %s18
    %p135 = scmp.eq.s32.totalorder %s134, 0
    %s137 = sadd.s32 %s136, 1
    %s138 = scalar_select %p135, %s136, %s137
    %p141 = pneg %p135
    %p142 = scmp.eq.s32.totalorder %s11, 1
    %p143 = por %p141, %p142
    %p144 = scmp.ne.s32.totalorder %s136, %s139
    %p145 = scmp.eq.s32.totalorder %s11, 0
    %p146 = por %p144, %p145
    %p147 = scmp.ne.s32.totalorder %s136, %s139
    %p148 = scmp.eq.s32.totalorder %s16, 1
    %p149 = por %p147, %p148
    %p150 = scmp.ne.s32.totalorder %s139, %s140
    %p151 = scmp.eq.s32.totalorder %s16, 0
    %p152 = por %p150, %p151
    %p153 = scmp.ne.s32.totalorder %s139, %s140
    %p154 = scmp.eq.s32.totalorder %s17, 1
    %p155 = por %p153, %p154
    %p157 = scmp.ne.s32.totalorder %s140, %s156
    %p158 = scmp.eq.s32.totalorder %s17, 0
    %p159 = por %p157, %p158
    %p160 = scmp.le.s32.totalorder 1, %s11
    %p161 = scmp.lt.s32.totalorder %s11, 3
    %p162 = pnand %p160, %p161
    %p163 = pneg %p162
    // Predicated region
    $region9: #{dual_branch_forward.3} parent=5 // pred_check
      _
    $region10: #{dual_branch_forward.3} parent=5 // pred_check_branch
      %165 = sbr.rel (%p162) target = $region12
    $region11: #{dual_branch_forward.3} parent=5 // pred_region
      %s166 = ssub.s32 %s11, 1
      // Predicated region
      $region13: #{dual_branch_forward.3} parent=11 // pred_check
        %p167 = pneg %p58
      $region14: #{dual_branch_forward.3} parent=11 // pred_check_branch
        %169 = sbr.rel (%p167) target = $region16
      $region15: #{dual_branch_forward.3} parent=11 // pred_region
        _
      $region16: #{dual_branch_forward.3} parent=11 // pred_fallthru
        _
      // Predicated region
      $region17: #{dual_branch_forward.3} parent=11 // pred_check
        %p170 = pneg %p79
      $region18: #{dual_branch_forward.3} parent=11 // pred_check_branch
        %172 = sbr.rel (%p170) target = $region20
      $region19: #{dual_branch_forward.3} parent=11 // pred_region
        _
      $region20: #{dual_branch_forward.3} parent=11 // pred_fallthru
        _
      // Predicated region
      $region21: #{dual_branch_forward.3} parent=11 // pred_check
        %p173 = pneg %p100
      $region22: #{dual_branch_forward.3} parent=11 // pred_check_branch
        %175 = sbr.rel (%p173) target = $region24
      $region23: #{dual_branch_forward.3} parent=11 // pred_region
        _
      $region24: #{dual_branch_forward.3} parent=11 // pred_fallthru
        _
    $region12: #{dual_branch_forward.3} parent=5 // pred_fallthru
      _
    %p176 = scmp.lt.s32.totalorder %s11, 2
    // Predicated region
    $region25: #{dual_branch_forward.3} parent=5 // pred_check
      %p177 = pneg %p176
    $region26: #{dual_branch_forward.3} parent=5 // pred_check_branch
      %179 = sbr.rel (%p177) target = $region28
    $region27: #{dual_branch_forward.3} parent=5 // pred_region
      // Predicated region
      $region29: #{dual_branch_forward.3} parent=27 // pred_check
        %p180 = pneg %p31
      $region30: #{dual_branch_forward.3} parent=27 // pred_check_branch
        %182 = sbr.rel (%p180) target = $region32
      $region31: #{dual_branch_forward.3} parent=27 // pred_region
        %p183 = scmp.lt.s32.totalorder %s11, 1
        %s184 = scalar_select %p183, %s11, 1
        %s185 = smul.addr %s184, 32
        %s186 = smul.addr %s185, 4
        %s187 = scalar_lea.vmem %s0, %s186
      $region32: #{dual_branch_forward.3} parent=27 // pred_fallthru
        _
      // Predicated region
      $region33: #{dual_branch_forward.3} parent=27 // pred_check
        %p188 = pneg %p120
      $region34: #{dual_branch_forward.3} parent=27 // pred_check_branch
        %190 = sbr.rel (%p188) target = $region36
      $region35: #{dual_branch_forward.3} parent=27 // pred_region
        %p191 = scmp.lt.s32.totalorder %s11, 1
        %s192 = scalar_select %p191, %s11, 1
        %s193 = smul.addr %s192, 2
        %s194 = smul.addr %s193, 4
        %s195 = scalar_lea.vmem %s4, %s194
      $region36: #{dual_branch_forward.3} parent=27 // pred_fallthru
        _
    $region28: #{dual_branch_forward.3} parent=5 // pred_fallthru
      _
    %p196 = scmp.le.s32.totalorder 1, %s11
    %p197 = scmp.lt.s32.totalorder %s11, 3
    %p198 = pnand %p196, %p197
    %p199 = pneg %p198
    // Predicated region
    $region37: #{dual_branch_forward.3} parent=5 // pred_check
      _
    $region38: #{dual_branch_forward.3} parent=5 // pred_check_branch
      %201 = sbr.rel (%p198) target = $region40
    $region39: #{dual_branch_forward.3} parent=5 // pred_region
      %s202 = ssub.s32 %s11, 1
      %p203 = scmp.lt.s32.totalorder %s16, 1
      %s204 = scalar_select %p203, %s16, 1
      %s205 = smul.addr %s204, 32
      %s206 = smul.addr %s205, 4
      %s207 = scalar_lea.vmem %s0, %s206
      %p208 = pneg %p37
      %p209 = pneg %p34
      %p210 = pneg %p58
      %p211 = pneg %p55
      %p212 = pneg %p79
      %p213 = pneg %p76
      %p214 = pneg %p100
      %p215 = pneg %p97
      %p216 = scmp.lt.s32.totalorder %s16, 1
      %s217 = scalar_select %p216, %s16, 1
      %s218 = smul.addr %s217, 2
      %s219 = smul.addr %s218, 4
      %s220 = scalar_lea.vmem %s4, %s219
      %p221 = pneg %p126
      %p222 = pneg %p123
      %p223 = pneg %p152
      %p224 = pneg %p149
      %p225 = scmp.lt.s32.totalorder %s16, 1
      %s226 = scalar_select %p225, %s16, 1
      %s227 = smul.addr %s226, 2
      %s228 = smul.addr %s227, 8
      %s229 = scalar_lea.vmem %s5, %s228
      %p230 = scmp.lt.s32.totalorder %s16, 1
      %s231 = scalar_select %p230, %s16, 1
      %s232 = smul.addr %s231, 32
      %s233 = smul.addr %s232, 4
      %s234 = scalar_lea.vmem %s0, %s233
      %p235 = scmp.lt.s32.totalorder %s16, 1
      %s236 = scalar_select %p235, %s16, 1
      %s237 = smul.addr %s236, 2
      %s238 = smul.addr %s237, 4
      %s239 = scalar_lea.vmem %s4, %s238
      %p240 = scmp.lt.s32.totalorder %s16, 1
      %s241 = scalar_select %p240, %s16, 1
      %s242 = smul.addr %s241, 2
      %s243 = smul.addr %s242, 8
      %s244 = scalar_lea.vmem %s5, %s243
      %v246 = vld [vmem:[%s234] sm:$0xf]
      %v247 = vld [vmem:[%s234 + $0x4] sm:$0xf]
      %v248 = vld [vmem:[%s234 + $0x8] sm:$0xf]
      %v249 = vld [vmem:[%s234 + $0xc] sm:$0xf]
      %v250 = vld [vmem:[%s234 + $0x10] sm:$0xf]
      %v251 = vld [vmem:[%s234 + $0x14] sm:$0xf]
      %v252 = vld [vmem:[%s234 + $0x18] sm:$0xf]
      %v253 = vld [vmem:[%s234 + $0x1c] sm:$0xf]
      %v254 = vld [vmem:[%s234 + $0x20] sm:$0xf]
      %v255 = vld [vmem:[%s234 + $0x24] sm:$0xf]
      %v256 = vld [vmem:[%s234 + $0x28] sm:$0xf]
      %v257 = vld [vmem:[%s234 + $0x2c] sm:$0xf]
      %v258 = vld [vmem:[%s234 + $0x30] sm:$0xf]
      %v259 = vld [vmem:[%s234 + $0x34] sm:$0xf]
      %v260 = vld [vmem:[%s234 + $0x38] sm:$0xf]
      %v261 = vld [vmem:[%s234 + $0x3c] sm:$0xf]
      %v262 = vld [vmem:[%s234 + $0x40] sm:$0xf]
      %v263 = vld [vmem:[%s234 + $0x44] sm:$0xf]
      %v264 = vld [vmem:[%s234 + $0x48] sm:$0xf]
      %v265 = vld [vmem:[%s234 + $0x4c] sm:$0xf]
      %v266 = vld [vmem:[%s234 + $0x50] sm:$0xf]
      %v267 = vld [vmem:[%s234 + $0x54] sm:$0xf]
      %v268 = vld [vmem:[%s234 + $0x58] sm:$0xf]
      %v269 = vld [vmem:[%s234 + $0x5c] sm:$0xf]
      %v270 = vld [vmem:[%s234 + $0x60] sm:$0xf]
      %v271 = vld [vmem:[%s234 + $0x64] sm:$0xf]
      %v272 = vld [vmem:[%s234 + $0x68] sm:$0xf]
      %v273 = vld [vmem:[%s234 + $0x6c] sm:$0xf]
      %v274 = vld [vmem:[%s234 + $0x70] sm:$0xf]
      %v275 = vld [vmem:[%s234 + $0x74] sm:$0xf]
      %v276 = vld [vmem:[%s234 + $0x78] sm:$0xf]
      %v277 = vld [vmem:[%s234 + $0x7c] sm:$0xf]
      %v278 = vld [vmem:[%s3] sm:$0xff]
      %v279 = vld [vmem:[%s3 + $0x8] sm:$0xff]
      %v280 = vld [vmem:[%s239] sm:$0xff]
      %v281 = vunpack.c.l.bf16 %v280
      %v282 = vunpack.c.h.bf16 %v280
      %v283 = vadd.f32 %v278, %v281
      %v284 = vadd.f32 %v279, %v282
      %285 = vst [vmem:[%s244] sm:$0xff] %v283
      %286 = vst [vmem:[%s244 + $0x8] sm:$0xff] %v284
      %v287 = vld [vmem:[%s1] sm:$0xf]
      %v318 = vunpack.c.l.b16 %v246
      %v319 = vunpack.c.l.b16 %v247
      %v320 = vunpack.c.l.b16 %v248
      %v321 = vunpack.c.l.b16 %v249
      %v322 = vunpack.c.l.b16 %v250
      %v323 = vunpack.c.l.b16 %v251
      %v324 = vunpack.c.l.b16 %v252
      %v325 = vunpack.c.l.b16 %v253
      %v326 = vunpack.c.l.b16 %v254
      %v327 = vunpack.c.l.b16 %v255
      %v328 = vunpack.c.l.b16 %v256
      %v329 = vunpack.c.l.b16 %v257
      %v330 = vunpack.c.l.b16 %v258
      %v331 = vunpack.c.l.b16 %v259
      %v332 = vunpack.c.l.b16 %v260
      %v333 = vunpack.c.l.b16 %v261
      %v334 = vunpack.c.l.b16 %v262
      %v335 = vunpack.c.l.b16 %v263
      %v336 = vunpack.c.l.b16 %v264
      %v337 = vunpack.c.l.b16 %v265
      %v338 = vunpack.c.l.b16 %v266
      %v339 = vunpack.c.l.b16 %v267
      %v340 = vunpack.c.l.b16 %v268
      %v341 = vunpack.c.l.b16 %v269
      %v342 = vunpack.c.l.b16 %v270
      %v343 = vunpack.c.l.b16 %v271
      %v344 = vunpack.c.l.b16 %v272
      %v345 = vunpack.c.l.b16 %v273
      %v346 = vunpack.c.l.b16 %v274
      %v347 = vunpack.c.l.b16 %v275
      %v348 = vpack.c.b16 %v319, %v318
      %v349 = vpack.c.b16 %v321, %v320
      %v350 = vpack.c.b16 %v323, %v322
      %v351 = vpack.c.b16 %v325, %v324
      %v352 = vpack.c.b16 %v327, %v326
      %v353 = vpack.c.b16 %v329, %v328
      %v354 = vpack.c.b16 %v331, %v330
      %v355 = vpack.c.b16 %v333, %v332
      %v356 = vpack.c.b16 %v335, %v334
      %v357 = vpack.c.b16 %v337, %v336
      %v358 = vpack.c.b16 %v339, %v338
      %v359 = vpack.c.b16 %v341, %v340
      %v360 = vpack.c.b16 %v343, %v342
      %v361 = vpack.c.b16 %v345, %v344
      %v362 = vpack.c.b16 %v347, %v346
      %vm363 = vcmask 195584
      %v365 = vsel %vm363, %v287, 0
      %v368 = vsel %vm363, %v348, 0
      %v371 = vsel %vm363, %v349, 0
      %v374 = vsel %vm363, %v350, 0
      %v377 = vsel %vm363, %v351, 0
      %v380 = vsel %vm363, %v352, 0
      %v383 = vsel %vm363, %v353, 0
      %v386 = vsel %vm363, %v354, 0
      %v389 = vsel %vm363, %v355, 0
      %v392 = vsel %vm363, %v356, 0
      %v395 = vsel %vm363, %v357, 0
      %v398 = vsel %vm363, %v358, 0
      %v401 = vsel %vm363, %v359, 0
      %v404 = vsel %vm363, %v360, 0
      %v407 = vsel %vm363, %v361, 0
      %v410 = vsel %vm363, %v362, 0
      %412 = vmatprep.subr.bf16.mxu0 0
      %413 = vmatpush1.bf16.xpose.msra.mxu0 %v389
      %414 = vmatprep.subr.bf16.mxu0 0
      %415 = vmatpush1.bf16.xpose.msra.mxu0 %v386
      %416 = vmatprep.subr.bf16.mxu0 0
      %417 = vmatpush1.bf16.xpose.msra.mxu0 %v383
      %418 = vmatprep.subr.bf16.mxu0 0
      %419 = vmatpush1.bf16.xpose.msra.mxu0 %v380
      %420 = vmatprep.subr.bf16.mxu0 0
      %421 = vmatpush1.bf16.xpose.msra.mxu0 %v377
      %422 = vmatprep.subr.bf16.mxu0 0
      %423 = vmatpush1.bf16.xpose.msra.mxu0 %v374
      %424 = vmatprep.subr.bf16.mxu0 0
      %425 = vmatpush1.bf16.xpose.msra.mxu0 %v371
      %426 = vmatprep.subr.bf16.mxu0 0
      %427 = vmatpush1.bf16.xpose.msra.mxu0 %v368
      %428 = vmatprep.subr.bf16.mxu0 0
      %429 = vmatpush2.bf16.xpose.msra.mxu0 0
      %430 = vmatprep.subr.bf16.mxu0 0
      %431 = vmatpush2.bf16.xpose.msra.mxu0 %v410
      %432 = vmatprep.subr.bf16.mxu0 0
      %433 = vmatpush2.bf16.xpose.msra.mxu0 %v407
      %434 = vmatprep.subr.bf16.mxu0 0
      %435 = vmatpush2.bf16.xpose.msra.mxu0 %v404
      %436 = vmatprep.subr.bf16.mxu0 0
      %437 = vmatpush2.bf16.xpose.msra.mxu0 %v401
      %438 = vmatprep.subr.bf16.mxu0 0
      %439 = vmatpush2.bf16.xpose.msra.mxu0 %v398
      %440 = vmatprep.subr.bf16.mxu0 0
      %441 = vmatpush2.bf16.xpose.msra.mxu0 %v395
      %442 = vmatprep.subr.bf16.mxu0 0
      %443 = vmatpush2.bf16.xpose.msra.mxu0 %v392
      %444 = vmatprep.mubr.bf16.mxu0 0
      %445 = vmatmul.mubr.bf16.gmra.mxu0 %v365
      %v446 = vpop.f32.mrf.mxu0
      %v447 = vadd.f32 0.0, %v446
      %v448 = vpop.f32.mrf.mxu0
      %v449 = vadd.f32 0.0, %v448
      %v450 = vpop.f32.mrf.mxu0
      %v451 = vpop.f32.mrf.mxu0
      %452 = vdwg.mxu0
      %v453 = vld [vmem:[%s244] sm:$0xff]
      %v454 = vld [vmem:[%s244 + $0x8] sm:$0xff]
      %v455 = vld [vmem:[%s2] sm:$0x3]
      %v457 = vlaneseq
      %v458 = vshrl.u32 %v457, 7
      %v459 = vsub.s32 0, %v458
      %v460 = vrot.slane %v455, %v459
      %v461 = vlaneseq
      %v462 = vshrl.u32 %v461, 7
      %v463 = vsub.s32 1, %v462
      %v464 = vrot.slane %v455, %v463
      %469 = vrot.lane.b32.xlu0 %v447, 17
      %v470 = vpop.permute.xlu0 %469
      %471 = vrot.lane.b32.xlu0 %v449, 17
      %v472 = vpop.permute.xlu0 %471
      %vm473 = vcmask 138240
      %v474 = vsel %vm473, %v470, %v472
      %v477 = vmul.f32 %v460, %v470
      %v478 = vmul.f32 %v464, %v474
      %v479 = vadd.f32 %v453, %v477
      %v480 = vadd.f32 %v454, %v478
      %vm481 = vcmask 1047688
      %482 = vst.msk [vmem:[%s244] sm:$0xff] %vm481, %v479
      %483 = vst [vmem:[%s244 + $0x8] sm:$0xff] %v480
      %s484 = scalar_lea.vmem %s1, 4
      %v485 = vld [vmem:[%s484] sm:$0xf]
      %v487 = vsel %vm363, %v485, 0
      %489 = vmatprep.subr.bf16.mxu0 0
      %490 = vmatpush1.bf16.xpose.msra.mxu0 %v389
      %491 = vmatprep.subr.bf16.mxu0 0
      %492 = vmatpush1.bf16.xpose.msra.mxu0 %v386
      %493 = vmatprep.subr.bf16.mxu0 0
      %494 = vmatpush1.bf16.xpose.msra.mxu0 %v383
      %495 = vmatprep.subr.bf16.mxu0 0
      %496 = vmatpush1.bf16.xpose.msra.mxu0 %v380
      %497 = vmatprep.subr.bf16.mxu0 0
      %498 = vmatpush1.bf16.xpose.msra.mxu0 %v377
      %499 = vmatprep.subr.bf16.mxu0 0
      %500 = vmatpush1.bf16.xpose.msra.mxu0 %v374
      %501 = vmatprep.subr.bf16.mxu0 0
      %502 = vmatpush1.bf16.xpose.msra.mxu0 %v371
      %503 = vmatprep.subr.bf16.mxu0 0
      %504 = vmatpush1.bf16.xpose.msra.mxu0 %v368
      %505 = vmatprep.subr.bf16.mxu0 0
      %506 = vmatpush2.bf16.xpose.msra.mxu0 0
      %507 = vmatprep.subr.bf16.mxu0 0
      %508 = vmatpush2.bf16.xpose.msra.mxu0 %v410
      %509 = vmatprep.subr.bf16.mxu0 0
      %510 = vmatpush2.bf16.xpose.msra.mxu0 %v407
      %511 = vmatprep.subr.bf16.mxu0 0
      %512 = vmatpush2.bf16.xpose.msra.mxu0 %v404
      %513 = vmatprep.subr.bf16.mxu0 0
      %514 = vmatpush2.bf16.xpose.msra.mxu0 %v401
      %515 = vmatprep.subr.bf16.mxu0 0
      %516 = vmatpush2.bf16.xpose.msra.mxu0 %v398
      %517 = vmatprep.subr.bf16.mxu0 0
      %518 = vmatpush2.bf16.xpose.msra.mxu0 %v395
      %519 = vmatprep.subr.bf16.mxu0 0
      %520 = vmatpush2.bf16.xpose.msra.mxu0 %v392
      %521 = vmatprep.mubr.bf16.mxu0 0
      %522 = vmatmul.mubr.bf16.gmra.mxu0 %v487
      %v523 = vpop.f32.mrf.mxu0
      %v524 = vadd.f32 0.0, %v523
      %v525 = vpop.f32.mrf.mxu0
      %v526 = vadd.f32 0.0, %v525
      %v527 = vpop.f32.mrf.mxu0
      %v528 = vpop.f32.mrf.mxu0
      %529 = vdwg.mxu0
      %v530 = vld [vmem:[%s244] sm:$0xff]
      %v531 = vld [vmem:[%s244 + $0x8] sm:$0xff]
      %s532 = scalar_lea.vmem %s2, 2
      %v533 = vld [vmem:[%s532] sm:$0x3]
      %v535 = vlaneseq
      %v536 = vshrl.u32 %v535, 7
      %v537 = vsub.s32 0, %v536
      %v538 = vrot.slane %v533, %v537
      %v539 = vlaneseq
      %v540 = vshrl.u32 %v539, 7
      %v541 = vsub.s32 1, %v540
      %v542 = vrot.slane %v533, %v541
      %547 = vrot.lane.b32.xlu0 %v524, 16
      %v548 = vpop.permute.xlu0 %547
      %549 = vrot.lane.b32.xlu0 %v526, 16
      %v550 = vpop.permute.xlu0 %549
      %vm551 = vcmask 130048
      %v552 = vsel %vm551, %v548, %v550
      %v555 = vmul.f32 %v538, %v548
      %v556 = vmul.f32 %v542, %v552
      %v557 = vadd.f32 %v530, %v555
      %v558 = vadd.f32 %v531, %v556
      %vm559 = vcmask 1047680
      %560 = vst.msk [vmem:[%s244] sm:$0xff] %vm559, %v557
      %561 = vst [vmem:[%s244 + $0x8] sm:$0xff] %v558
      %s562 = scalar_lea.vmem %s1, 8
      %v563 = vld [vmem:[%s562] sm:$0xf]
      %v565 = vunpack.c.l.b16 %v276
      %v566 = vpack.c.b16 %v565, %v565
      %v568 = vsel %vm363, %v563, 0
      %v571 = vsel %vm363, %v566, 0
      %573 = vmatprep.subr.bf16.mxu0 0
      %574 = vmatpush1.bf16.xpose.msra.mxu0 %v389
      %575 = vmatprep.subr.bf16.mxu0 0
      %576 = vmatpush1.bf16.xpose.msra.mxu0 %v386
      %577 = vmatprep.subr.bf16.mxu0 0
      %578 = vmatpush1.bf16.xpose.msra.mxu0 %v383
      %579 = vmatprep.subr.bf16.mxu0 0
      %580 = vmatpush1.bf16.xpose.msra.mxu0 %v380
      %581 = vmatprep.subr.bf16.mxu0 0
      %582 = vmatpush1.bf16.xpose.msra.mxu0 %v377
      %583 = vmatprep.subr.bf16.mxu0 0
      %584 = vmatpush1.bf16.xpose.msra.mxu0 %v374
      %585 = vmatprep.subr.bf16.mxu0 0
      %586 = vmatpush1.bf16.xpose.msra.mxu0 %v371
      %587 = vmatprep.subr.bf16.mxu0 0
      %588 = vmatpush1.bf16.xpose.msra.mxu0 %v368
      %589 = vmatprep.subr.bf16.mxu0 0
      %590 = vmatpush2.bf16.xpose.msra.mxu0 %v571
      %591 = vmatprep.subr.bf16.mxu0 0
      %592 = vmatpush2.bf16.xpose.msra.mxu0 %v410
      %593 = vmatprep.subr.bf16.mxu0 0
      %594 = vmatpush2.bf16.xpose.msra.mxu0 %v407
      %595 = vmatprep.subr.bf16.mxu0 0
      %596 = vmatpush2.bf16.xpose.msra.mxu0 %v404
      %597 = vmatprep.subr.bf16.mxu0 0
      %598 = vmatpush2.bf16.xpose.msra.mxu0 %v401
      %599 = vmatprep.subr.bf16.mxu0 0
      %600 = vmatpush2.bf16.xpose.msra.mxu0 %v398
      %601 = vmatprep.subr.bf16.mxu0 0
      %602 = vmatpush2.bf16.xpose.msra.mxu0 %v395
      %603 = vmatprep.subr.bf16.mxu0 0
      %604 = vmatpush2.bf16.xpose.msra.mxu0 %v392
      %605 = vmatprep.mubr.bf16.mxu0 0
      %606 = vmatmul.mubr.bf16.gmra.mxu0 %v568
      %v607 = vpop.f32.mrf.mxu0
      %v608 = vadd.f32 0.0, %v607
      %v609 = vpop.f32.mrf.mxu0
      %v610 = vadd.f32 0.0, %v609
      %v611 = vpop.f32.mrf.mxu0
      %v612 = vpop.f32.mrf.mxu0
      %613 = vdwg.mxu0
      %v614 = vld [vmem:[%s244] sm:$0xff]
      %v615 = vld [vmem:[%s244 + $0x8] sm:$0xff]
      %s616 = scalar_lea.vmem %s2, 4
      %v617 = vld [vmem:[%s616] sm:$0x3]
      %v619 = vlaneseq
      %v620 = vshrl.u32 %v619, 7
      %v621 = vsub.s32 0, %v620
      %v622 = vrot.slane %v617, %v621
      %v623 = vlaneseq
      %v624 = vshrl.u32 %v623, 7
      %v625 = vsub.s32 1, %v624
      %v626 = vrot.slane %v617, %v625
      %631 = vrot.lane.b32.xlu0 %v608, 15
      %v632 = vpop.permute.xlu0 %631
      %633 = vrot.lane.b32.xlu0 %v610, 15
      %v634 = vpop.permute.xlu0 %633
      %vm635 = vcmask 121856
      %v636 = vsel %vm635, %v632, %v634
      %v639 = vmul.f32 %v622, %v632
      %v640 = vmul.f32 %v626, %v636
      %v641 = vadd.f32 %v614, %v639
      %v642 = vadd.f32 %v615, %v640
      %vm643 = vcmask 1047672
      %644 = vst.msk [vmem:[%s244] sm:$0xff] %vm643, %v641
      %645 = vst [vmem:[%s244 + $0x8] sm:$0xff] %v642
      %s646 = scalar_lea.vmem %s1, 12
      %v647 = vld [vmem:[%s646] sm:$0xf]
      %v649 = vunpack.c.l.b16 %v277
      %v650 = vpack.c.b16 %v649, %v565
      %v652 = vsel %vm363, %v647, 0
      %v655 = vsel %vm363, %v650, 0
      %657 = vmatprep.subr.bf16.mxu0 0
      %658 = vmatpush1.bf16.xpose.msra.mxu0 %v389
      %659 = vmatprep.subr.bf16.mxu0 0
      %660 = vmatpush1.bf16.xpose.msra.mxu0 %v386
      %661 = vmatprep.subr.bf16.mxu0 0
      %662 = vmatpush1.bf16.xpose.msra.mxu0 %v383
      %663 = vmatprep.subr.bf16.mxu0 0
      %664 = vmatpush1.bf16.xpose.msra.mxu0 %v380
      %665 = vmatprep.subr.bf16.mxu0 0
      %666 = vmatpush1.bf16.xpose.msra.mxu0 %v377
      %667 = vmatprep.subr.bf16.mxu0 0
      %668 = vmatpush1.bf16.xpose.msra.mxu0 %v374
      %669 = vmatprep.subr.bf16.mxu0 0
      %670 = vmatpush1.bf16.xpose.msra.mxu0 %v371
      %671 = vmatprep.subr.bf16.mxu0 0
      %672 = vmatpush1.bf16.xpose.msra.mxu0 %v368
      %673 = vmatprep.subr.bf16.mxu0 0
      %674 = vmatpush2.bf16.xpose.msra.mxu0 %v655
      %675 = vmatprep.subr.bf16.mxu0 0
      %676 = vmatpush2.bf16.xpose.msra.mxu0 %v410
      %677 = vmatprep.subr.bf16.mxu0 0
      %678 = vmatpush2.bf16.xpose.msra.mxu0 %v407
      %679 = vmatprep.subr.bf16.mxu0 0
      %680 = vmatpush2.bf16.xpose.msra.mxu0 %v404
      %681 = vmatprep.subr.bf16.mxu0 0
      %682 = vmatpush2.bf16.xpose.msra.mxu0 %v401
      %683 = vmatprep.subr.bf16.mxu0 0
      %684 = vmatpush2.bf16.xpose.msra.mxu0 %v398
      %685 = vmatprep.subr.bf16.mxu0 0
      %686 = vmatpush2.bf16.xpose.msra.mxu0 %v395
      %687 = vmatprep.subr.bf16.mxu0 0
      %688 = vmatpush2.bf16.xpose.msra.mxu0 %v392
      %689 = vmatprep.mubr.bf16.mxu0 0
      %690 = vmatmul.mubr.bf16.gmra.mxu0 %v652
      %v691 = vpop.f32.mrf.mxu0
      %v692 = vadd.f32 0.0, %v691
      %v693 = vpop.f32.mrf.mxu0
      %v694 = vadd.f32 0.0, %v693
      %v695 = vpop.f32.mrf.mxu0
      %v696 = vpop.f32.mrf.mxu0
      %697 = vdwg.mxu0
      %v698 = vld [vmem:[%s244] sm:$0xff]
      %v699 = vld [vmem:[%s244 + $0x8] sm:$0xff]
      %v700 = vld [vmem:[%s2] sm:$0x3]
      %v702 = vlaneseq
      %v703 = vshrl.u32 %v702, 7
      %v704 = vsub.s32 0, %v703
      %v705 = vrot.slane %v700, %v704
      %v706 = vlaneseq
      %v707 = vshrl.u32 %v706, 7
      %v708 = vsub.s32 1, %v707
      %v709 = vrot.slane %v700, %v708
      %714 = vrot.lane.b32.xlu0 %v692, 1
      %v715 = vpop.permute.xlu0 %714
      %716 = vrot.lane.b32.xlu0 %v694, 1
      %v717 = vpop.permute.xlu0 %716
      %vm718 = vcmask 7168
      %v719 = vsel %vm718, %v715, %v717
      %v722 = vmul.f32 %v705, %v715
      %v723 = vmul.f32 %v709, %v719
      %v724 = vadd.f32 %v698, %v722
      %v725 = vadd.f32 %v699, %v723
      %vm726 = vcmask 1047560
      %727 = vst.msk [vmem:[%s244] sm:$0xff] %vm726, %v724
      %728 = vst [vmem:[%s244 + $0x8] sm:$0xff] %v725
      %s729 = scalar_lea.vmem %s1, 16
      %v730 = vld [vmem:[%s729] sm:$0xf]
      %v732 = vsel %vm363, %v730, 0
      %734 = vmatprep.subr.bf16.mxu0 0
      %735 = vmatpush1.bf16.xpose.msra.mxu0 %v389
      %736 = vmatprep.subr.bf16.mxu0 0
      %737 = vmatpush1.bf16.xpose.msra.mxu0 %v386
      %738 = vmatprep.subr.bf16.mxu0 0
      %739 = vmatpush1.bf16.xpose.msra.mxu0 %v383
      %740 = vmatprep.subr.bf16.mxu0 0
      %741 = vmatpush1.bf16.xpose.msra.mxu0 %v380
      %742 = vmatprep.subr.bf16.mxu0 0
      %743 = vmatpush1.bf16.xpose.msra.mxu0 %v377
      %744 = vmatprep.subr.bf16.mxu0 0
      %745 = vmatpush1.bf16.xpose.msra.mxu0 %v374
      %746 = vmatprep.subr.bf16.mxu0 0
      %747 = vmatpush1.bf16.xpose.msra.mxu0 %v371
      %748 = vmatprep.subr.bf16.mxu0 0
      %749 = vmatpush1.bf16.xpose.msra.mxu0 %v368
      %750 = vmatprep.subr.bf16.mxu0 0
      %751 = vmatpush2.bf16.xpose.msra.mxu0 %v655
      %752 = vmatprep.subr.bf16.mxu0 0
      %753 = vmatpush2.bf16.xpose.msra.mxu0 %v410
      %754 = vmatprep.subr.bf16.mxu0 0
      %755 = vmatpush2.bf16.xpose.msra.mxu0 %v407
      %756 = vmatprep.subr.bf16.mxu0 0
      %757 = vmatpush2.bf16.xpose.msra.mxu0 %v404
      %758 = vmatprep.subr.bf16.mxu0 0
      %759 = vmatpush2.bf16.xpose.msra.mxu0 %v401
      %760 = vmatprep.subr.bf16.mxu0 0
      %761 = vmatpush2.bf16.xpose.msra.mxu0 %v398
      %762 = vmatprep.subr.bf16.mxu0 0
      %763 = vmatpush2.bf16.xpose.msra.mxu0 %v395
      %764 = vmatprep.subr.bf16.mxu0 0
      %765 = vmatpush2.bf16.xpose.msra.mxu0 %v392
      %766 = vmatprep.mubr.bf16.mxu0 0
      %767 = vmatmul.mubr.bf16.gmra.mxu0 %v732
      %v768 = vpop.f32.mrf.mxu0
      %v769 = vadd.f32 0.0, %v768
      %v770 = vpop.f32.mrf.mxu0
      %v771 = vadd.f32 0.0, %v770
      %v772 = vpop.f32.mrf.mxu0
      %v773 = vpop.f32.mrf.mxu0
      %774 = vdwg.mxu0
      %v775 = vld [vmem:[%s244] sm:$0xff]
      %v776 = vld [vmem:[%s244 + $0x8] sm:$0xff]
      %v777 = vld [vmem:[%s532] sm:$0x3]
      %v779 = vlaneseq
      %v780 = vshrl.u32 %v779, 7
      %v781 = vsub.s32 0, %v780
      %v782 = vrot.slane %v777, %v781
      %v783 = vlaneseq
      %v784 = vshrl.u32 %v783, 7
      %v785 = vsub.s32 1, %v784
      %v786 = vrot.slane %v777, %v785
      %v789 = vmul.f32 %v782, %v769
      %v790 = vmul.f32 %v786, %v771
      %v791 = vadd.f32 %v775, %v789
      %v792 = vadd.f32 %v776, %v790
      %793 = vst [vmem:[%s244] sm:$0xff] %v791
      %794 = vst [vmem:[%s244 + $0x8] sm:$0xff] %v792
      %s795 = scalar_lea.vmem %s1, 20
      %v796 = vld [vmem:[%s795] sm:$0xf]
      %vm797 = vsmask.f32 7424
      %v798 = vshrl.u32 %v348, 16
      %v800 = vshll.u32 %v348, 16
      %v802 = vrot.slane %v800, 1
      %v803 = vor.u32 %v798, %v802
      %v804 = vshll.u32 %v349, 16
      %v806 = vrot.slane %v804, 1
      %v807 = vsel %vm797, %v803, %v806
      %v808 = vshrl.u32 %v349, 16
      %v810 = vor.u32 %v808, %v806
      %v811 = vshll.u32 %v350, 16
      %v813 = vrot.slane %v811, 1
      %v814 = vsel %vm797, %v810, %v813
      %v815 = vshrl.u32 %v350, 16
      %v817 = vor.u32 %v815, %v813
      %v818 = vshll.u32 %v351, 16
      %v820 = vrot.slane %v818, 1
      %v821 = vsel %vm797, %v817, %v820
      %v822 = vshrl.u32 %v351, 16
      %v824 = vor.u32 %v822, %v820
      %v825 = vshll.u32 %v352, 16
      %v827 = vrot.slane %v825, 1
      %v828 = vsel %vm797, %v824, %v827
      %v829 = vshrl.u32 %v352, 16
      %v831 = vor.u32 %v829, %v827
      %v832 = vshll.u32 %v353, 16
      %v834 = vrot.slane %v832, 1
      %v835 = vsel %vm797, %v831, %v834
      %v836 = vshrl.u32 %v353, 16
      %v838 = vor.u32 %v836, %v834
      %v839 = vshll.u32 %v354, 16
      %v841 = vrot.slane %v839, 1
      %v842 = vsel %vm797, %v838, %v841
      %v843 = vshrl.u32 %v354, 16
      %v845 = vor.u32 %v843, %v841
      %v846 = vshll.u32 %v355, 16
      %v848 = vrot.slane %v846, 1
      %v849 = vsel %vm797, %v845, %v848
      %v850 = vshrl.u32 %v355, 16
      %v852 = vor.u32 %v850, %v848
      %v853 = vshll.u32 %v356, 16
      %v855 = vrot.slane %v853, 1
      %v856 = vsel %vm797, %v852, %v855
      %v857 = vshrl.u32 %v356, 16
      %v859 = vor.u32 %v857, %v855
      %v860 = vshll.u32 %v357, 16
      %v862 = vrot.slane %v860, 1
      %v863 = vsel %vm797, %v859, %v862
      %v864 = vshrl.u32 %v357, 16
      %v866 = vor.u32 %v864, %v862
      %v867 = vshll.u32 %v358, 16
      %v869 = vrot.slane %v867, 1
      %v870 = vsel %vm797, %v866, %v869
      %v871 = vshrl.u32 %v358, 16
      %v873 = vor.u32 %v871, %v869
      %v874 = vshll.u32 %v359, 16
      %v876 = vrot.slane %v874, 1
      %v877 = vsel %vm797, %v873, %v876
      %v878 = vshrl.u32 %v359, 16
      %v880 = vor.u32 %v878, %v876
      %v881 = vshll.u32 %v360, 16
      %v883 = vrot.slane %v881, 1
      %v884 = vsel %vm797, %v880, %v883
      %v885 = vshrl.u32 %v360, 16
      %v887 = vor.u32 %v885, %v883
      %v888 = vshll.u32 %v361, 16
      %v890 = vrot.slane %v888, 1
      %v891 = vsel %vm797, %v887, %v890
      %v892 = vshrl.u32 %v361, 16
      %v894 = vor.u32 %v892, %v890
      %v895 = vshll.u32 %v362, 16
      %v897 = vrot.slane %v895, 1
      %v898 = vsel %vm797, %v894, %v897
      %v899 = vshrl.u32 %v362, 16
      %v901 = vor.u32 %v899, %v897
      %v902 = vshll.u32 %v650, 16
      %v904 = vrot.slane %v902, 1
      %v905 = vsel %vm797, %v901, %v904
      %v906 = vshrl.u32 %v650, 16
      %v908 = vor.u32 %v906, %v904
      %v910 = vsel %vm363, %v796, 0
      %v913 = vsel %vm363, %v807, 0
      %v916 = vsel %vm363, %v814, 0
      %v919 = vsel %vm363, %v821, 0
      %v922 = vsel %vm363, %v828, 0
      %v925 = vsel %vm363, %v835, 0
      %v928 = vsel %vm363, %v842, 0
      %v931 = vsel %vm363, %v849, 0
      %v934 = vsel %vm363, %v856, 0
      %v937 = vsel %vm363, %v863, 0
      %v940 = vsel %vm363, %v870, 0
      %v943 = vsel %vm363, %v877, 0
      %v946 = vsel %vm363, %v884, 0
      %v949 = vsel %vm363, %v891, 0
      %v952 = vsel %vm363, %v898, 0
      %v955 = vsel %vm363, %v905, 0
      %v958 = vsel %vm363, %v908, 0
      %960 = vmatprep.subr.bf16.mxu0 0
      %961 = vmatpush1.bf16.xpose.msra.mxu0 %v934
      %962 = vmatprep.subr.bf16.mxu0 0
      %963 = vmatpush1.bf16.xpose.msra.mxu0 %v931
      %964 = vmatprep.subr.bf16.mxu0 0
      %965 = vmatpush1.bf16.xpose.msra.mxu0 %v928
      %966 = vmatprep.subr.bf16.mxu0 0
      %967 = vmatpush1.bf16.xpose.msra.mxu0 %v925
      %968 = vmatprep.subr.bf16.mxu0 0
      %969 = vmatpush1.bf16.xpose.msra.mxu0 %v922
      %970 = vmatprep.subr.bf16.mxu0 0
      %971 = vmatpush1.bf16.xpose.msra.mxu0 %v919
      %972 = vmatprep.subr.bf16.mxu0 0
      %973 = vmatpush1.bf16.xpose.msra.mxu0 %v916
      %974 = vmatprep.subr.bf16.mxu0 0
      %975 = vmatpush1.bf16.xpose.msra.mxu0 %v913
      %976 = vmatprep.subr.bf16.mxu0 0
      %977 = vmatpush2.bf16.xpose.msra.mxu0 %v958
      %978 = vmatprep.subr.bf16.mxu0 0
      %979 = vmatpush2.bf16.xpose.msra.mxu0 %v955
      %980 = vmatprep.subr.bf16.mxu0 0
      %981 = vmatpush2.bf16.xpose.msra.mxu0 %v952
      %982 = vmatprep.subr.bf16.mxu0 0
      %983 = vmatpush2.bf16.xpose.msra.mxu0 %v949
      %984 = vmatprep.subr.bf16.mxu0 0
      %985 = vmatpush2.bf16.xpose.msra.mxu0 %v946
      %986 = vmatprep.subr.bf16.mxu0 0
      %987 = vmatpush2.bf16.xpose.msra.mxu0 %v943
      %988 = vmatprep.subr.bf16.mxu0 0
      %989 = vmatpush2.bf16.xpose.msra.mxu0 %v940
      %990 = vmatprep.subr.bf16.mxu0 0
      %991 = vmatpush2.bf16.xpose.msra.mxu0 %v937
      %992 = vmatprep.mubr.bf16.mxu0 0
      %993 = vmatmul.mubr.bf16.gmra.mxu0 %v910
      %v994 = vpop.f32.mrf.mxu0
      %v995 = vadd.f32 0.0, %v994
      %v996 = vpop.f32.mrf.mxu0
      %v997 = vadd.f32 0.0, %v996
      %v998 = vpop.f32.mrf.mxu0
      %v999 = vpop.f32.mrf.mxu0
      %1000 = vdwg.mxu0
      %v1001 = vld [vmem:[%s244] sm:$0xff]
      %v1002 = vld [vmem:[%s244 + $0x8] sm:$0xff]
      %v1003 = vld [vmem:[%s616] sm:$0x3]
      %v1005 = vlaneseq
      %v1006 = vshrl.u32 %v1005, 7
      %v1007 = vsub.s32 0, %v1006
      %v1008 = vrot.slane %v1003, %v1007
      %v1009 = vlaneseq
      %v1010 = vshrl.u32 %v1009, 7
      %v1011 = vsub.s32 1, %v1010
      %v1012 = vrot.slane %v1003, %v1011
      %v1015 = vmul.f32 %v1008, %v995
      %v1016 = vmul.f32 %v1012, %v997
      %v1017 = vadd.f32 %v1001, %v1015
      %v1018 = vadd.f32 %v1002, %v1016
      %1019 = vst [vmem:[%s244] sm:$0xff] %v1017
      %vm1020 = vcmask 1039360
      %1021 = vst.msk [vmem:[%s244 + $0x8] sm:$0xff] %vm1020, %v1018
      %s1022 = scalar_lea.vmem %s1, 24
      %v1023 = vld [vmem:[%s1022] sm:$0xf]
      %v1024 = vpack.c.b16 %v320, %v319
      %v1025 = vpack.c.b16 %v322, %v321
      %v1026 = vpack.c.b16 %v324, %v323
      %v1027 = vpack.c.b16 %v326, %v325
      %v1028 = vpack.c.b16 %v328, %v327
      %v1029 = vpack.c.b16 %v330, %v329
      %v1030 = vpack.c.b16 %v332, %v331
      %v1031 = vpack.c.b16 %v334, %v333
      %v1032 = vpack.c.b16 %v336, %v335
      %v1033 = vpack.c.b16 %v338, %v337
      %v1034 = vpack.c.b16 %v340, %v339
      %v1035 = vpack.c.b16 %v342, %v341
      %v1036 = vpack.c.b16 %v344, %v343
      %v1037 = vpack.c.b16 %v346, %v345
      %v1038 = vpack.c.b16 %v565, %v347
      %v1039 = vpack.c.b16 %v649, %v649
      %vm1040 = vsmask.f32 4352
      %v1042 = vshrl.u32 %v1024, 16
      %v1044 = vrot.slane %v1042, 3
      %v1045 = vshll.u32 %v1024, 16
      %v1047 = vrot.slane %v1045, 4
      %v1048 = vor.u32 %v1044, %v1047
      %v1050 = vshrl.u32 %v1025, 16
      %v1052 = vrot.slane %v1050, 3
      %v1053 = vshll.u32 %v1025, 16
      %v1055 = vrot.slane %v1053, 4
      %v1056 = vor.u32 %v1052, %v1055
      %v1057 = vsel %vm1040, %v1048, %v1056
      %v1059 = vshrl.u32 %v1026, 16
      %v1061 = vrot.slane %v1059, 3
      %v1062 = vshll.u32 %v1026, 16
      %v1064 = vrot.slane %v1062, 4
      %v1065 = vor.u32 %v1061, %v1064
      %v1066 = vsel %vm1040, %v1056, %v1065
      %v1068 = vshrl.u32 %v1027, 16
      %v1070 = vrot.slane %v1068, 3
      %v1071 = vshll.u32 %v1027, 16
      %v1073 = vrot.slane %v1071, 4
      %v1074 = vor.u32 %v1070, %v1073
      %v1075 = vsel %vm1040, %v1065, %v1074
      %v1077 = vshrl.u32 %v1028, 16
      %v1079 = vrot.slane %v1077, 3
      %v1080 = vshll.u32 %v1028, 16
      %v1082 = vrot.slane %v1080, 4
      %v1083 = vor.u32 %v1079, %v1082
      %v1084 = vsel %vm1040, %v1074, %v1083
      %v1086 = vshrl.u32 %v1029, 16
      %v1088 = vrot.slane %v1086, 3
      %v1089 = vshll.u32 %v1029, 16
      %v1091 = vrot.slane %v1089, 4
      %v1092 = vor.u32 %v1088, %v1091
      %v1093 = vsel %vm1040, %v1083, %v1092
      %v1095 = vshrl.u32 %v1030, 16
      %v1097 = vrot.slane %v1095, 3
      %v1098 = vshll.u32 %v1030, 16
      %v1100 = vrot.slane %v1098, 4
      %v1101 = vor.u32 %v1097, %v1100
      %v1102 = vsel %vm1040, %v1092, %v1101
      %v1104 = vshrl.u32 %v1031, 16
      %v1106 = vrot.slane %v1104, 3
      %v1107 = vshll.u32 %v1031, 16
      %v1109 = vrot.slane %v1107, 4
      %v1110 = vor.u32 %v1106, %v1109
      %v1111 = vsel %vm1040, %v1101, %v1110
      %v1113 = vshrl.u32 %v1032, 16
      %v1115 = vrot.slane %v1113, 3
      %v1116 = vshll.u32 %v1032, 16
      %v1118 = vrot.slane %v1116, 4
      %v1119 = vor.u32 %v1115, %v1118
      %v1120 = vsel %vm1040, %v1110, %v1119
      %v1122 = vshrl.u32 %v1033, 16
      %v1124 = vrot.slane %v1122, 3
      %v1125 = vshll.u32 %v1033, 16
      %v1127 = vrot.slane %v1125, 4
      %v1128 = vor.u32 %v1124, %v1127
      %v1129 = vsel %vm1040, %v1119, %v1128
      %v1131 = vshrl.u32 %v1034, 16
      %v1133 = vrot.slane %v1131, 3
      %v1134 = vshll.u32 %v1034, 16
      %v1136 = vrot.slane %v1134, 4
      %v1137 = vor.u32 %v1133, %v1136
      %v1138 = vsel %vm1040, %v1128, %v1137
      %v1140 = vshrl.u32 %v1035, 16
      %v1142 = vrot.slane %v1140, 3
      %v1143 = vshll.u32 %v1035, 16
      %v1145 = vrot.slane %v1143, 4
      %v1146 = vor.u32 %v1142, %v1145
      %v1147 = vsel %vm1040, %v1137, %v1146
      %v1149 = vshrl.u32 %v1036, 16
      %v1151 = vrot.slane %v1149, 3
      %v1152 = vshll.u32 %v1036, 16
      %v1154 = vrot.slane %v1152, 4
      %v1155 = vor.u32 %v1151, %v1154
      %v1156 = vsel %vm1040, %v1146, %v1155
      %v1158 = vshrl.u32 %v1037, 16
      %v1160 = vrot.slane %v1158, 3
      %v1161 = vshll.u32 %v1037, 16
      %v1163 = vrot.slane %v1161, 4
      %v1164 = vor.u32 %v1160, %v1163
      %v1165 = vsel %vm1040, %v1155, %v1164
      %v1167 = vshrl.u32 %v1038, 16
      %v1169 = vrot.slane %v1167, 3
      %v1170 = vshll.u32 %v1038, 16
      %v1172 = vrot.slane %v1170, 4
      %v1173 = vor.u32 %v1169, %v1172
      %v1174 = vsel %vm1040, %v1164, %v1173
      %v1176 = vshrl.u32 %v1039, 16
      %v1178 = vrot.slane %v1176, 3
      %v1179 = vshll.u32 %v1039, 16
      %v1181 = vrot.slane %v1179, 4
      %v1182 = vor.u32 %v1178, %v1181
      %v1183 = vsel %vm1040, %v1173, %v1182
      %v1185 = vsel %vm363, %v1023, 0
      %v1188 = vsel %vm363, %v1057, 0
      %v1191 = vsel %vm363, %v1066, 0
      %v1194 = vsel %vm363, %v1075, 0
      %v1197 = vsel %vm363, %v1084, 0
      %v1200 = vsel %vm363, %v1093, 0
      %v1203 = vsel %vm363, %v1102, 0
      %v1206 = vsel %vm363, %v1111, 0
      %v1209 = vsel %vm363, %v1120, 0
      %v1212 = vsel %vm363, %v1129, 0
      %v1215 = vsel %vm363, %v1138, 0
      %v1218 = vsel %vm363, %v1147, 0
      %v1221 = vsel %vm363, %v1156, 0
      %v1224 = vsel %vm363, %v1165, 0
      %v1227 = vsel %vm363, %v1174, 0
      %v1230 = vsel %vm363, %v1183, 0
      %v1233 = vsel %vm363, %v1178, 0
      %1235 = vmatprep.subr.bf16.mxu0 0
      %1236 = vmatpush1.bf16.xpose.msra.mxu0 %v1209
      %1237 = vmatprep.subr.bf16.mxu0 0
      %1238 = vmatpush1.bf16.xpose.msra.mxu0 %v1206
      %1239 = vmatprep.subr.bf16.mxu0 0
      %1240 = vmatpush1.bf16.xpose.msra.mxu0 %v1203
      %1241 = vmatprep.subr.bf16.mxu0 0
      %1242 = vmatpush1.bf16.xpose.msra.mxu0 %v1200
      %1243 = vmatprep.subr.bf16.mxu0 0
      %1244 = vmatpush1.bf16.xpose.msra.mxu0 %v1197
      %1245 = vmatprep.subr.bf16.mxu0 0
      %1246 = vmatpush1.bf16.xpose.msra.mxu0 %v1194
      %1247 = vmatprep.subr.bf16.mxu0 0
      %1248 = vmatpush1.bf16.xpose.msra.mxu0 %v1191
      %1249 = vmatprep.subr.bf16.mxu0 0
      %1250 = vmatpush1.bf16.xpose.msra.mxu0 %v1188
      %1251 = vmatprep.subr.bf16.mxu0 0
      %1252 = vmatpush2.bf16.xpose.msra.mxu0 %v1233
      %1253 = vmatprep.subr.bf16.mxu0 0
      %1254 = vmatpush2.bf16.xpose.msra.mxu0 %v1230
      %1255 = vmatprep.subr.bf16.mxu0 0
      %1256 = vmatpush2.bf16.xpose.msra.mxu0 %v1227
      %1257 = vmatprep.subr.bf16.mxu0 0
      %1258 = vmatpush2.bf16.xpose.msra.mxu0 %v1224
      %1259 = vmatprep.subr.bf16.mxu0 0
      %1260 = vmatpush2.bf16.xpose.msra.mxu0 %v1221
      %1261 = vmatprep.subr.bf16.mxu0 0
      %1262 = vmatpush2.bf16.xpose.msra.mxu0 %v1218
      %1263 = vmatprep.subr.bf16.mxu0 0
      %1264 = vmatpush2.bf16.xpose.msra.mxu0 %v1215
      %1265 = vmatprep.subr.bf16.mxu0 0
      %1266 = vmatpush2.bf16.xpose.msra.mxu0 %v1212
      %1267 = vmatprep.mubr.bf16.mxu0 0
      %1268 = vmatmul.mubr.bf16.gmra.mxu0 %v1185
      %v1269 = vpop.f32.mrf.mxu0
      %v1270 = vadd.f32 0.0, %v1269
      %v1271 = vpop.f32.mrf.mxu0
      %v1272 = vadd.f32 0.0, %v1271
      %v1273 = vpop.f32.mrf.mxu0
      %v1274 = vpop.f32.mrf.mxu0
      %1275 = vdwg.mxu0
      %v1276 = vld [vmem:[%s244] sm:$0xff]
      %v1277 = vld [vmem:[%s244 + $0x8] sm:$0xff]
      %v1278 = vld [vmem:[%s2] sm:$0x3]
      %v1280 = vlaneseq
      %v1281 = vshrl.u32 %v1280, 7
      %v1282 = vsub.s32 0, %v1281
      %v1283 = vrot.slane %v1278, %v1282
      %v1284 = vlaneseq
      %v1285 = vshrl.u32 %v1284, 7
      %v1286 = vsub.s32 1, %v1285
      %v1287 = vrot.slane %v1278, %v1286
      %v1290 = vmul.f32 %v1283, %v1270
      %v1291 = vmul.f32 %v1287, %v1272
      %v1292 = vadd.f32 %v1276, %v1290
      %v1293 = vadd.f32 %v1277, %v1291
      %1294 = vst [vmem:[%s244] sm:$0xff] %v1292
      %vm1295 = vcmask 924672
      %1296 = vst.msk [vmem:[%s244 + $0x8] sm:$0xff] %vm1295, %v1293
      %s1297 = scalar_lea.vmem %s1, 28
      %v1298 = vld [vmem:[%s1297] sm:$0xf]
      %v1300 = vsel %vm363, %v1298, 0
      %1302 = vmatprep.subr.bf16.mxu0 0
      %1303 = vmatpush1.bf16.xpose.msra.mxu0 %v392
      %1304 = vmatprep.subr.bf16.mxu0 0
      %1305 = vmatpush1.bf16.xpose.msra.mxu0 %v389
      %1306 = vmatprep.subr.bf16.mxu0 0
      %1307 = vmatpush1.bf16.xpose.msra.mxu0 %v386
      %1308 = vmatprep.subr.bf16.mxu0 0
      %1309 = vmatpush1.bf16.xpose.msra.mxu0 %v383
      %1310 = vmatprep.subr.bf16.mxu0 0
      %1311 = vmatpush1.bf16.xpose.msra.mxu0 %v380
      %1312 = vmatprep.subr.bf16.mxu0 0
      %1313 = vmatpush1.bf16.xpose.msra.mxu0 %v377
      %1314 = vmatprep.subr.bf16.mxu0 0
      %1315 = vmatpush1.bf16.xpose.msra.mxu0 %v374
      %1316 = vmatprep.subr.bf16.mxu0 0
      %1317 = vmatpush1.bf16.xpose.msra.mxu0 %v371
      %1318 = vmatprep.subr.bf16.mxu0 0
      %1319 = vmatpush2.bf16.xpose.msra.mxu0 0
      %1320 = vmatprep.subr.bf16.mxu0 0
      %1321 = vmatpush2.bf16.xpose.msra.mxu0 %v655
      %1322 = vmatprep.subr.bf16.mxu0 0
      %1323 = vmatpush2.bf16.xpose.msra.mxu0 %v410
      %1324 = vmatprep.subr.bf16.mxu0 0
      %1325 = vmatpush2.bf16.xpose.msra.mxu0 %v407
      %1326 = vmatprep.subr.bf16.mxu0 0
      %1327 = vmatpush2.bf16.xpose.msra.mxu0 %v404
      %1328 = vmatprep.subr.bf16.mxu0 0
      %1329 = vmatpush2.bf16.xpose.msra.mxu0 %v401
      %1330 = vmatprep.subr.bf16.mxu0 0
      %1331 = vmatpush2.bf16.xpose.msra.mxu0 %v398
      %1332 = vmatprep.subr.bf16.mxu0 0
      %1333 = vmatpush2.bf16.xpose.msra.mxu0 %v395
      %1334 = vmatprep.mubr.bf16.mxu0 0
      %1335 = vmatmul.mubr.bf16.gmra.mxu0 %v1300
      %v1336 = vpop.f32.mrf.mxu0
      %v1337 = vadd.f32 0.0, %v1336
      %v1338 = vpop.f32.mrf.mxu0
      %v1339 = vadd.f32 0.0, %v1338
      %v1340 = vpop.f32.mrf.mxu0
      %v1341 = vpop.f32.mrf.mxu0
      %1342 = vdwg.mxu0
      %v1343 = vld [vmem:[%s244] sm:$0xff]
      %v1344 = vld [vmem:[%s244 + $0x8] sm:$0xff]
      %v1345 = vld [vmem:[%s532] sm:$0x3]
      %v1347 = vlaneseq
      %v1348 = vshrl.u32 %v1347, 7
      %v1349 = vsub.s32 0, %v1348
      %v1350 = vrot.slane %v1345, %v1349
      %v1351 = vlaneseq
      %v1352 = vshrl.u32 %v1351, 7
      %v1353 = vsub.s32 1, %v1352
      %v1354 = vrot.slane %v1345, %v1353
      %v1357 = vmul.f32 %v1350, %v1337
      %v1358 = vmul.f32 %v1354, %v1339
      %v1359 = vadd.f32 %v1343, %v1357
      %v1360 = vadd.f32 %v1344, %v1358
      %1361 = vst [vmem:[%s244] sm:$0xff] %v1359
      %vm1362 = vcmask 916480
      %1363 = vst.msk [vmem:[%s244 + $0x8] sm:$0xff] %vm1362, %v1360
      %s1364 = scalar_lea.vmem %s1, 32
      %v1365 = vld [vmem:[%s1364] sm:$0xf]
      %v1367 = vsel %vm363, %v1365, 0
      %1369 = vmatprep.subr.bf16.mxu0 0
      %1370 = vmatpush1.bf16.xpose.msra.mxu0 %v937
      %1371 = vmatprep.subr.bf16.mxu0 0
      %1372 = vmatpush1.bf16.xpose.msra.mxu0 %v934
      %1373 = vmatprep.subr.bf16.mxu0 0
      %1374 = vmatpush1.bf16.xpose.msra.mxu0 %v931
      %1375 = vmatprep.subr.bf16.mxu0 0
      %1376 = vmatpush1.bf16.xpose.msra.mxu0 %v928
      %1377 = vmatprep.subr.bf16.mxu0 0
      %1378 = vmatpush1.bf16.xpose.msra.mxu0 %v925
      %1379 = vmatprep.subr.bf16.mxu0 0
      %1380 = vmatpush1.bf16.xpose.msra.mxu0 %v922
      %1381 = vmatprep.subr.bf16.mxu0 0
      %1382 = vmatpush1.bf16.xpose.msra.mxu0 %v919
      %1383 = vmatprep.subr.bf16.mxu0 0
      %1384 = vmatpush1.bf16.xpose.msra.mxu0 %v916
      %1385 = vmatprep.subr.bf16.mxu0 0
      %1386 = vmatpush2.bf16.xpose.msra.mxu0 0
      %1387 = vmatprep.subr.bf16.mxu0 0
      %1388 = vmatpush2.bf16.xpose.msra.mxu0 %v958
      %1389 = vmatprep.subr.bf16.mxu0 0
      %1390 = vmatpush2.bf16.xpose.msra.mxu0 %v955
      %1391 = vmatprep.subr.bf16.mxu0 0
      %1392 = vmatpush2.bf16.xpose.msra.mxu0 %v952
      %1393 = vmatprep.subr.bf16.mxu0 0
      %1394 = vmatpush2.bf16.xpose.msra.mxu0 %v949
      %1395 = vmatprep.subr.bf16.mxu0 0
      %1396 = vmatpush2.bf16.xpose.msra.mxu0 %v946
      %1397 = vmatprep.subr.bf16.mxu0 0
      %1398 = vmatpush2.bf16.xpose.msra.mxu0 %v943
      %1399 = vmatprep.subr.bf16.mxu0 0
      %1400 = vmatpush2.bf16.xpose.msra.mxu0 %v940
      %1401 = vmatprep.mubr.bf16.mxu0 0
      %1402 = vmatmul.mubr.bf16.gmra.mxu0 %v1367
      %v1403 = vpop.f32.mrf.mxu0
      %v1404 = vadd.f32 0.0, %v1403
      %v1405 = vpop.f32.mrf.mxu0
      %v1406 = vadd.f32 0.0, %v1405
      %v1407 = vpop.f32.mrf.mxu0
      %v1408 = vpop.f32.mrf.mxu0
      %1409 = vdwg.mxu0
      %v1410 = vld [vmem:[%s244] sm:$0xff]
      %v1411 = vld [vmem:[%s244 + $0x8] sm:$0xff]
      %v1412 = vld [vmem:[%s616] sm:$0x3]
      %v1414 = vlaneseq
      %v1415 = vshrl.u32 %v1414, 7
      %v1416 = vsub.s32 0, %v1415
      %v1417 = vrot.slane %v1412, %v1416
      %v1418 = vlaneseq
      %v1419 = vshrl.u32 %v1418, 7
      %v1420 = vsub.s32 1, %v1419
      %v1421 = vrot.slane %v1412, %v1420
      %v1424 = vmul.f32 %v1417, %v1404
      %v1425 = vmul.f32 %v1421, %v1406
      %v1426 = vadd.f32 %v1410, %v1424
      %v1427 = vadd.f32 %v1411, %v1425
      %1428 = vst [vmem:[%s244] sm:$0xff] %v1426
      %vm1429 = vcmask 908288
      %1430 = vst.msk [vmem:[%s244 + $0x8] sm:$0xff] %vm1429, %v1427
      %p1431 = scmp.lt.s32.totalorder %s16, 1
      %s1432 = scalar_select %p1431, %s16, 1
      %s1433 = smul.addr %s1432, 2
      %s1434 = smul.addr %s1433, 8
      %s1435 = scalar_lea.vmem %s5, %s1434
      // Predicated region
      $region41: #{dual_branch_forward.3} parent=39 // pred_check
        %p1436 = pneg %p149
      $region42: #{dual_branch_forward.3} parent=39 // pred_check_branch
        %1438 = sbr.rel (%p1436) target = $region44
      $region43: #{dual_branch_forward.3} parent=39 // pred_region
        _
      $region44: #{dual_branch_forward.3} parent=39 // pred_fallthru
        _
    $region40: #{dual_branch_forward.3} parent=5 // pred_fallthru
      _
    %p1439 = scmp.le.s32.totalorder 2, %s11
    // Predicated region
    $region45: #{dual_branch_forward.3} parent=5 // pred_check
      %p1440 = pneg %p1439
    $region46: #{dual_branch_forward.3} parent=5 // pred_check_branch
      %1442 = sbr.rel (%p1440) target = $region48
    $region47: #{dual_branch_forward.3} parent=5 // pred_region
      %s1443 = ssub.s32 %s11, 2
      // Predicated region
      $region49: #{dual_branch_forward.3} parent=47 // pred_check
        %p1444 = pneg %p155
      $region50: #{dual_branch_forward.3} parent=47 // pred_check_branch
        %1446 = sbr.rel (%p1444) target = $region52
      $region51: #{dual_branch_forward.3} parent=47 // pred_region
        %p1447 = scmp.lt.s32.totalorder %s17, 1
        %s1448 = scalar_select %p1447, %s17, 1
        %s1449 = smul.addr %s1448, 2
        %s1450 = smul.addr %s1449, 8
        %s1451 = scalar_lea.vmem %s5, %s1450
      $region52: #{dual_branch_forward.3} parent=47 // pred_fallthru
        _
    $region48: #{dual_branch_forward.3} parent=5 // pred_fallthru
      _
  $region6: #{dual_branch_forward.3} parent=0 // loop_footer
    %s15 = sadd.s32 1, %s11
  $region7: #{dual_branch_forward.3} parent=0 // loop_footer_branch
    %10 = sbr.rel target = $region3
  $region8: #{dual_branch_forward.3} parent=0 // loop_exit
    _

// kernel: dual_branch_forward.2
$region0: #{dual_branch_forward.2}
  #allocation0 [shape = 'u32[]', space=smem, size = 0x4, offset = 0x4, fixed_abs, tag = 'smem constant byte address 0x4 - core index']
  #allocation1 [shape = 'u32[144,128]{1,0:T(1,128)}', space=vmem, size = 0x12000, scoped, tag = 'internal scratch']
  #allocation2 [shape = 'f32[24,256]{1,0:T(8,128)}', space=vmem, size = 0x6000, scoped, tag = 'scratch operand']
  %s0 = inlined_call_operand.vmem [shape: bf16[2,8,256], index: 0, kind: input, shape index: {}]
  %s1 = inlined_call_operand.vmem [shape: bf16[24,8], index: 1, kind: input, shape index: {}]
  %s2 = inlined_call_operand.vmem [shape: f32[24,9], index: 2, kind: input, shape index: {}]
  %s3 = inlined_call_operand.vmem [shape: f32[3,1,256], index: 3, kind: input, shape index: {}]
  %s4 = inlined_call_operand.vmem [shape: bf16[8,8], index: 4, kind: input, shape index: {}]
  %s5 = inlined_call_operand.vmem [shape: f32[2,1], index: 5, kind: input, shape index: {}]
  %s6 = inlined_call_operand.vmem [shape: bf16[2,24,256], index: 6, kind: output, shape index: {0}]
  %s7 = inlined_call_operand.vmem [shape: bf16[2,8,256], index: 7, kind: output, shape index: {1}]
  %8 = xla_tuple %s6, %s7
  %s9 = sld [smem:[#allocation0]]
  $region65: #{dual_branch_forward.2} parent=0
    _
  %s11 = ssub.s32 1, %s9
  %s12 = scalar_select 0, %s11, %s9
  loop: start=0, step=1, limit=4
  $region2: #{dual_branch_forward.2} parent=0 // loop_pre_header
    _
  $region3: #{dual_branch_forward.2} parent=0 // loop_header
    %s14 = sphi 0, %s18
    %p15 = scmp.ge.s32.totalorder %s14, 4
    %s24 = sphi 0, %s26
    %s27 = sphi 0, %s24
    %s28 = sphi 0, %s27
    %s44 = sphi 0, %s28
    %s48 = sphi 0, %s48
    %s50 = sphi 0, %s48
    %s51 = sphi 0, %s50
    %s65 = sphi 0, %s51
    %s69 = sphi 0, %s69
    %s71 = sphi 0, %s69
    %s72 = sphi 0, %s71
    %s86 = sphi 0, %s72
    %s90 = sphi 0, %s90
    %s92 = sphi 0, %s90
    %s93 = sphi 0, %s92
    %s107 = sphi 0, %s93
    %s111 = sphi 0, %s111
    %s113 = sphi 0, %s111
    %s114 = sphi 0, %s113
    %s128 = sphi 0, %s114
    %s132 = sphi 0, %s132
    %s134 = sphi 0, %s132
    %s135 = sphi 0, %s134
    %s149 = sphi 0, %s135
    %s155 = sphi 0, %s157
    %s158 = sphi 0, %s155
    %s159 = sphi 0, %s158
    %s175 = sphi 0, %s159
    %s181 = sphi 0, %s183
    %s184 = sphi 0, %s181
    %s185 = sphi 0, %s184
    %s201 = sphi 0, %s185
  $region4: #{dual_branch_forward.2} parent=0 // loop_header_branch
    %17 = sbr.rel (%p15) target = $region8
  $region5: #{dual_branch_forward.2} parent=0 // loop_body
    %s19 = ssub.s32 %s14, 1
    %s20 = ssub.s32 %s14, 2
    %s21 = sadd.s32 %s14, 1
    %s22 = ssub.s32 %s14, %s21
    %p23 = scmp.eq.s32.totalorder %s22, 0
    %s25 = sadd.s32 %s24, 1
    %s26 = scalar_select %p23, %s24, %s25
    %p29 = pneg %p23
    %p30 = scmp.eq.s32.totalorder %s14, 1
    %p31 = por %p29, %p30
    %p32 = scmp.ne.s32.totalorder %s24, %s27
    %p33 = scmp.eq.s32.totalorder %s14, 0
    %p34 = por %p32, %p33
    %p35 = scmp.ne.s32.totalorder %s24, %s27
    %p36 = scmp.eq.s32.totalorder %s19, 1
    %p37 = por %p35, %p36
    %p38 = scmp.ne.s32.totalorder %s27, %s28
    %p39 = scmp.eq.s32.totalorder %s19, 0
    %p40 = por %p38, %p39
    %p41 = scmp.ne.s32.totalorder %s27, %s28
    %p42 = scmp.eq.s32.totalorder %s20, 1
    %p43 = por %p41, %p42
    %p45 = scmp.ne.s32.totalorder %s28, %s44
    %p46 = scmp.eq.s32.totalorder %s20, 0
    %p47 = por %p45, %p46
    %s49 = sadd.s32 %s48, 1
    %p52 = scmp.eq.s32.totalorder %s14, 1
    %p53 = scmp.ne.s32.totalorder %s48, %s50
    %p54 = scmp.eq.s32.totalorder %s14, 0
    %p55 = por %p53, %p54
    %p56 = scmp.ne.s32.totalorder %s48, %s50
    %p57 = scmp.eq.s32.totalorder %s19, 1
    %p58 = por %p56, %p57
    %p59 = scmp.ne.s32.totalorder %s50, %s51
    %p60 = scmp.eq.s32.totalorder %s19, 0
    %p61 = por %p59, %p60
    %p62 = scmp.ne.s32.totalorder %s50, %s51
    %p63 = scmp.eq.s32.totalorder %s20, 1
    %p64 = por %p62, %p63
    %p66 = scmp.ne.s32.totalorder %s51, %s65
    %p67 = scmp.eq.s32.totalorder %s20, 0
    %p68 = por %p66, %p67
    %s70 = sadd.s32 %s69, 1
    %p73 = scmp.eq.s32.totalorder %s14, 1
    %p74 = scmp.ne.s32.totalorder %s69, %s71
    %p75 = scmp.eq.s32.totalorder %s14, 0
    %p76 = por %p74, %p75
    %p77 = scmp.ne.s32.totalorder %s69, %s71
    %p78 = scmp.eq.s32.totalorder %s19, 1
    %p79 = por %p77, %p78
    %p80 = scmp.ne.s32.totalorder %s71, %s72
    %p81 = scmp.eq.s32.totalorder %s19, 0
    %p82 = por %p80, %p81
    %p83 = scmp.ne.s32.totalorder %s71, %s72
    %p84 = scmp.eq.s32.totalorder %s20, 1
    %p85 = por %p83, %p84
    %p87 = scmp.ne.s32.totalorder %s72, %s86
    %p88 = scmp.eq.s32.totalorder %s20, 0
    %p89 = por %p87, %p88
    %s91 = sadd.s32 %s90, 1
    %p94 = scmp.eq.s32.totalorder %s14, 1
    %p95 = scmp.ne.s32.totalorder %s90, %s92
    %p96 = scmp.eq.s32.totalorder %s14, 0
    %p97 = por %p95, %p96
    %p98 = scmp.ne.s32.totalorder %s90, %s92
    %p99 = scmp.eq.s32.totalorder %s19, 1
    %p100 = por %p98, %p99
    %p101 = scmp.ne.s32.totalorder %s92, %s93
    %p102 = scmp.eq.s32.totalorder %s19, 0
    %p103 = por %p101, %p102
    %p104 = scmp.ne.s32.totalorder %s92, %s93
    %p105 = scmp.eq.s32.totalorder %s20, 1
    %p106 = por %p104, %p105
    %p108 = scmp.ne.s32.totalorder %s93, %s107
    %p109 = scmp.eq.s32.totalorder %s20, 0
    %p110 = por %p108, %p109
    %s112 = sadd.s32 %s111, 1
    %p115 = scmp.eq.s32.totalorder %s14, 1
    %p116 = scmp.ne.s32.totalorder %s111, %s113
    %p117 = scmp.eq.s32.totalorder %s14, 0
    %p118 = por %p116, %p117
    %p119 = scmp.ne.s32.totalorder %s111, %s113
    %p120 = scmp.eq.s32.totalorder %s19, 1
    %p121 = por %p119, %p120
    %p122 = scmp.ne.s32.totalorder %s113, %s114
    %p123 = scmp.eq.s32.totalorder %s19, 0
    %p124 = por %p122, %p123
    %p125 = scmp.ne.s32.totalorder %s113, %s114
    %p126 = scmp.eq.s32.totalorder %s20, 1
    %p127 = por %p125, %p126
    %p129 = scmp.ne.s32.totalorder %s114, %s128
    %p130 = scmp.eq.s32.totalorder %s20, 0
    %p131 = por %p129, %p130
    %s133 = sadd.s32 %s132, 1
    %p136 = scmp.eq.s32.totalorder %s14, 1
    %p137 = scmp.ne.s32.totalorder %s132, %s134
    %p138 = scmp.eq.s32.totalorder %s14, 0
    %p139 = por %p137, %p138
    %p140 = scmp.ne.s32.totalorder %s132, %s134
    %p141 = scmp.eq.s32.totalorder %s19, 1
    %p142 = por %p140, %p141
    %p143 = scmp.ne.s32.totalorder %s134, %s135
    %p144 = scmp.eq.s32.totalorder %s19, 0
    %p145 = por %p143, %p144
    %p146 = scmp.ne.s32.totalorder %s134, %s135
    %p147 = scmp.eq.s32.totalorder %s20, 1
    %p148 = por %p146, %p147
    %p150 = scmp.ne.s32.totalorder %s135, %s149
    %p151 = scmp.eq.s32.totalorder %s20, 0
    %p152 = por %p150, %p151
    %s153 = ssub.s32 %s14, %s21
    %p154 = scmp.eq.s32.totalorder %s153, 0
    %s156 = sadd.s32 %s155, 1
    %s157 = scalar_select %p154, %s155, %s156
    %p160 = pneg %p154
    %p161 = scmp.eq.s32.totalorder %s14, 1
    %p162 = por %p160, %p161
    %p163 = scmp.ne.s32.totalorder %s155, %s158
    %p164 = scmp.eq.s32.totalorder %s14, 0
    %p165 = por %p163, %p164
    %p166 = scmp.ne.s32.totalorder %s155, %s158
    %p167 = scmp.eq.s32.totalorder %s19, 1
    %p168 = por %p166, %p167
    %p169 = scmp.ne.s32.totalorder %s158, %s159
    %p170 = scmp.eq.s32.totalorder %s19, 0
    %p171 = por %p169, %p170
    %p172 = scmp.ne.s32.totalorder %s158, %s159
    %p173 = scmp.eq.s32.totalorder %s20, 1
    %p174 = por %p172, %p173
    %p176 = scmp.ne.s32.totalorder %s159, %s175
    %p177 = scmp.eq.s32.totalorder %s20, 0
    %p178 = por %p176, %p177
    %s179 = ssub.s32 %s14, %s21
    %p180 = scmp.eq.s32.totalorder %s179, 0
    %s182 = sadd.s32 %s181, 1
    %s183 = scalar_select %p180, %s181, %s182
    %p186 = pneg %p180
    %p187 = scmp.eq.s32.totalorder %s14, 1
    %p188 = por %p186, %p187
    %p189 = scmp.ne.s32.totalorder %s181, %s184
    %p190 = scmp.eq.s32.totalorder %s14, 0
    %p191 = por %p189, %p190
    %p192 = scmp.ne.s32.totalorder %s181, %s184
    %p193 = scmp.eq.s32.totalorder %s19, 1
    %p194 = por %p192, %p193
    %p195 = scmp.ne.s32.totalorder %s184, %s185
    %p196 = scmp.eq.s32.totalorder %s19, 0
    %p197 = por %p195, %p196
    %p198 = scmp.ne.s32.totalorder %s184, %s185
    %p199 = scmp.eq.s32.totalorder %s20, 1
    %p200 = por %p198, %p199
    %p202 = scmp.ne.s32.totalorder %s185, %s201
    %p203 = scmp.eq.s32.totalorder %s20, 0
    %p204 = por %p202, %p203
    %p205 = scmp.le.s32.totalorder 1, %s14
    %p206 = scmp.lt.s32.totalorder %s14, 3
    %p207 = pnand %p205, %p206
    %p208 = pneg %p207
    // Predicated region
    $region9: #{dual_branch_forward.2} parent=5 // pred_check
      _
    $region10: #{dual_branch_forward.2} parent=5 // pred_check_branch
      %210 = sbr.rel (%p207) target = $region12
    $region11: #{dual_branch_forward.2} parent=5 // pred_region
      %s211 = ssub.s32 %s14, 1
      // Predicated region
      $region13: #{dual_branch_forward.2} parent=11 // pred_check
        %p212 = pneg %p61
      $region14: #{dual_branch_forward.2} parent=11 // pred_check_branch
        %214 = sbr.rel (%p212) target = $region16
      $region15: #{dual_branch_forward.2} parent=11 // pred_region
        _
      $region16: #{dual_branch_forward.2} parent=11 // pred_fallthru
        _
      // Predicated region
      $region17: #{dual_branch_forward.2} parent=11 // pred_check
        %p215 = pneg %p82
      $region18: #{dual_branch_forward.2} parent=11 // pred_check_branch
        %217 = sbr.rel (%p215) target = $region20
      $region19: #{dual_branch_forward.2} parent=11 // pred_region
        _
      $region20: #{dual_branch_forward.2} parent=11 // pred_fallthru
        _
      // Predicated region
      $region21: #{dual_branch_forward.2} parent=11 // pred_check
        %p218 = pneg %p103
      $region22: #{dual_branch_forward.2} parent=11 // pred_check_branch
        %220 = sbr.rel (%p218) target = $region24
      $region23: #{dual_branch_forward.2} parent=11 // pred_region
        _
      $region24: #{dual_branch_forward.2} parent=11 // pred_fallthru
        _
      // Predicated region
      $region25: #{dual_branch_forward.2} parent=11 // pred_check
        %p221 = pneg %p124
      $region26: #{dual_branch_forward.2} parent=11 // pred_check_branch
        %223 = sbr.rel (%p221) target = $region28
      $region27: #{dual_branch_forward.2} parent=11 // pred_region
        _
      $region28: #{dual_branch_forward.2} parent=11 // pred_fallthru
        _
      // Predicated region
      $region29: #{dual_branch_forward.2} parent=11 // pred_check
        %p224 = pneg %p145
      $region30: #{dual_branch_forward.2} parent=11 // pred_check_branch
        %226 = sbr.rel (%p224) target = $region32
      $region31: #{dual_branch_forward.2} parent=11 // pred_region
        _
      $region32: #{dual_branch_forward.2} parent=11 // pred_fallthru
        _
    $region12: #{dual_branch_forward.2} parent=5 // pred_fallthru
      _
    %p227 = scmp.lt.s32.totalorder %s14, 2
    // Predicated region
    $region33: #{dual_branch_forward.2} parent=5 // pred_check
      %p228 = pneg %p227
    $region34: #{dual_branch_forward.2} parent=5 // pred_check_branch
      %230 = sbr.rel (%p228) target = $region36
    $region35: #{dual_branch_forward.2} parent=5 // pred_region
      // Predicated region
      $region37: #{dual_branch_forward.2} parent=35 // pred_check
        %p231 = pneg %p34
      $region38: #{dual_branch_forward.2} parent=35 // pred_check_branch
        %233 = sbr.rel (%p231) target = $region40
      $region39: #{dual_branch_forward.2} parent=35 // pred_region
        %p234 = scmp.lt.s32.totalorder %s14, 1
        %s235 = scalar_select %p234, %s14, 1
        %s236 = smul.addr %s235, 2
        %s237 = smul.addr %s236, 4
        %s238 = scalar_lea.vmem %s0, %s237
      $region40: #{dual_branch_forward.2} parent=35 // pred_fallthru
        _
    $region36: #{dual_branch_forward.2} parent=5 // pred_fallthru
      _
    %p239 = scmp.le.s32.totalorder 1, %s14
    %p240 = scmp.lt.s32.totalorder %s14, 3
    %p241 = pnand %p239, %p240
    %p242 = pneg %p241
    // Predicated region
    $region41: #{dual_branch_forward.2} parent=5 // pred_check
      _
    $region42: #{dual_branch_forward.2} parent=5 // pred_check_branch
      %244 = sbr.rel (%p241) target = $region44
    $region43: #{dual_branch_forward.2} parent=5 // pred_region
      %s245 = ssub.s32 %s14, 1
      %p246 = scmp.lt.s32.totalorder %s19, 1
      %s247 = scalar_select %p246, %s19, 1
      %s248 = smul.addr %s247, 2
      %s249 = smul.addr %s248, 4
      %s250 = scalar_lea.vmem %s0, %s249
      %p251 = pneg %p40
      %p252 = pneg %p37
      %p253 = pneg %p61
      %p254 = pneg %p58
      %p255 = pneg %p82
      %p256 = pneg %p79
      %p257 = pneg %p103
      %p258 = pneg %p100
      %p259 = pneg %p124
      %p260 = pneg %p121
      %p261 = pneg %p145
      %p262 = pneg %p142
      %p263 = pneg %p171
      %p264 = pneg %p168
      %p265 = scmp.lt.s32.totalorder %s19, 1
      %s266 = scalar_select %p265, %s19, 1
      %s267 = smul.addr %s266, 6
      %s268 = smul.addr %s267, 4
      %s269 = scalar_lea.vmem %s6, %s268
      %p270 = pneg %p197
      %p271 = pneg %p194
      %p272 = scmp.lt.s32.totalorder %s19, 1
      %s273 = scalar_select %p272, %s19, 1
      %s274 = smul.addr %s273, 2
      %s275 = smul.addr %s274, 4
      %s276 = scalar_lea.vmem %s7, %s275
      %p277 = scmp.lt.s32.totalorder %s19, 1
      %s278 = scalar_select %p277, %s19, 1
      %s279 = smul.addr %s278, 2
      %s280 = smul.addr %s279, 4
      %s281 = scalar_lea.vmem %s0, %s280
      %p282 = scmp.lt.s32.totalorder %s19, 1
      %s283 = scalar_select %p282, %s19, 1
      %s284 = smul.addr %s283, 6
      %s285 = smul.addr %s284, 4
      %s286 = scalar_lea.vmem %s6, %s285
      %p287 = scmp.lt.s32.totalorder %s19, 1
      %s288 = scalar_select %p287, %s19, 1
      %s289 = smul.addr %s288, 2
      %s290 = smul.addr %s289, 4
      %s291 = scalar_lea.vmem %s7, %s290
      %v293 = vld [vmem:[%s1] sm:$0xf]
      %v294 = vld [vmem:[%s1 + $0x4] sm:$0xf]
      %v295 = vld [vmem:[%s1 + $0x8] sm:$0xf]
      %v296 = vld [vmem:[%s281] sm:$0xff]
      %v300 = vunpack.c.l.b16 %v293
      %v301 = vunpack.c.l.b16 %v294
      %v302 = vunpack.c.l.b16 %v295
      %v303 = vpack.c.b16 %v301, %v300
      %v304 = vpack.c.b16 %v302, %v302
      %v306 = vunpack.c.l.b16 %v296
      %v307 = vunpack.c.h.b16 %v296
      %v308 = vpack.c.b16 %v306, %v306
      %v309 = vpack.c.b16 %v307, %v307
      %vm310 = vcmask 64512
      %v312 = vsel %vm310, %v303, 0
      %v315 = vsel %vm310, %v304, 0
      %vm317 = vcmask 1043456
      %v319 = vsel %vm317, %v308, 0
      %v322 = vsel %vm317, %v309, 0
      %324 = vmatprep.subr.bf16.mxu0 0
      %325 = vmatpush1.bf16.msra.mxu0 0
      %326 = vmatprep.subr.bf16.mxu0 0
      %327 = vmatpush1.bf16.msra.mxu0 0
      %328 = vmatprep.subr.bf16.mxu0 0
      %329 = vmatpush1.bf16.msra.mxu0 0
      %330 = vmatprep.subr.bf16.mxu0 0
      %331 = vmatpush1.bf16.msra.mxu0 0
      %332 = vmatprep.subr.bf16.mxu0 0
      %333 = vmatpush1.bf16.msra.mxu0 0
      %334 = vmatprep.subr.bf16.mxu0 0
      %335 = vmatpush1.bf16.msra.mxu0 0
      %336 = vmatprep.subr.bf16.mxu0 0
      %337 = vmatpush1.bf16.msra.mxu0 0
      %338 = vmatprep.subr.bf16.mxu0 %v322
      %339 = vmatpush1.bf16.msra.mxu0 %v319
      %340 = vmatprep.subr.bf16.mxu0 0
      %341 = vmatpush2.bf16.msra.mxu0 0
      %342 = vmatprep.subr.bf16.mxu0 0
      %343 = vmatpush2.bf16.msra.mxu0 0
      %344 = vmatprep.subr.bf16.mxu0 0
      %345 = vmatpush2.bf16.msra.mxu0 0
      %346 = vmatprep.subr.bf16.mxu0 0
      %347 = vmatpush2.bf16.msra.mxu0 0
      %348 = vmatprep.subr.bf16.mxu0 0
      %349 = vmatpush2.bf16.msra.mxu0 0
      %350 = vmatprep.subr.bf16.mxu0 0
      %351 = vmatpush2.bf16.msra.mxu0 0
      %352 = vmatprep.subr.bf16.mxu0 0
      %353 = vmatpush2.bf16.msra.mxu0 0
      %354 = vmatprep.subr.bf16.mxu0 0
      %355 = vmatpush2.bf16.msra.mxu0 0
      %356 = vmatprep.mubr.bf16.mxu0 0
      %357 = vmatmul.mubr.bf16.gmra.mxu0 %v312
      %v358 = vpop.f32.mrf.mxu0
      %v359 = vadd.f32 0.0, %v358
      %v360 = vpop.f32.mrf.mxu0
      %v361 = vadd.f32 0.0, %v360
      %v362 = vpop.f32.mrf.mxu0
      %v363 = vadd.f32 0.0, %v362
      %v364 = vpop.f32.mrf.mxu0
      %v365 = vadd.f32 0.0, %v364
      %366 = vmatprep.mubr.bf16.mxu0 0
      %367 = vmatmul.mubr.bf16.gmra.mxu0 %v315
      %v368 = vpop.f32.mrf.mxu0
      %v369 = vadd.f32 0.0, %v368
      %v370 = vpop.f32.mrf.mxu0
      %v371 = vadd.f32 0.0, %v370
      %v372 = vpop.f32.mrf.mxu0
      %v373 = vpop.f32.mrf.mxu0
      %374 = vdwg.mxu0
      %375 = vst [vmem:[#allocation2] sm:$0xff] 0.0
      %376 = vst [vmem:[#allocation2 + $0x8] sm:$0xff] 0.0
      %377 = vst [vmem:[#allocation2 + $0x10] sm:$0xff] 0.0
      %378 = vst [vmem:[#allocation2 + $0x18] sm:$0xff] 0.0
      %379 = vst [vmem:[#allocation2 + $0x20] sm:$0xff] 0.0
      %380 = vst [vmem:[#allocation2 + $0x28] sm:$0xff] 0.0
      %v381 = vld [vmem:[%s2] sm:$0xff]
      %v382 = vld [vmem:[%s2 + $0x8] sm:$0xff]
      %v383 = vld [vmem:[%s2 + $0x10] sm:$0xff]
      %385 = vset.pattern.permute.xlu0 0
      %386 = vperm.xlu0 %385, %v381
      %v387 = vpop.permute.xlu0 %386
      %390 = vset.pattern.permute.xlu0 0
      %391 = vperm.xlu0 %390, %v382
      %v392 = vpop.permute.xlu0 %391
      %395 = vset.pattern.permute.xlu0 0
      %396 = vperm.xlu0 %395, %v383
      %v397 = vpop.permute.xlu0 %396
      %v399 = vmul.f32 %v387, %v359
      %v400 = vmul.f32 %v387, %v361
      %v401 = vmul.f32 %v392, %v363
      %v402 = vmul.f32 %v392, %v365
      %v403 = vmul.f32 %v397, %v369
      %v404 = vmul.f32 %v397, %v371
      %v405 = vld [vmem:[#allocation2] sm:$0xff]
      %v406 = vld [vmem:[#allocation2 + $0x8] sm:$0xff]
      %v407 = vld [vmem:[#allocation2 + $0x10] sm:$0xff]
      %v408 = vld [vmem:[#allocation2 + $0x18] sm:$0xff]
      %v409 = vld [vmem:[#allocation2 + $0x20] sm:$0xff]
      %v410 = vld [vmem:[#allocation2 + $0x28] sm:$0xff]
      %v411 = vld [vmem:[%s3] sm:$0x3]
      %v413 = vlaneseq
      %v414 = vshrl.u32 %v413, 7
      %v415 = vsub.s32 0, %v414
      %v416 = vrot.slane %v411, %v415
      %v417 = vlaneseq
      %v418 = vshrl.u32 %v417, 7
      %v419 = vsub.s32 1, %v418
      %v420 = vrot.slane %v411, %v419
      %429 = vrot.lane.b32.xlu0 %v399, 17
      %v430 = vpop.permute.xlu0 %429
      %431 = vrot.lane.b32.xlu0 %v400, 17
      %v432 = vpop.permute.xlu0 %431
      %433 = vrot.lane.b32.xlu0 %v401, 17
      %v434 = vpop.permute.xlu0 %433
      %435 = vrot.lane.b32.xlu0 %v402, 17
      %v436 = vpop.permute.xlu0 %435
      %437 = vrot.lane.b32.xlu0 %v403, 17
      %v438 = vpop.permute.xlu0 %437
      %439 = vrot.lane.b32.xlu0 %v404, 17
      %v440 = vpop.permute.xlu0 %439
      %vm441 = vcmask 138240
      %v442 = vsel %vm441, %v430, %v432
      %v443 = vsel %vm441, %v434, %v436
      %v444 = vsel %vm441, %v438, %v440
      %v451 = vmul.f32 %v416, %v430
      %v452 = vmul.f32 %v420, %v442
      %v453 = vmul.f32 %v416, %v434
      %v454 = vmul.f32 %v420, %v443
      %v455 = vmul.f32 %v416, %v438
      %v456 = vmul.f32 %v420, %v444
      %v457 = vadd.f32 %v405, %v451
      %v458 = vadd.f32 %v406, %v452
      %v459 = vadd.f32 %v407, %v453
      %v460 = vadd.f32 %v408, %v454
      %v461 = vadd.f32 %v409, %v455
      %v462 = vadd.f32 %v410, %v456
      %vm463 = vcmask 1047688
      %464 = vst.msk [vmem:[#allocation2] sm:$0xff] %vm463, %v457
      %465 = vst [vmem:[#allocation2 + $0x8] sm:$0xff] %v458
      %466 = vst.msk [vmem:[#allocation2 + $0x10] sm:$0xff] %vm463, %v459
      %467 = vst [vmem:[#allocation2 + $0x18] sm:$0xff] %v460
      %468 = vst.msk [vmem:[#allocation2 + $0x20] sm:$0xff] %vm463, %v461
      %469 = vst [vmem:[#allocation2 + $0x28] sm:$0xff] %v462
      %v470 = vld [vmem:[%s2] sm:$0xff]
      %v471 = vld [vmem:[%s2 + $0x8] sm:$0xff]
      %v472 = vld [vmem:[%s2 + $0x10] sm:$0xff]
      %474 = vset.pattern.permute.xlu0 1
      %475 = vperm.xlu0 %474, %v470
      %v476 = vpop.permute.xlu0 %475
      %479 = vset.pattern.permute.xlu0 1
      %480 = vperm.xlu0 %479, %v471
      %v481 = vpop.permute.xlu0 %480
      %484 = vset.pattern.permute.xlu0 1
      %485 = vperm.xlu0 %484, %v472
      %v486 = vpop.permute.xlu0 %485
      %v488 = vmul.f32 %v476, %v359
      %v489 = vmul.f32 %v476, %v361
      %v490 = vmul.f32 %v481, %v363
      %v491 = vmul.f32 %v481, %v365
      %v492 = vmul.f32 %v486, %v369
      %v493 = vmul.f32 %v486, %v371
      %v494 = vld [vmem:[#allocation2] sm:$0xff]
      %v495 = vld [vmem:[#allocation2 + $0x8] sm:$0xff]
      %v496 = vld [vmem:[#allocation2 + $0x10] sm:$0xff]
      %v497 = vld [vmem:[#allocation2 + $0x18] sm:$0xff]
      %v498 = vld [vmem:[#allocation2 + $0x20] sm:$0xff]
      %v499 = vld [vmem:[#allocation2 + $0x28] sm:$0xff]
      %s500 = scalar_lea.vmem %s3, 2
      %v501 = vld [vmem:[%s500] sm:$0x3]
      %v503 = vlaneseq
      %v504 = vshrl.u32 %v503, 7
      %v505 = vsub.s32 0, %v504
      %v506 = vrot.slane %v501, %v505
      %v507 = vlaneseq
      %v508 = vshrl.u32 %v507, 7
      %v509 = vsub.s32 1, %v508
      %v510 = vrot.slane %v501, %v509
      %519 = vrot.lane.b32.xlu0 %v488, 16
      %v520 = vpop.permute.xlu0 %519
      %521 = vrot.lane.b32.xlu0 %v489, 16
      %v522 = vpop.permute.xlu0 %521
      %523 = vrot.lane.b32.xlu0 %v490, 16
      %v524 = vpop.permute.xlu0 %523
      %525 = vrot.lane.b32.xlu0 %v491, 16
      %v526 = vpop.permute.xlu0 %525
      %527 = vrot.lane.b32.xlu0 %v492, 16
      %v528 = vpop.permute.xlu0 %527
      %529 = vrot.lane.b32.xlu0 %v493, 16
      %v530 = vpop.permute.xlu0 %529
      %vm531 = vcmask 130048
      %v532 = vsel %vm531, %v520, %v522
      %v533 = vsel %vm531, %v524, %v526
      %v534 = vsel %vm531, %v528, %v530
      %v541 = vmul.f32 %v506, %v520
      %v542 = vmul.f32 %v510, %v532
      %v543 = vmul.f32 %v506, %v524
      %v544 = vmul.f32 %v510, %v533
      %v545 = vmul.f32 %v506, %v528
      %v546 = vmul.f32 %v510, %v534
      %v547 = vadd.f32 %v494, %v541
      %v548 = vadd.f32 %v495, %v542
      %v549 = vadd.f32 %v496, %v543
      %v550 = vadd.f32 %v497, %v544
      %v551 = vadd.f32 %v498, %v545
      %v552 = vadd.f32 %v499, %v546
      %vm553 = vcmask 1047680
      %554 = vst.msk [vmem:[#allocation2] sm:$0xff] %vm553, %v547
      %555 = vst [vmem:[#allocation2 + $0x8] sm:$0xff] %v548
      %556 = vst.msk [vmem:[#allocation2 + $0x10] sm:$0xff] %vm553, %v549
      %557 = vst [vmem:[#allocation2 + $0x18] sm:$0xff] %v550
      %558 = vst.msk [vmem:[#allocation2 + $0x20] sm:$0xff] %vm553, %v551
      %559 = vst [vmem:[#allocation2 + $0x28] sm:$0xff] %v552
      %v560 = vld [vmem:[%s2] sm:$0xff]
      %v561 = vld [vmem:[%s2 + $0x8] sm:$0xff]
      %v562 = vld [vmem:[%s2 + $0x10] sm:$0xff]
      %564 = vset.pattern.permute.xlu0 2
      %565 = vperm.xlu0 %564, %v560
      %v566 = vpop.permute.xlu0 %565
      %569 = vset.pattern.permute.xlu0 2
      %570 = vperm.xlu0 %569, %v561
      %v571 = vpop.permute.xlu0 %570
      %574 = vset.pattern.permute.xlu0 2
      %575 = vperm.xlu0 %574, %v562
      %v576 = vpop.permute.xlu0 %575
      %v578 = vmul.f32 %v566, %v359
      %v579 = vmul.f32 %v566, %v361
      %v580 = vmul.f32 %v571, %v363
      %v581 = vmul.f32 %v571, %v365
      %v582 = vmul.f32 %v576, %v369
      %v583 = vmul.f32 %v576, %v371
      %v584 = vld [vmem:[#allocation2] sm:$0xff]
      %v585 = vld [vmem:[#allocation2 + $0x8] sm:$0xff]
      %v586 = vld [vmem:[#allocation2 + $0x10] sm:$0xff]
      %v587 = vld [vmem:[#allocation2 + $0x18] sm:$0xff]
      %v588 = vld [vmem:[#allocation2 + $0x20] sm:$0xff]
      %v589 = vld [vmem:[#allocation2 + $0x28] sm:$0xff]
      %s590 = scalar_lea.vmem %s3, 4
      %v591 = vld [vmem:[%s590] sm:$0x3]
      %v593 = vlaneseq
      %v594 = vshrl.u32 %v593, 7
      %v595 = vsub.s32 0, %v594
      %v596 = vrot.slane %v591, %v595
      %v597 = vlaneseq
      %v598 = vshrl.u32 %v597, 7
      %v599 = vsub.s32 1, %v598
      %v600 = vrot.slane %v591, %v599
      %609 = vrot.lane.b32.xlu0 %v578, 15
      %v610 = vpop.permute.xlu0 %609
      %611 = vrot.lane.b32.xlu0 %v579, 15
      %v612 = vpop.permute.xlu0 %611
      %613 = vrot.lane.b32.xlu0 %v580, 15
      %v614 = vpop.permute.xlu0 %613
      %615 = vrot.lane.b32.xlu0 %v581, 15
      %v616 = vpop.permute.xlu0 %615
      %617 = vrot.lane.b32.xlu0 %v582, 15
      %v618 = vpop.permute.xlu0 %617
      %619 = vrot.lane.b32.xlu0 %v583, 15
      %v620 = vpop.permute.xlu0 %619
      %vm621 = vcmask 121856
      %v622 = vsel %vm621, %v610, %v612
      %v623 = vsel %vm621, %v614, %v616
      %v624 = vsel %vm621, %v618, %v620
      %v631 = vmul.f32 %v596, %v610
      %v632 = vmul.f32 %v600, %v622
      %v633 = vmul.f32 %v596, %v614
      %v634 = vmul.f32 %v600, %v623
      %v635 = vmul.f32 %v596, %v618
      %v636 = vmul.f32 %v600, %v624
      %v637 = vadd.f32 %v584, %v631
      %v638 = vadd.f32 %v585, %v632
      %v639 = vadd.f32 %v586, %v633
      %v640 = vadd.f32 %v587, %v634
      %v641 = vadd.f32 %v588, %v635
      %v642 = vadd.f32 %v589, %v636
      %vm643 = vcmask 1047672
      %644 = vst.msk [vmem:[#allocation2] sm:$0xff] %vm643, %v637
      %645 = vst [vmem:[#allocation2 + $0x8] sm:$0xff] %v638
      %646 = vst.msk [vmem:[#allocation2 + $0x10] sm:$0xff] %vm643, %v639
      %647 = vst [vmem:[#allocation2 + $0x18] sm:$0xff] %v640
      %648 = vst.msk [vmem:[#allocation2 + $0x20] sm:$0xff] %vm643, %v641
      %649 = vst [vmem:[#allocation2 + $0x28] sm:$0xff] %v642
      %v650 = vld [vmem:[%s2] sm:$0xff]
      %v651 = vld [vmem:[%s2 + $0x8] sm:$0xff]
      %v652 = vld [vmem:[%s2 + $0x10] sm:$0xff]
      %654 = vset.pattern.permute.xlu0 3
      %655 = vperm.xlu0 %654, %v650
      %v656 = vpop.permute.xlu0 %655
      %659 = vset.pattern.permute.xlu0 3
      %660 = vperm.xlu0 %659, %v651
      %v661 = vpop.permute.xlu0 %660
      %664 = vset.pattern.permute.xlu0 3
      %665 = vperm.xlu0 %664, %v652
      %v666 = vpop.permute.xlu0 %665
      %v668 = vmul.f32 %v656, %v359
      %v669 = vmul.f32 %v656, %v361
      %v670 = vmul.f32 %v661, %v363
      %v671 = vmul.f32 %v661, %v365
      %v672 = vmul.f32 %v666, %v369
      %v673 = vmul.f32 %v666, %v371
      %v674 = vld [vmem:[#allocation2] sm:$0xff]
      %v675 = vld [vmem:[#allocation2 + $0x8] sm:$0xff]
      %v676 = vld [vmem:[#allocation2 + $0x10] sm:$0xff]
      %v677 = vld [vmem:[#allocation2 + $0x18] sm:$0xff]
      %v678 = vld [vmem:[#allocation2 + $0x20] sm:$0xff]
      %v679 = vld [vmem:[#allocation2 + $0x28] sm:$0xff]
      %v680 = vld [vmem:[%s3] sm:$0x3]
      %v682 = vlaneseq
      %v683 = vshrl.u32 %v682, 7
      %v684 = vsub.s32 0, %v683
      %v685 = vrot.slane %v680, %v684
      %v686 = vlaneseq
      %v687 = vshrl.u32 %v686, 7
      %v688 = vsub.s32 1, %v687
      %v689 = vrot.slane %v680, %v688
      %698 = vrot.lane.b32.xlu0 %v668, 1
      %v699 = vpop.permute.xlu0 %698
      %700 = vrot.lane.b32.xlu0 %v669, 1
      %v701 = vpop.permute.xlu0 %700
      %702 = vrot.lane.b32.xlu0 %v670, 1
      %v703 = vpop.permute.xlu0 %702
      %704 = vrot.lane.b32.xlu0 %v671, 1
      %v705 = vpop.permute.xlu0 %704
      %706 = vrot.lane.b32.xlu0 %v672, 1
      %v707 = vpop.permute.xlu0 %706
      %708 = vrot.lane.b32.xlu0 %v673, 1
      %v709 = vpop.permute.xlu0 %708
      %vm710 = vcmask 7168
      %v711 = vsel %vm710, %v699, %v701
      %v712 = vsel %vm710, %v703, %v705
      %v713 = vsel %vm710, %v707, %v709
      %v720 = vmul.f32 %v685, %v699
      %v721 = vmul.f32 %v689, %v711
      %v722 = vmul.f32 %v685, %v703
      %v723 = vmul.f32 %v689, %v712
      %v724 = vmul.f32 %v685, %v707
      %v725 = vmul.f32 %v689, %v713
      %v726 = vadd.f32 %v674, %v720
      %v727 = vadd.f32 %v675, %v721
      %v728 = vadd.f32 %v676, %v722
      %v729 = vadd.f32 %v677, %v723
      %v730 = vadd.f32 %v678, %v724
      %v731 = vadd.f32 %v679, %v725
      %vm732 = vcmask 1047560
      %733 = vst.msk [vmem:[#allocation2] sm:$0xff] %vm732, %v726
      %734 = vst [vmem:[#allocation2 + $0x8] sm:$0xff] %v727
      %735 = vst.msk [vmem:[#allocation2 + $0x10] sm:$0xff] %vm732, %v728
      %736 = vst [vmem:[#allocation2 + $0x18] sm:$0xff] %v729
      %737 = vst.msk [vmem:[#allocation2 + $0x20] sm:$0xff] %vm732, %v730
      %738 = vst [vmem:[#allocation2 + $0x28] sm:$0xff] %v731
      %v739 = vld [vmem:[%s2] sm:$0xff]
      %v740 = vld [vmem:[%s2 + $0x8] sm:$0xff]
      %v741 = vld [vmem:[%s2 + $0x10] sm:$0xff]
      %743 = vset.pattern.permute.xlu0 4
      %744 = vperm.xlu0 %743, %v739
      %v745 = vpop.permute.xlu0 %744
      %748 = vset.pattern.permute.xlu0 4
      %749 = vperm.xlu0 %748, %v740
      %v750 = vpop.permute.xlu0 %749
      %753 = vset.pattern.permute.xlu0 4
      %754 = vperm.xlu0 %753, %v741
      %v755 = vpop.permute.xlu0 %754
      %v757 = vmul.f32 %v745, %v359
      %v758 = vmul.f32 %v745, %v361
      %v759 = vmul.f32 %v750, %v363
      %v760 = vmul.f32 %v750, %v365
      %v761 = vmul.f32 %v755, %v369
      %v762 = vmul.f32 %v755, %v371
      %v763 = vld [vmem:[#allocation2] sm:$0xff]
      %v764 = vld [vmem:[#allocation2 + $0x8] sm:$0xff]
      %v765 = vld [vmem:[#allocation2 + $0x10] sm:$0xff]
      %v766 = vld [vmem:[#allocation2 + $0x18] sm:$0xff]
      %v767 = vld [vmem:[#allocation2 + $0x20] sm:$0xff]
      %v768 = vld [vmem:[#allocation2 + $0x28] sm:$0xff]
      %v769 = vld [vmem:[%s500] sm:$0x3]
      %v771 = vlaneseq
      %v772 = vshrl.u32 %v771, 7
      %v773 = vsub.s32 0, %v772
      %v774 = vrot.slane %v769, %v773
      %v775 = vlaneseq
      %v776 = vshrl.u32 %v775, 7
      %v777 = vsub.s32 1, %v776
      %v778 = vrot.slane %v769, %v777
      %v781 = vmul.f32 %v774, %v757
      %v782 = vmul.f32 %v778, %v758
      %v783 = vmul.f32 %v774, %v759
      %v784 = vmul.f32 %v778, %v760
      %v785 = vmul.f32 %v774, %v761
      %v786 = vmul.f32 %v778, %v762
      %v787 = vadd.f32 %v763, %v781
      %v788 = vadd.f32 %v764, %v782
      %v789 = vadd.f32 %v765, %v783
      %v790 = vadd.f32 %v766, %v784
      %v791 = vadd.f32 %v767, %v785
      %v792 = vadd.f32 %v768, %v786
      %793 = vst [vmem:[#allocation2] sm:$0xff] %v787
      %794 = vst [vmem:[#allocation2 + $0x8] sm:$0xff] %v788
      %795 = vst [vmem:[#allocation2 + $0x10] sm:$0xff] %v789
      %796 = vst [vmem:[#allocation2 + $0x18] sm:$0xff] %v790
      %797 = vst [vmem:[#allocation2 + $0x20] sm:$0xff] %v791
      %798 = vst [vmem:[#allocation2 + $0x28] sm:$0xff] %v792
      %v799 = vld [vmem:[%s2] sm:$0xff]
      %v800 = vld [vmem:[%s2 + $0x8] sm:$0xff]
      %v801 = vld [vmem:[%s2 + $0x10] sm:$0xff]
      %803 = vset.pattern.permute.xlu0 5
      %804 = vperm.xlu0 %803, %v799
      %v805 = vpop.permute.xlu0 %804
      %808 = vset.pattern.permute.xlu0 5
      %809 = vperm.xlu0 %808, %v800
      %v810 = vpop.permute.xlu0 %809
      %813 = vset.pattern.permute.xlu0 5
      %814 = vperm.xlu0 %813, %v801
      %v815 = vpop.permute.xlu0 %814
      %v817 = vmul.f32 %v805, %v359
      %v818 = vmul.f32 %v805, %v361
      %v819 = vmul.f32 %v810, %v363
      %v820 = vmul.f32 %v810, %v365
      %v821 = vmul.f32 %v815, %v369
      %v822 = vmul.f32 %v815, %v371
      %v823 = vld [vmem:[#allocation2] sm:$0xff]
      %v824 = vld [vmem:[#allocation2 + $0x8] sm:$0xff]
      %v825 = vld [vmem:[#allocation2 + $0x10] sm:$0xff]
      %v826 = vld [vmem:[#allocation2 + $0x18] sm:$0xff]
      %v827 = vld [vmem:[#allocation2 + $0x20] sm:$0xff]
      %v828 = vld [vmem:[#allocation2 + $0x28] sm:$0xff]
      %v829 = vld [vmem:[%s590] sm:$0x3]
      %v831 = vlaneseq
      %v832 = vshrl.u32 %v831, 7
      %v833 = vsub.s32 0, %v832
      %v834 = vrot.slane %v829, %v833
      %v835 = vlaneseq
      %v836 = vshrl.u32 %v835, 7
      %v837 = vsub.s32 1, %v836
      %v838 = vrot.slane %v829, %v837
      %847 = vrot.lane.b32.xlu0 %v817, 127
      %v848 = vpop.permute.xlu0 %847
      %849 = vrot.lane.b32.xlu0 %v818, 127
      %v850 = vpop.permute.xlu0 %849
      %851 = vrot.lane.b32.xlu0 %v819, 127
      %v852 = vpop.permute.xlu0 %851
      %853 = vrot.lane.b32.xlu0 %v820, 127
      %v854 = vpop.permute.xlu0 %853
      %855 = vrot.lane.b32.xlu0 %v821, 127
      %v856 = vpop.permute.xlu0 %855
      %857 = vrot.lane.b32.xlu0 %v822, 127
      %v858 = vpop.permute.xlu0 %857
      %vm859 = vcmask 1039360
      %v860 = vsel %vm859, %v848, %v850
      %v861 = vsel %vm859, %v852, %v854
      %v862 = vsel %vm859, %v856, %v858
      %v869 = vmul.f32 %v834, %v860
      %v870 = vmul.f32 %v838, %v850
      %v871 = vmul.f32 %v834, %v861
      %v872 = vmul.f32 %v838, %v854
      %v873 = vmul.f32 %v834, %v862
      %v874 = vmul.f32 %v838, %v858
      %v875 = vadd.f32 %v823, %v869
      %v876 = vadd.f32 %v824, %v870
      %v877 = vadd.f32 %v825, %v871
      %v878 = vadd.f32 %v826, %v872
      %v879 = vadd.f32 %v827, %v873
      %v880 = vadd.f32 %v828, %v874
      %881 = vst [vmem:[#allocation2] sm:$0xff] %v875
      %882 = vst.msk [vmem:[#allocation2 + $0x8] sm:$0xff] %vm859, %v876
      %883 = vst [vmem:[#allocation2 + $0x10] sm:$0xff] %v877
      %884 = vst.msk [vmem:[#allocation2 + $0x18] sm:$0xff] %vm859, %v878
      %885 = vst [vmem:[#allocation2 + $0x20] sm:$0xff] %v879
      %886 = vst.msk [vmem:[#allocation2 + $0x28] sm:$0xff] %vm859, %v880
      %v887 = vld [vmem:[%s2] sm:$0xff]
      %v888 = vld [vmem:[%s2 + $0x8] sm:$0xff]
      %v889 = vld [vmem:[%s2 + $0x10] sm:$0xff]
      %891 = vset.pattern.permute.xlu0 6
      %892 = vperm.xlu0 %891, %v887
      %v893 = vpop.permute.xlu0 %892
      %896 = vset.pattern.permute.xlu0 6
      %897 = vperm.xlu0 %896, %v888
      %v898 = vpop.permute.xlu0 %897
      %901 = vset.pattern.permute.xlu0 6
      %902 = vperm.xlu0 %901, %v889
      %v903 = vpop.permute.xlu0 %902
      %v905 = vmul.f32 %v893, %v359
      %v906 = vmul.f32 %v893, %v361
      %v907 = vmul.f32 %v898, %v363
      %v908 = vmul.f32 %v898, %v365
      %v909 = vmul.f32 %v903, %v369
      %v910 = vmul.f32 %v903, %v371
      %v911 = vld [vmem:[#allocation2] sm:$0xff]
      %v912 = vld [vmem:[#allocation2 + $0x8] sm:$0xff]
      %v913 = vld [vmem:[#allocation2 + $0x10] sm:$0xff]
      %v914 = vld [vmem:[#allocation2 + $0x18] sm:$0xff]
      %v915 = vld [vmem:[#allocation2 + $0x20] sm:$0xff]
      %v916 = vld [vmem:[#allocation2 + $0x28] sm:$0xff]
      %v917 = vld [vmem:[%s3] sm:$0x3]
      %v919 = vlaneseq
      %v920 = vshrl.u32 %v919, 7
      %v921 = vsub.s32 0, %v920
      %v922 = vrot.slane %v917, %v921
      %v923 = vlaneseq
      %v924 = vshrl.u32 %v923, 7
      %v925 = vsub.s32 1, %v924
      %v926 = vrot.slane %v917, %v925
      %935 = vrot.lane.b32.xlu0 %v905, 113
      %v936 = vpop.permute.xlu0 %935
      %937 = vrot.lane.b32.xlu0 %v906, 113
      %v938 = vpop.permute.xlu0 %937
      %939 = vrot.lane.b32.xlu0 %v907, 113
      %v940 = vpop.permute.xlu0 %939
      %941 = vrot.lane.b32.xlu0 %v908, 113
      %v942 = vpop.permute.xlu0 %941
      %943 = vrot.lane.b32.xlu0 %v909, 113
      %v944 = vpop.permute.xlu0 %943
      %945 = vrot.lane.b32.xlu0 %v910, 113
      %v946 = vpop.permute.xlu0 %945
      %vm947 = vcmask 924672
      %v948 = vsel %vm947, %v936, %v938
      %v949 = vsel %vm947, %v940, %v942
      %v950 = vsel %vm947, %v944, %v946
      %v957 = vmul.f32 %v922, %v948
      %v958 = vmul.f32 %v926, %v938
      %v959 = vmul.f32 %v922, %v949
      %v960 = vmul.f32 %v926, %v942
      %v961 = vmul.f32 %v922, %v950
      %v962 = vmul.f32 %v926, %v946
      %v963 = vadd.f32 %v911, %v957
      %v964 = vadd.f32 %v912, %v958
      %v965 = vadd.f32 %v913, %v959
      %v966 = vadd.f32 %v914, %v960
      %v967 = vadd.f32 %v915, %v961
      %v968 = vadd.f32 %v916, %v962
      %969 = vst [vmem:[#allocation2] sm:$0xff] %v963
      %970 = vst.msk [vmem:[#allocation2 + $0x8] sm:$0xff] %vm947, %v964
      %971 = vst [vmem:[#allocation2 + $0x10] sm:$0xff] %v965
      %972 = vst.msk [vmem:[#allocation2 + $0x18] sm:$0xff] %vm947, %v966
      %973 = vst [vmem:[#allocation2 + $0x20] sm:$0xff] %v967
      %974 = vst.msk [vmem:[#allocation2 + $0x28] sm:$0xff] %vm947, %v968
      %v975 = vld [vmem:[%s2] sm:$0xff]
      %v976 = vld [vmem:[%s2 + $0x8] sm:$0xff]
      %v977 = vld [vmem:[%s2 + $0x10] sm:$0xff]
      %979 = vset.pattern.permute.xlu0 7
      %980 = vperm.xlu0 %979, %v975
      %v981 = vpop.permute.xlu0 %980
      %984 = vset.pattern.permute.xlu0 7
      %985 = vperm.xlu0 %984, %v976
      %v986 = vpop.permute.xlu0 %985
      %989 = vset.pattern.permute.xlu0 7
      %990 = vperm.xlu0 %989, %v977
      %v991 = vpop.permute.xlu0 %990
      %v993 = vmul.f32 %v981, %v359
      %v994 = vmul.f32 %v981, %v361
      %v995 = vmul.f32 %v986, %v363
      %v996 = vmul.f32 %v986, %v365
      %v997 = vmul.f32 %v991, %v369
      %v998 = vmul.f32 %v991, %v371
      %v999 = vld [vmem:[#allocation2] sm:$0xff]
      %v1000 = vld [vmem:[#allocation2 + $0x8] sm:$0xff]
      %v1001 = vld [vmem:[#allocation2 + $0x10] sm:$0xff]
      %v1002 = vld [vmem:[#allocation2 + $0x18] sm:$0xff]
      %v1003 = vld [vmem:[#allocation2 + $0x20] sm:$0xff]
      %v1004 = vld [vmem:[#allocation2 + $0x28] sm:$0xff]
      %v1005 = vld [vmem:[%s500] sm:$0x3]
      %v1007 = vlaneseq
      %v1008 = vshrl.u32 %v1007, 7
      %v1009 = vsub.s32 0, %v1008
      %v1010 = vrot.slane %v1005, %v1009
      %v1011 = vlaneseq
      %v1012 = vshrl.u32 %v1011, 7
      %v1013 = vsub.s32 1, %v1012
      %v1014 = vrot.slane %v1005, %v1013
      %1023 = vrot.lane.b32.xlu0 %v993, 112
      %v1024 = vpop.permute.xlu0 %1023
      %1025 = vrot.lane.b32.xlu0 %v994, 112
      %v1026 = vpop.permute.xlu0 %1025
      %1027 = vrot.lane.b32.xlu0 %v995, 112
      %v1028 = vpop.permute.xlu0 %1027
      %1029 = vrot.lane.b32.xlu0 %v996, 112
      %v1030 = vpop.permute.xlu0 %1029
      %1031 = vrot.lane.b32.xlu0 %v997, 112
      %v1032 = vpop.permute.xlu0 %1031
      %1033 = vrot.lane.b32.xlu0 %v998, 112
      %v1034 = vpop.permute.xlu0 %1033
      %vm1035 = vcmask 916480
      %v1036 = vsel %vm1035, %v1024, %v1026
      %v1037 = vsel %vm1035, %v1028, %v1030
      %v1038 = vsel %vm1035, %v1032, %v1034
      %v1045 = vmul.f32 %v1010, %v1036
      %v1046 = vmul.f32 %v1014, %v1026
      %v1047 = vmul.f32 %v1010, %v1037
      %v1048 = vmul.f32 %v1014, %v1030
      %v1049 = vmul.f32 %v1010, %v1038
      %v1050 = vmul.f32 %v1014, %v1034
      %v1051 = vadd.f32 %v999, %v1045
      %v1052 = vadd.f32 %v1000, %v1046
      %v1053 = vadd.f32 %v1001, %v1047
      %v1054 = vadd.f32 %v1002, %v1048
      %v1055 = vadd.f32 %v1003, %v1049
      %v1056 = vadd.f32 %v1004, %v1050
      %1057 = vst [vmem:[#allocation2] sm:$0xff] %v1051
      %1058 = vst.msk [vmem:[#allocation2 + $0x8] sm:$0xff] %vm1035, %v1052
      %1059 = vst [vmem:[#allocation2 + $0x10] sm:$0xff] %v1053
      %1060 = vst.msk [vmem:[#allocation2 + $0x18] sm:$0xff] %vm1035, %v1054
      %1061 = vst [vmem:[#allocation2 + $0x20] sm:$0xff] %v1055
      %1062 = vst.msk [vmem:[#allocation2 + $0x28] sm:$0xff] %vm1035, %v1056
      %v1063 = vld [vmem:[%s2] sm:$0xff]
      %v1064 = vld [vmem:[%s2 + $0x8] sm:$0xff]
      %v1065 = vld [vmem:[%s2 + $0x10] sm:$0xff]
      %1067 = vset.pattern.permute.xlu0 8
      %1068 = vperm.xlu0 %1067, %v1063
      %v1069 = vpop.permute.xlu0 %1068
      %1072 = vset.pattern.permute.xlu0 8
      %1073 = vperm.xlu0 %1072, %v1064
      %v1074 = vpop.permute.xlu0 %1073
      %1077 = vset.pattern.permute.xlu0 8
      %1078 = vperm.xlu0 %1077, %v1065
      %v1079 = vpop.permute.xlu0 %1078
      %v1081 = vmul.f32 %v1069, %v359
      %v1082 = vmul.f32 %v1069, %v361
      %v1083 = vmul.f32 %v1074, %v363
      %v1084 = vmul.f32 %v1074, %v365
      %v1085 = vmul.f32 %v1079, %v369
      %v1086 = vmul.f32 %v1079, %v371
      %v1087 = vld [vmem:[#allocation2] sm:$0xff]
      %v1088 = vld [vmem:[#allocation2 + $0x8] sm:$0xff]
      %v1089 = vld [vmem:[#allocation2 + $0x10] sm:$0xff]
      %v1090 = vld [vmem:[#allocation2 + $0x18] sm:$0xff]
      %v1091 = vld [vmem:[#allocation2 + $0x20] sm:$0xff]
      %v1092 = vld [vmem:[#allocation2 + $0x28] sm:$0xff]
      %v1093 = vld [vmem:[%s590] sm:$0x3]
      %v1095 = vlaneseq
      %v1096 = vshrl.u32 %v1095, 7
      %v1097 = vsub.s32 0, %v1096
      %v1098 = vrot.slane %v1093, %v1097
      %v1099 = vlaneseq
      %v1100 = vshrl.u32 %v1099, 7
      %v1101 = vsub.s32 1, %v1100
      %v1102 = vrot.slane %v1093, %v1101
      %1111 = vrot.lane.b32.xlu0 %v1081, 111
      %v1112 = vpop.permute.xlu0 %1111
      %1113 = vrot.lane.b32.xlu0 %v1082, 111
      %v1114 = vpop.permute.xlu0 %1113
      %1115 = vrot.lane.b32.xlu0 %v1083, 111
      %v1116 = vpop.permute.xlu0 %1115
      %1117 = vrot.lane.b32.xlu0 %v1084, 111
      %v1118 = vpop.permute.xlu0 %1117
      %1119 = vrot.lane.b32.xlu0 %v1085, 111
      %v1120 = vpop.permute.xlu0 %1119
      %1121 = vrot.lane.b32.xlu0 %v1086, 111
      %v1122 = vpop.permute.xlu0 %1121
      %vm1123 = vcmask 908288
      %v1124 = vsel %vm1123, %v1112, %v1114
      %v1125 = vsel %vm1123, %v1116, %v1118
      %v1126 = vsel %vm1123, %v1120, %v1122
      %v1133 = vmul.f32 %v1098, %v1124
      %v1134 = vmul.f32 %v1102, %v1114
      %v1135 = vmul.f32 %v1098, %v1125
      %v1136 = vmul.f32 %v1102, %v1118
      %v1137 = vmul.f32 %v1098, %v1126
      %v1138 = vmul.f32 %v1102, %v1122
      %v1139 = vadd.f32 %v1087, %v1133
      %v1140 = vadd.f32 %v1088, %v1134
      %v1141 = vadd.f32 %v1089, %v1135
      %v1142 = vadd.f32 %v1090, %v1136
      %v1143 = vadd.f32 %v1091, %v1137
      %v1144 = vadd.f32 %v1092, %v1138
      %1145 = vst [vmem:[#allocation2] sm:$0xff] %v1139
      %1146 = vst.msk [vmem:[#allocation2 + $0x8] sm:$0xff] %vm1123, %v1140
      %1147 = vst [vmem:[#allocation2 + $0x10] sm:$0xff] %v1141
      %1148 = vst.msk [vmem:[#allocation2 + $0x18] sm:$0xff] %vm1123, %v1142
      %1149 = vst [vmem:[#allocation2 + $0x20] sm:$0xff] %v1143
      %1150 = vst.msk [vmem:[#allocation2 + $0x28] sm:$0xff] %vm1123, %v1144
      %v1151 = vld [vmem:[#allocation2] sm:$0xff]
      %v1152 = vld [vmem:[#allocation2 + $0x8] sm:$0xff]
      %v1153 = vld [vmem:[#allocation2 + $0x10] sm:$0xff]
      %v1154 = vld [vmem:[#allocation2 + $0x18] sm:$0xff]
      %v1155 = vld [vmem:[#allocation2 + $0x20] sm:$0xff]
      %v1156 = vld [vmem:[#allocation2 + $0x28] sm:$0xff]
      %v1157 = vpack.c.bf16 %v1153, %v1151
      %v1158 = vpack.c.bf16 %v1154, %v1152
      %v1159 = vpack.c.bf16 %v1155, %v1155
      %v1160 = vpack.c.bf16 %v1156, %v1156
      %v1165 = vunpack.c.l.b16 %v1157
      %v1166 = vunpack.c.l.b16 %v1158
      %v1167 = vunpack.c.h.b16 %v1157
      %v1168 = vunpack.c.h.b16 %v1158
      %v1169 = vunpack.c.l.b16 %v1159
      %v1170 = vunpack.c.l.b16 %v1160
      %v1171 = vpack.c.b16 %v1166, %v1165
      %v1172 = vpack.c.b16 %v1168, %v1167
      %v1173 = vpack.c.b16 %v1170, %v1169
      %1177 = vst [vmem:[%s286] sm:$0xff] %v1171
      %1178 = vst [vmem:[%s286 + $0x8] sm:$0xff] %v1172
      %1179 = vst [vmem:[%s286 + $0x10] sm:$0xff] %v1173
      %v1180 = vmul.f32 %v1151, %v1151
      %v1181 = vmul.f32 %v1152, %v1152
      %v1182 = vsel %vm317, %v1180, 0.0
      %v1183 = vsel %vm317, %v1181, 0.0
      %v1184 = vadd.f32 %v1182, %v1183
      %1185 = vadd.xlane.f32.xlu0 %v1184
      %v1186 = vpop.xlane.xlu0 %1185
      %v1187 = vadd.f32 %v1186, 1e-24
      %v1188 = vrsqrt.pop %v1187
      %v1189 = vmul.f32 %v1151, %v1188
      %v1190 = vmul.f32 %v1152, %v1188
      %v1191 = vmul.f32 %v1153, %v1153
      %v1192 = vmul.f32 %v1154, %v1154
      %v1193 = vsel %vm317, %v1191, 0.0
      %v1194 = vsel %vm317, %v1192, 0.0
      %v1195 = vadd.f32 %v1193, %v1194
      %1196 = vadd.xlane.f32.xlu0 %v1195
      %v1197 = vpop.xlane.xlu0 %1196
      %v1198 = vadd.f32 %v1197, 1e-24
      %v1199 = vrsqrt.pop %v1198
      %v1200 = vmul.f32 %v1153, %v1199
      %v1201 = vmul.f32 %v1154, %v1199
      %v1202 = vpack.c.bf16 %v1189, %v1189
      %v1203 = vpack.c.bf16 %v1190, %v1190
      %v1204 = vpack.c.bf16 %v1200, %v1200
      %v1205 = vpack.c.bf16 %v1201, %v1201
      %1206 = vmatprep.subr.bf16.mxu0 0
      %1207 = vmatpush1.bf16.xpose.msra.mxu0 0
      %1208 = vmatprep.subr.bf16.mxu0 0
      %1209 = vmatpush1.bf16.xpose.msra.mxu0 0
      %1210 = vmatprep.subr.bf16.mxu0 0
      %1211 = vmatpush1.bf16.xpose.msra.mxu0 0
      %1212 = vmatprep.subr.bf16.mxu0 0
      %1213 = vmatpush1.bf16.xpose.msra.mxu0 0
      %1214 = vmatprep.subr.bf16.mxu0 0
      %1215 = vmatpush1.bf16.xpose.msra.mxu0 0
      %1216 = vmatprep.subr.bf16.mxu0 0
      %1217 = vmatpush1.bf16.xpose.msra.mxu0 0
      %1218 = vmatprep.subr.bf16.mxu0 0
      %1219 = vmatpush1.bf16.xpose.msra.mxu0 0
      %1220 = vmatprep.subr.bf16.mxu0 %v1205
      %1221 = vmatpush1.bf16.xpose.msra.mxu0 %v1204
      %1222 = vmatprep.subr.bf16.mxu0 0
      %1223 = vmatpush2.bf16.xpose.msra.mxu0 0
      %1224 = vmatprep.subr.bf16.mxu0 0
      %1225 = vmatpush2.bf16.xpose.msra.mxu0 0
      %1226 = vmatprep.subr.bf16.mxu0 0
      %1227 = vmatpush2.bf16.xpose.msra.mxu0 0
      %1228 = vmatprep.subr.bf16.mxu0 0
      %1229 = vmatpush2.bf16.xpose.msra.mxu0 0
      %1230 = vmatprep.subr.bf16.mxu0 0
      %1231 = vmatpush2.bf16.xpose.msra.mxu0 0
      %1232 = vmatprep.subr.bf16.mxu0 0
      %1233 = vmatpush2.bf16.xpose.msra.mxu0 0
      %1234 = vmatprep.subr.bf16.mxu0 0
      %1235 = vmatpush2.bf16.xpose.msra.mxu0 0
      %1236 = vmatprep.subr.bf16.mxu0 0
      %1237 = vmatpush2.bf16.xpose.msra.mxu0 0
      %1238 = vmatprep.mubr.bf16.mxu0 %v1203
      %1239 = vmatmul.mubr.bf16.gmra.mxu0 %v1202
      %v1240 = vpop.f32.mrf.mxu0
      %v1241 = vadd.f32 0.0, %v1240
      %v1242 = vpop.f32.mrf.mxu0
      %v1243 = vpop.f32.mrf.mxu0
      %v1244 = vpop.f32.mrf.mxu0
      %1245 = vdwg.mxu0
      %v1246 = vld [vmem:[%s5] sm:$0x1]
      %s1248 = vtos %v1246
      %v1249 = vstv %s1248
      %v1251 = vmul.f32 %v1241, %v1249
      %vm1252 = vcmask 27648
      %v1253 = vsel %vm1252, %v1251, -inf
      %1254 = vmax.xlane.f32.xlu0 %v1253
      %v1255 = vpop.xlane.xlu0 %1254
      %v1256 = vsub.f32 %v1251, %v1255
      %v1257 = vmul.f32 %v1256, 1.442695
      %v1258 = vpow.pop %v1257
      %v1259 = vsel %vm1252, %v1258, 0.0
      %1260 = vadd.xlane.f32.xlu0 %v1259
      %v1261 = vpop.xlane.xlu0 %1260
      %v1262 = vrcp.pop %v1261
      %v1263 = vmul.f32 %v1258, %v1262
      %v1264 = vpack.c.bf16 %v1263, %v1263
      %vm1265 = vcmask 31744
      %v1267 = vsel %vm1265, %v1264, 0
      %vm1269 = vcmask 1041408
      %v1271 = vsel %vm1269, %v1159, 0
      %v1274 = vsel %vm1269, %v1160, 0
      %1276 = vmatprep.subr.bf16.mxu0 0
      %1277 = vmatpush1.bf16.msra.mxu0 0
      %1278 = vmatprep.subr.bf16.mxu0 0
      %1279 = vmatpush1.bf16.msra.mxu0 0
      %1280 = vmatprep.subr.bf16.mxu0 0
      %1281 = vmatpush1.bf16.msra.mxu0 0
      %1282 = vmatprep.subr.bf16.mxu0 0
      %1283 = vmatpush1.bf16.msra.mxu0 0
      %1284 = vmatprep.subr.bf16.mxu0 0
      %1285 = vmatpush1.bf16.msra.mxu0 0
      %1286 = vmatprep.subr.bf16.mxu0 0
      %1287 = vmatpush1.bf16.msra.mxu0 0
      %1288 = vmatprep.subr.bf16.mxu0 0
      %1289 = vmatpush1.bf16.msra.mxu0 0
      %1290 = vmatprep.subr.bf16.mxu0 %v1274
      %1291 = vmatpush1.bf16.msra.mxu0 %v1271
      %1292 = vmatprep.subr.bf16.mxu0 0
      %1293 = vmatpush2.bf16.msra.mxu0 0
      %1294 = vmatprep.subr.bf16.mxu0 0
      %1295 = vmatpush2.bf16.msra.mxu0 0
      %1296 = vmatprep.subr.bf16.mxu0 0
      %1297 = vmatpush2.bf16.msra.mxu0 0
      %1298 = vmatprep.subr.bf16.mxu0 0
      %1299 = vmatpush2.bf16.msra.mxu0 0
      %1300 = vmatprep.subr.bf16.mxu0 0
      %1301 = vmatpush2.bf16.msra.mxu0 0
      %1302 = vmatprep.subr.bf16.mxu0 0
      %1303 = vmatpush2.bf16.msra.mxu0 0
      %1304 = vmatprep.subr.bf16.mxu0 0
      %1305 = vmatpush2.bf16.msra.mxu0 0
      %1306 = vmatprep.subr.bf16.mxu0 0
      %1307 = vmatpush2.bf16.msra.mxu0 0
      %1308 = vmatprep.mubr.bf16.mxu0 0
      %1309 = vmatmul.mubr.bf16.gmra.mxu0 %v1267
      %v1310 = vpop.f32.mrf.mxu0
      %v1311 = vadd.f32 0.0, %v1310
      %v1312 = vpop.f32.mrf.mxu0
      %v1313 = vadd.f32 0.0, %v1312
      %v1314 = vpop.f32.mrf.mxu0
      %v1315 = vpop.f32.mrf.mxu0
      %1316 = vdwg.mxu0
      %v1317 = vld [vmem:[%s4] sm:$0xf]
      %v1318 = vpack.c.bf16 %v1311, %v1311
      %v1319 = vpack.c.bf16 %v1313, %v1313
      %vm1320 = vcmask 1047556
      %v1321 = vsel %vm1320, %v1180, 0.0
      %v1322 = vsel %vm1320, %v1181, 0.0
      %v1323 = vadd.f32 %v1321, %v1322
      %1324 = vadd.xlane.f32.xlu0 %v1323
      %v1325 = vpop.xlane.xlu0 %1324
      %v1326 = vadd.f32 %v1325, 1e-24
      %v1327 = vrsqrt.pop %v1326
      %v1328 = vmul.f32 %v1151, %v1327
      %v1329 = vmul.f32 %v1152, %v1327
      %v1330 = vsel %vm1320, %v1191, 0.0
      %v1331 = vsel %vm1320, %v1192, 0.0
      %v1332 = vadd.f32 %v1330, %v1331
      %1333 = vadd.xlane.f32.xlu0 %v1332
      %v1334 = vpop.xlane.xlu0 %1333
      %v1335 = vadd.f32 %v1334, 1e-24
      %v1336 = vrsqrt.pop %v1335
      %v1337 = vmul.f32 %v1153, %v1336
      %v1338 = vmul.f32 %v1154, %v1336
      %v1339 = vpack.c.bf16 %v1328, %v1328
      %v1340 = vpack.c.bf16 %v1329, %v1329
      %v1341 = vpack.c.bf16 %v1337, %v1337
      %v1342 = vpack.c.bf16 %v1338, %v1338
      %v1345 = vrot.slane %v1339, 2
      %v1346 = vrot.slane %v1340, 2
      %v1351 = vrot.slane %v1341, 2
      %v1352 = vrot.slane %v1342, 2
      %1355 = vmatprep.subr.bf16.mxu0 0
      %1356 = vmatpush1.bf16.xpose.msra.mxu0 0
      %1357 = vmatprep.subr.bf16.mxu0 0
      %1358 = vmatpush1.bf16.xpose.msra.mxu0 0
      %1359 = vmatprep.subr.bf16.mxu0 0
      %1360 = vmatpush1.bf16.xpose.msra.mxu0 0
      %1361 = vmatprep.subr.bf16.mxu0 0
      %1362 = vmatpush1.bf16.xpose.msra.mxu0 0
      %1363 = vmatprep.subr.bf16.mxu0 0
      %1364 = vmatpush1.bf16.xpose.msra.mxu0 0
      %1365 = vmatprep.subr.bf16.mxu0 0
      %1366 = vmatpush1.bf16.xpose.msra.mxu0 0
      %1367 = vmatprep.subr.bf16.mxu0 0
      %1368 = vmatpush1.bf16.xpose.msra.mxu0 0
      %1369 = vmatprep.subr.bf16.mxu0 %v1352
      %1370 = vmatpush1.bf16.xpose.msra.mxu0 %v1351
      %1371 = vmatprep.subr.bf16.mxu0 0
      %1372 = vmatpush2.bf16.xpose.msra.mxu0 0
      %1373 = vmatprep.subr.bf16.mxu0 0
      %1374 = vmatpush2.bf16.xpose.msra.mxu0 0
      %1375 = vmatprep.subr.bf16.mxu0 0
      %1376 = vmatpush2.bf16.xpose.msra.mxu0 0
      %1377 = vmatprep.subr.bf16.mxu0 0
      %1378 = vmatpush2.bf16.xpose.msra.mxu0 0
      %1379 = vmatprep.subr.bf16.mxu0 0
      %1380 = vmatpush2.bf16.xpose.msra.mxu0 0
      %1381 = vmatprep.subr.bf16.mxu0 0
      %1382 = vmatpush2.bf16.xpose.msra.mxu0 0
      %1383 = vmatprep.subr.bf16.mxu0 0
      %1384 = vmatpush2.bf16.xpose.msra.mxu0 0
      %1385 = vmatprep.subr.bf16.mxu0 0
      %1386 = vmatpush2.bf16.xpose.msra.mxu0 0
      %1387 = vmatprep.mubr.bf16.mxu0 %v1346
      %1388 = vmatmul.mubr.bf16.gmra.mxu0 %v1345
      %v1389 = vpop.f32.mrf.mxu0
      %v1390 = vadd.f32 0.0, %v1389
      %v1391 = vpop.f32.mrf.mxu0
      %v1392 = vpop.f32.mrf.mxu0
      %v1393 = vpop.f32.mrf.mxu0
      %1394 = vdwg.mxu0
      %v1395 = vld [vmem:[%s5 + $0x1] sm:$0x1]
      %s1397 = vtos %v1395
      %v1398 = vstv %s1397
      %v1400 = vmul.f32 %v1390, %v1398
      %v1401 = vsel %vm1252, %v1400, -inf
      %1402 = vmax.xlane.f32.xlu0 %v1401
      %v1403 = vpop.xlane.xlu0 %1402
      %v1404 = vsub.f32 %v1400, %v1403
      %v1405 = vmul.f32 %v1404, 1.442695
      %v1406 = vpow.pop %v1405
      %v1407 = vsel %vm1252, %v1406, 0.0
      %1408 = vadd.xlane.f32.xlu0 %v1407
      %v1409 = vpop.xlane.xlu0 %1408
      %v1410 = vrcp.pop %v1409
      %v1411 = vmul.f32 %v1406, %v1410
      %v1412 = vpack.c.bf16 %v1411, %v1411
      %v1413 = vrot.slane %v1159, 2
      %v1414 = vrot.slane %v1160, 2
      %v1416 = vsel %vm1265, %v1412, 0
      %v1419 = vsel %vm1269, %v1413, 0
      %v1422 = vsel %vm1269, %v1414, 0
      %1424 = vmatprep.subr.bf16.mxu0 0
      %1425 = vmatpush1.bf16.msra.mxu0 0
      %1426 = vmatprep.subr.bf16.mxu0 0
      %1427 = vmatpush1.bf16.msra.mxu0 0
      %1428 = vmatprep.subr.bf16.mxu0 0
      %1429 = vmatpush1.bf16.msra.mxu0 0
      %1430 = vmatprep.subr.bf16.mxu0 0
      %1431 = vmatpush1.bf16.msra.mxu0 0
      %1432 = vmatprep.subr.bf16.mxu0 0
      %1433 = vmatpush1.bf16.msra.mxu0 0
      %1434 = vmatprep.subr.bf16.mxu0 0
      %1435 = vmatpush1.bf16.msra.mxu0 0
      %1436 = vmatprep.subr.bf16.mxu0 0
      %1437 = vmatpush1.bf16.msra.mxu0 0
      %1438 = vmatprep.subr.bf16.mxu0 %v1422
      %1439 = vmatpush1.bf16.msra.mxu0 %v1419
      %1440 = vmatprep.subr.bf16.mxu0 0
      %1441 = vmatpush2.bf16.msra.mxu0 0
      %1442 = vmatprep.subr.bf16.mxu0 0
      %1443 = vmatpush2.bf16.msra.mxu0 0
      %1444 = vmatprep.subr.bf16.mxu0 0
      %1445 = vmatpush2.bf16.msra.mxu0 0
      %1446 = vmatprep.subr.bf16.mxu0 0
      %1447 = vmatpush2.bf16.msra.mxu0 0
      %1448 = vmatprep.subr.bf16.mxu0 0
      %1449 = vmatpush2.bf16.msra.mxu0 0
      %1450 = vmatprep.subr.bf16.mxu0 0
      %1451 = vmatpush2.bf16.msra.mxu0 0
      %1452 = vmatprep.subr.bf16.mxu0 0
      %1453 = vmatpush2.bf16.msra.mxu0 0
      %1454 = vmatprep.subr.bf16.mxu0 0
      %1455 = vmatpush2.bf16.msra.mxu0 0
      %1456 = vmatprep.mubr.bf16.mxu0 0
      %1457 = vmatmul.mubr.bf16.gmra.mxu0 %v1416
      %v1458 = vpop.f32.mrf.mxu0
      %v1459 = vadd.f32 0.0, %v1458
      %v1460 = vpop.f32.mrf.mxu0
      %v1461 = vadd.f32 0.0, %v1460
      %v1462 = vpop.f32.mrf.mxu0
      %v1463 = vpop.f32.mrf.mxu0
      %1464 = vdwg.mxu0
      %v1465 = vpack.c.bf16 %v1459, %v1459
      %v1466 = vpack.c.bf16 %v1461, %v1461
      %v1468 = vunpack.c.l.b16 %v1317
      %v1469 = vpack.c.b16 %v1468, %v1468
      %1470 = vrot.lane.b32.xlu0 %v1469, 124
      %v1471 = vpop.permute.xlu0 %1470
      %v1473 = vsel %vm1265, %v1471, 0
      %v1476 = vsel %vm1269, %v1465, 0
      %v1479 = vsel %vm1269, %v1466, 0
      %1481 = vmatprep.subr.bf16.mxu0 0
      %1482 = vmatpush1.bf16.msra.mxu0 0
      %1483 = vmatprep.subr.bf16.mxu0 0
      %1484 = vmatpush1.bf16.msra.mxu0 0
      %1485 = vmatprep.subr.bf16.mxu0 0
      %1486 = vmatpush1.bf16.msra.mxu0 0
      %1487 = vmatprep.subr.bf16.mxu0 0
      %1488 = vmatpush1.bf16.msra.mxu0 0
      %1489 = vmatprep.subr.bf16.mxu0 0
      %1490 = vmatpush1.bf16.msra.mxu0 0
      %1491 = vmatprep.subr.bf16.mxu0 0
      %1492 = vmatpush1.bf16.msra.mxu0 0
      %1493 = vmatprep.subr.bf16.mxu0 0
      %1494 = vmatpush1.bf16.msra.mxu0 0
      %1495 = vmatprep.subr.bf16.mxu0 %v1479
      %1496 = vmatpush1.bf16.msra.mxu0 %v1476
      %1497 = vmatprep.subr.bf16.mxu0 0
      %1498 = vmatpush2.bf16.msra.mxu0 0
      %1499 = vmatprep.subr.bf16.mxu0 0
      %1500 = vmatpush2.bf16.msra.mxu0 0
      %1501 = vmatprep.subr.bf16.mxu0 0
      %1502 = vmatpush2.bf16.msra.mxu0 0
      %1503 = vmatprep.subr.bf16.mxu0 0
      %1504 = vmatpush2.bf16.msra.mxu0 0
      %1505 = vmatprep.subr.bf16.mxu0 0
      %1506 = vmatpush2.bf16.msra.mxu0 0
      %1507 = vmatprep.subr.bf16.mxu0 0
      %1508 = vmatpush2.bf16.msra.mxu0 0
      %1509 = vmatprep.subr.bf16.mxu0 0
      %1510 = vmatpush2.bf16.msra.mxu0 0
      %1511 = vmatprep.subr.bf16.mxu0 0
      %1512 = vmatpush2.bf16.msra.mxu0 0
      %1513 = vmatprep.mubr.bf16.mxu0 0
      %1514 = vmatmul.mubr.bf16.gmra.mxu0 %v1473
      %v1515 = vpop.f32.mrf.mxu0
      %v1516 = vadd.f32 0.0, %v1515
      %v1517 = vpop.f32.mrf.mxu0
      %v1518 = vadd.f32 0.0, %v1517
      %v1519 = vpop.f32.mrf.mxu0
      %v1520 = vpop.f32.mrf.mxu0
      %1521 = vdwg.mxu0
      %v1523 = vsel %vm1265, %v1317, 0
      %v1526 = vsel %vm1269, %v1318, 0
      %v1529 = vsel %vm1269, %v1319, 0
      %1531 = vmatprep.subr.bf16.mxu0 0
      %1532 = vmatpush1.bf16.msra.mxu0 0
      %1533 = vmatprep.subr.bf16.mxu0 0
      %1534 = vmatpush1.bf16.msra.mxu0 0
      %1535 = vmatprep.subr.bf16.mxu0 0
      %1536 = vmatpush1.bf16.msra.mxu0 0
      %1537 = vmatprep.subr.bf16.mxu0 0
      %1538 = vmatpush1.bf16.msra.mxu0 0
      %1539 = vmatprep.subr.bf16.mxu0 0
      %1540 = vmatpush1.bf16.msra.mxu0 0
      %1541 = vmatprep.subr.bf16.mxu0 0
      %1542 = vmatpush1.bf16.msra.mxu0 0
      %1543 = vmatprep.subr.bf16.mxu0 0
      %1544 = vmatpush1.bf16.msra.mxu0 0
      %1545 = vmatprep.subr.bf16.mxu0 %v1529
      %1546 = vmatpush1.bf16.msra.mxu0 %v1526
      %1547 = vmatprep.subr.bf16.mxu0 0
      %1548 = vmatpush2.bf16.msra.mxu0 0
      %1549 = vmatprep.subr.bf16.mxu0 0
      %1550 = vmatpush2.bf16.msra.mxu0 0
      %1551 = vmatprep.subr.bf16.mxu0 0
      %1552 = vmatpush2.bf16.msra.mxu0 0
      %1553 = vmatprep.subr.bf16.mxu0 0
      %1554 = vmatpush2.bf16.msra.mxu0 0
      %1555 = vmatprep.subr.bf16.mxu0 0
      %1556 = vmatpush2.bf16.msra.mxu0 0
      %1557 = vmatprep.subr.bf16.mxu0 0
      %1558 = vmatpush2.bf16.msra.mxu0 0
      %1559 = vmatprep.subr.bf16.mxu0 0
      %1560 = vmatpush2.bf16.msra.mxu0 0
      %1561 = vmatprep.subr.bf16.mxu0 0
      %1562 = vmatpush2.bf16.msra.mxu0 0
      %1563 = vmatprep.mubr.bf16.mxu0 0
      %1564 = vmatmul.mubr.bf16.gmra.mxu0 %v1523
      %v1565 = vpop.f32.mrf.mxu0
      %v1566 = vadd.f32 %v1516, %v1565
      %v1567 = vpop.f32.mrf.mxu0
      %v1568 = vadd.f32 %v1518, %v1567
      %v1569 = vpop.f32.mrf.mxu0
      %v1570 = vpop.f32.mrf.mxu0
      %1571 = vdwg.mxu0
      %v1572 = vpack.c.bf16 %v1566, %v1566
      %v1573 = vpack.c.bf16 %v1568, %v1568
      %v1576 = vunpack.c.l.b16 %v1572
      %v1577 = vunpack.c.l.b16 %v1573
      %v1578 = vpack.c.b16 %v1577, %v1576
      %1580 = vst [vmem:[%s291] sm:$0xff] %v1578
      %p1581 = scmp.lt.s32.totalorder %s19, 1
      %s1582 = scalar_select %p1581, %s19, 1
      %s1583 = smul.addr %s1582, 6
      %s1584 = smul.addr %s1583, 4
      %s1585 = scalar_lea.vmem %s6, %s1584
      %p1586 = scmp.lt.s32.totalorder %s19, 1
      %s1587 = scalar_select %p1586, %s19, 1
      %s1588 = smul.addr %s1587, 2
      %s1589 = smul.addr %s1588, 4
      %s1590 = scalar_lea.vmem %s7, %s1589
      // Predicated region
      $region45: #{dual_branch_forward.2} parent=43 // pred_check
        %p1591 = pneg %p168
      $region46: #{dual_branch_forward.2} parent=43 // pred_check_branch
        %1593 = sbr.rel (%p1591) target = $region48
      $region47: #{dual_branch_forward.2} parent=43 // pred_region
        _
      $region48: #{dual_branch_forward.2} parent=43 // pred_fallthru
        _
      // Predicated region
      $region49: #{dual_branch_forward.2} parent=43 // pred_check
        %p1594 = pneg %p194
      $region50: #{dual_branch_forward.2} parent=43 // pred_check_branch
        %1596 = sbr.rel (%p1594) target = $region52
      $region51: #{dual_branch_forward.2} parent=43 // pred_region
        _
      $region52: #{dual_branch_forward.2} parent=43 // pred_fallthru
        _
    $region44: #{dual_branch_forward.2} parent=5 // pred_fallthru
      _
    %p1597 = scmp.le.s32.totalorder 2, %s14
    // Predicated region
    $region53: #{dual_branch_forward.2} parent=5 // pred_check
      %p1598 = pneg %p1597
    $region54: #{dual_branch_forward.2} parent=5 // pred_check_branch
      %1600 = sbr.rel (%p1598) target = $region56
    $region55: #{dual_branch_forward.2} parent=5 // pred_region
      %s1601 = ssub.s32 %s14, 2
      // Predicated region
      $region57: #{dual_branch_forward.2} parent=55 // pred_check
        %p1602 = pneg %p174
      $region58: #{dual_branch_forward.2} parent=55 // pred_check_branch
        %1604 = sbr.rel (%p1602) target = $region60
      $region59: #{dual_branch_forward.2} parent=55 // pred_region
        %p1605 = scmp.lt.s32.totalorder %s20, 1
        %s1606 = scalar_select %p1605, %s20, 1
        %s1607 = smul.addr %s1606, 6
        %s1608 = smul.addr %s1607, 4
        %s1609 = scalar_lea.vmem %s6, %s1608
      $region60: #{dual_branch_forward.2} parent=55 // pred_fallthru
        _
      // Predicated region
      $region61: #{dual_branch_forward.2} parent=55 // pred_check
        %p1610 = pneg %p200
      $region62: #{dual_branch_forward.2} parent=55 // pred_check_branch
        %1612 = sbr.rel (%p1610) target = $region64
      $region63: #{dual_branch_forward.2} parent=55 // pred_region
        %p1613 = scmp.lt.s32.totalorder %s20, 1
        %s1614 = scalar_select %p1613, %s20, 1
        %s1615 = smul.addr %s1614, 2
        %s1616 = smul.addr %s1615, 4
        %s1617 = scalar_lea.vmem %s7, %s1616
      $region64: #{dual_branch_forward.2} parent=55 // pred_fallthru
        _
    $region56: #{dual_branch_forward.2} parent=5 // pred_fallthru
      _
  $region6: #{dual_branch_forward.2} parent=0 // loop_footer
    %s18 = sadd.s32 1, %s14
  $region7: #{dual_branch_forward.2} parent=0 // loop_footer_branch
    %13 = sbr.rel target = $region3
  $region8: #{dual_branch_forward.2} parent=0 // loop_exit
    _

</llo_original>
